<compile_context>
chip_gen: v7x
topology: tpu7x:2x2x1
jax: 0.10.0
libtpu: 0.0.40
codegen_flags: <defaults>
</compile_context>

<pallas_src>
import numpy as np
import jax
import jax.numpy as jnp
from jax.experimental import pallas as pl
from jax.experimental.pallas import tpu as pltpu

EPS = 1e-5
LANE = 128
# Raised from 32 MiB per review; kept <= 48 MiB so it is still valid on v7x
# (64 MiB physical per TensorCore) while giving v5e/v6e more headroom.
VMEM_LIMIT = 48 * 1024 * 1024


def _round_up(v, m):
    return (v + m - 1) // m * m


def _pick_row_tile(rows, pitch, target=288):
    """Largest divisor t of `rows` with t*pitch <= target (always >= 1)."""
    best = 1
    for t in range(1, rows + 1):
        if rows % t == 0 and t * pitch <= target:
            best = t
    return best


def shortcut_resblock_forward(x_nchw, params):
    """Forward pass of ShortcutResBlock (training-mode BN). NCHW in / NCHW out."""
    N, Cin, H, W = x_nchw.shape
    Cout = params["w1"].shape[0]
    assert H % 2 == 0 and W % 2 == 0, "wrapper assumes even spatial dims"
    HO, WO = H // 2, W // 2

    P = WO + 1                              # flat row pitch (col WO = scrap column)
    FL = HO * P                             # flat length of one output image
    PHH = HO + 1                            # phase height (stride-2 input phases)
    LPH = _round_up(PHH * P + 1, 16)        # phase flat length (+1 over-read, 16-aligned)
    CPI = _round_up(Cin, LANE)
    CPO = _round_up(Cout, LANE)
    inv_cnt = 1.0 / float(N * HO * WO)      # BN count over *valid* positions only

    TH = _pick_row_tile(HO, P)              # output rows per in-kernel block
    R = HO // TH
    MT = TH * P                             # matmul M per row block

    # conv3 halo scratch (flat bf16): real mid rows start at a 16-aligned offset.
    DOFF = _round_up(P + 1, 16)             # aligned start of the stored mid data
    DELTA = DOFF - (P + 1)                  # tap-offset shift caused by the alignment
    LF = _round_up((HO + 2) * P + 2 + DELTA, 16)

    f32, bf16 = jnp.float32, jnp.bfloat16

    # ----------------------- JAX-side layout prep (cheap) -----------------------
    x = jnp.transpose(x_nchw, (0, 2, 3, 1)).astype(f32)               # NHWC
    x = jnp.pad(x, ((0, 0), (0, 0), (0, 0), (0, CPI - Cin)))          # lane pad
    xp = jnp.pad(x, ((0, 0), (1, 1), (1, 1), (0, 0)))                 # spatial pad 1
    # even/odd phase split: tap (kh,kw) of a stride-2 conv reads phase
    # (kh%2, kw%2) at offset (kh//2)*P + (kw//2) of the flattened phase.
    phases = []
    for a in (0, 1):
        for b in (0, 1):
            ph = xp[:, a::2, b::2, :].reshape(N, PHH * P, CPI)        # flatten rows
            ph = jnp.pad(ph, ((0, 0), (0, LPH - PHH * P), (0, 0)))    # over-read pad
            phases.append(ph.astype(bf16))

    def pad_w(w_io, ci, co, cpi, cpo):
        return jnp.pad(w_io, ((0, cpi - ci), (0, cpo - co))).astype(bf16)

    w1 = pad_w(params["w1"][:, :, 0, 0].T, Cin, Cout, CPI, CPO)                    # (CPI,CPO)
    w2 = jnp.stack([pad_w(params["w2"][:, :, kh, kw].T, Cin, Cout, CPI, CPO)
                    for kh in range(3) for kw in range(3)])                        # (9,CPI,CPO)
    w3 = jnp.stack([pad_w(params["w3"][:, :, kh, kw].T, Cout, Cout, CPO, CPO)
                    for kh in range(3) for kw in range(3)])                        # (9,CPO,CPO)

    def pad_vec(v):                                                    # gamma/beta -> (1, CPO)
        return jnp.pad(v, (0, CPO - Cout)).reshape(1, CPO).astype(f32)

    g1, be1 = pad_vec(params["g1"]), pad_vec(params["be1"])
    g2, be2 = pad_vec(params["g2"]), pad_vec(params["be2"])
    g3, be3 = pad_vec(params["g3"]), pad_vec(params["be3"])
    # conv biases b1/b2/b3 intentionally unused: cancelled by training-mode BN.

    vmem = pl.BlockSpec(memory_space=pltpu.MemorySpace.VMEM)
    phase_spec = pl.BlockSpec((1, LPH, CPI), lambda n: (n, 0, 0))
    flat_spec = pl.BlockSpec((1, FL, CPO), lambda n: (n, 0, 0))
    stats_spec = pl.BlockSpec((1, 8, CPO), lambda n: (n, 0, 0))
    cparams = pltpu.CompilerParams(dimension_semantics=("parallel",),
                                   vmem_limit_bytes=VMEM_LIMIT)

    # --------------- kernel 1: conv1 + conv2 + per-batch BN partials ---------------
    def stage1_kernel(p00, p01, p10, p11, w1_ref, w2_ref, y1_ref, y2_ref, st_ref):
        phase_refs = ((p00, p01), (p10, p11))
        colmask = (jax.lax.broadcasted_iota(jnp.int32, (MT, 1), 0) % P) < WO
        s1 = jnp.zeros((1, CPO), f32)
        q1 = jnp.zeros((1, CPO), f32)
        s2 = jnp.zeros((1, CPO), f32)
        q2 = jnp.zeros((1, CPO), f32)
        for rb in range(R):
            base = rb * MT
            # conv1 (1x1, stride 2): its input is exactly the centre tap of conv2.
            center = p11[0, pl.ds(base, MT), :]                       # (MT, CPI) bf16
            o1 = jnp.dot(center, w1_ref[...], preferred_element_type=f32)
            o2 = jnp.zeros((MT, CPO), f32)
            for kh in range(3):
                for kw in range(3):
                    if kh == 1 and kw == 1:
                        lhs = center
                    else:
                        off = base + (kh // 2) * P + (kw // 2)
                        lhs = phase_refs[kh % 2][kw % 2][0, pl.ds(off, MT), :]
                    o2 = o2 + jnp.dot(lhs, w2_ref[kh * 3 + kw],
                                      preferred_element_type=f32)
            y1_ref[0, pl.ds(base, MT), :] = o1.astype(bf16)
            y2_ref[0, pl.ds(base, MT), :] = o2.astype(bf16)
            # BN partial stats over valid columns only (XLU reductions).
            om1 = jnp.where(colmask, o1, 0.0)
            om2 = jnp.where(colmask, o2, 0.0)
            s1 = s1 + jnp.sum(om1, axis=0, keepdims=True)
            q1 = q1 + jnp.sum(om1 * om1, axis=0, keepdims=True)
            s2 = s2 + jnp.sum(om2, axis=0, keepdims=True)
            q2 = q2 + jnp.sum(om2 * om2, axis=0, keepdims=True)
        st_ref[0] = jnp.concatenate([s1, q1, s2, q2, jnp.zeros((4, CPO), f32)],
                                    axis=0)

    y1, y2, stats12_pb = pl.pallas_call(
        stage1_kernel,
        out_shape=(jax.ShapeDtypeStruct((N, FL, CPO), bf16),
                   jax.ShapeDtypeStruct((N, FL, CPO), bf16),
                   jax.ShapeDtypeStruct((N, 8, CPO), f32)),
        grid=(N,),
        in_specs=[phase_spec] * 4 + [vmem, vmem],
        out_specs=(flat_spec, flat_spec, stats_spec),
        compiler_params=cparams,
    )(*phases, w1, w2)

    stats12 = jnp.sum(stats12_pb, axis=0)          # (8, CPO) global BN1/BN2 sums

    # ------ kernel 2: mid = relu(bn2(y2)) fused with row-tiled conv3 + BN3 partials ------
    def stage2_kernel(y2_ref, st12_ref, g2_ref, b2_ref, w3_ref,
                      y3_ref, st3_ref, mid_ref):
        st = st12_ref[...]
        m2 = st[2:3, :] * inv_cnt
        v2 = jnp.maximum(st[3:4, :] * inv_cnt - m2 * m2, 0.0)
        sc = g2_ref[...] * jax.lax.rsqrt(v2 + EPS)
        sh = b2_ref[...] - m2 * sc

        # bn2 + relu; scrap columns forced to zero -> they double as conv3's
        # left/right zero padding in the flat layout (pitch P = WO+1).
        full_mask = (jax.lax.broadcasted_iota(jnp.int32, (FL, 1), 0) % P) < WO
        mid = jnp.maximum(y2_ref[0].astype(f32) * sc + sh, 0.0)
        mid = jnp.where(full_mask, mid, 0.0)

        # halo scratch: zero the small top/bottom strips, one aligned bulk store.
        mid_ref[pl.ds(0, DOFF), :] = jnp.zeros((DOFF, CPO), bf16)
        mid_ref[pl.ds(DOFF + FL, LF - DOFF - FL), :] = \
            jnp.zeros((LF - DOFF - FL, CPO), bf16)
        mid_ref[pl.ds(DOFF, FL), :] = mid.astype(bf16)

        blkmask = (jax.lax.broadcasted_iota(jnp.int32, (MT, 1), 0) % P) < WO
        s3 = jnp.zeros((1, CPO), f32)
        q3 = jnp.zeros((1, CPO), f32)
        for rb in range(R):                        # row-tiled conv3 accumulation
            base = rb * MT
            acc = jnp.zeros((MT, CPO), f32)
            for kh in range(3):
                for kw in range(3):
                    off = base + kh * P + kw + DELTA
                    lhs = mid_ref[pl.ds(off, MT), :]
                    acc = acc + jnp.dot(lhs, w3_ref[kh * 3 + kw],
                                        preferred_element_type=f32)
            y3_ref[0, pl.ds(base, MT), :] = acc.astype(bf16)
            om = jnp.where(blkmask, acc, 0.0)
            s3 = s3 + jnp.sum(om, axis=0, keepdims=True)
            q3 = q3 + jnp.sum(om * om, axis=0, keepdims=True)
        st3_ref[0] = jnp.concatenate([s3, q3, jnp.zeros((6, CPO), f32)], axis=0)

    y3, stats3_pb = pl.pallas_call(
        stage2_kernel,
        out_shape=(jax.ShapeDtypeStruct((N, FL, CPO), bf16),
                   jax.ShapeDtypeStruct((N, 8, CPO), f32)),
        grid=(N,),
        in_specs=[flat_spec, vmem, vmem, vmem, vmem],
        out_specs=(flat_spec, stats_spec),
        scratch_shapes=[pltpu.VMEM((LF, CPO), bf16)],
        compiler_params=cparams,
    )(y2, stats12, g2, be2, w3)

    stats3 = jnp.sum(stats3_pb, axis=0)            # (8, CPO) global BN3 sums

    # ---------------- kernel 3: out = relu(bn1(y1) + bn3(y3))  (elementwise) ----------------
    def stage3_kernel(y1_ref, y3_ref, st12_ref, st3_ref,
                      g1_ref, b1_ref, g3_ref, b3_ref, out_ref):
        st12 = st12_ref[...]
        st3 = st3_ref[...]
        m1 = st12[0:1, :] * inv_cnt
        v1 = jnp.maximum(st12[1:2, :] * inv_cnt - m1 * m1, 0.0)
        sc1 = g1_ref[...] * jax.lax.rsqrt(v1 + EPS)
        sh1 = b1_ref[...] - m1 * sc1
        m3 = st3[0:1, :] * inv_cnt
        v3 = jnp.maximum(st3[1:2, :] * inv_cnt - m3 * m3, 0.0)
        sc3 = g3_ref[...] * jax.lax.rsqrt(v3 + EPS)
        sh3 = b3_ref[...] - m3 * sc3
        a = y1_ref[0].astype(f32) * sc1 + sh1
        c = y3_ref[0].astype(f32) * sc3 + sh3
        out_ref[0] = jnp.maximum(a + c, 0.0).astype(bf16)

    out_flat = pl.pallas_call(
        stage3_kernel,
        out_shape=jax.ShapeDtypeStruct((N, FL, CPO), bf16),
        grid=(N,),
        in_specs=[flat_spec, flat_spec, vmem, vmem, vmem, vmem, vmem, vmem],
        out_specs=flat_spec,
        compiler_params=cparams,
    )(y1, y3, stats12, stats3, g1, be1, g3, be3)

    # drop scrap column + lane padding, restore NCHW f32 (module semantics).
    out = out_flat.reshape(N, HO, P, CPO)[:, :, :WO, :Cout].astype(f32)
    return jnp.transpose(out, (0, 3, 1, 2))


# -------------------------- parameters & pure-JAX reference --------------------------
def init_params(key, cin, cout):
    ks = jax.random.split(key, 12)

    def conv_w(k, co, ci, kh, kw):
        fan_in = ci * kh * kw
        return jax.random.normal(k, (co, ci, kh, kw), jnp.float32) / np.sqrt(fan_in)

    return {
        "w1": conv_w(ks[0], cout, cin, 1, 1),
        "b1": 0.1 * jax.random.normal(ks[1], (cout,), jnp.float32),
        "w2": conv_w(ks[2], cout, cin, 3, 3),
        "b2": 0.1 * jax.random.normal(ks[3], (cout,), jnp.float32),
        "w3": conv_w(ks[4], cout, cout, 3, 3),
        "b3": 0.1 * jax.random.normal(ks[5], (cout,), jnp.float32),
        "g1": 1.0 + 0.1 * jax.random.normal(ks[6], (cout,), jnp.float32),
        "be1": 0.1 * jax.random.normal(ks[7], (cout,), jnp.float32),
        "g2": 1.0 + 0.1 * jax.random.normal(ks[8], (cout,), jnp.float32),
        "be2": 0.1 * jax.random.normal(ks[9], (cout,), jnp.float32),
        "g3": 1.0 + 0.1 * jax.random.normal(ks[10], (cout,), jnp.float32),
        "be3": 0.1 * jax.random.normal(ks[11], (cout,), jnp.float32),
    }


def reference_forward(x, p):
    def conv(y, w, b, stride, pad):
        out = jax.lax.conv_general_dilated(
            y, w, (stride, stride), [(pad, pad), (pad, pad)],
            dimension_numbers=("NCHW", "OIHW", "NCHW"))
        return out + b.reshape(1, -1, 1, 1)

    def bn(y, g, be):
        m = jnp.mean(y, axis=(0, 2, 3), keepdims=True)
        v = jnp.mean((y - m) ** 2, axis=(0, 2, 3), keepdims=True)
        return (y - m) * jax.lax.rsqrt(v + EPS) * g.reshape(1, -1, 1, 1) \
            + be.reshape(1, -1, 1, 1)

    o1 = bn(conv(x, p["w1"], p["b1"], 2, 0), p["g1"], p["be1"])
    o2 = jax.nn.relu(bn(conv(x, p["w2"], p["b2"], 2, 1), p["g2"], p["be2"]))
    o2 = bn(conv(o2, p["w3"], p["b3"], 1, 1), p["g3"], p["be3"])
    return jax.nn.relu(o1 + o2)


if __name__ == "__main__":
    N, Cin, Cout, H, W = 2, 4, 8, 16, 16

    key = jax.random.PRNGKey(0)
    kx, kp = jax.random.split(key)
    x = jax.random.normal(kx, (N, Cin, H, W), jnp.float32)
    params = init_params(kp, Cin, Cout)

    out = jax.block_until_ready(jax.jit(shortcut_resblock_forward)(x, params))
    assert out.shape == (N, Cout, H // 2, W // 2), out.shape

    ref = jax.block_until_ready(reference_forward(x, params))
    # kernel path uses bf16 MXU inputs / bf16 output -> loose tolerance vs f32 ref
    if not np.allclose(np.asarray(out), np.asarray(ref), rtol=1e-1, atol=1e-1):
        err = float(jnp.max(jnp.abs(out - ref)))
        raise AssertionError(f"Pallas output does not match reference (max abs err {err})")

    print("KERNEL_OK")
</pallas_src>

<mosaic_0001>
module attributes {stable_mosaic.version = 11 : i64} {
  func.func @stage1_kernel(%arg0: i32, %arg1: memref<1x96x128xbf16, #tpu.memory_space<vmem>>, %arg2: memref<1x96x128xbf16, #tpu.memory_space<vmem>>, %arg3: memref<1x96x128xbf16, #tpu.memory_space<vmem>>, %arg4: memref<1x96x128xbf16, #tpu.memory_space<vmem>>, %arg5: memref<128x128xbf16, #tpu.memory_space<vmem>>, %arg6: memref<9x128x128xbf16, #tpu.memory_space<vmem>>, %arg7: memref<1x72x128xbf16, #tpu.memory_space<vmem>>, %arg8: memref<1x72x128xbf16, #tpu.memory_space<vmem>>, %arg9: memref<1x8x128xf32, #tpu.memory_space<vmem>>) attributes {dimension_semantics = [#tpu.dimension_semantics<parallel>], iteration_bounds = array<i64: 2>, scalar_prefetch = 0 : i64, scratch_operands = 0 : i64, tpu.core_type = #tpu.core_type<tc>, window_params = [{transform_indices = @transform_0, window_bounds = array<i64: 1, 96, 128>}, {transform_indices = @transform_1, window_bounds = array<i64: 1, 96, 128>}, {transform_indices = @transform_2, window_bounds = array<i64: 1, 96, 128>}, {transform_indices = @transform_3, window_bounds = array<i64: 1, 96, 128>}, {pipeline_mode = #tpu.pipeline_mode<synchronous>, transform_indices = @transform_4, window_bounds = array<i64: 128, 128>}, {pipeline_mode = #tpu.pipeline_mode<synchronous>, transform_indices = @transform_5, window_bounds = array<i64: 9, 128, 128>}, {transform_indices = @transform_6, window_bounds = array<i64: 1, 72, 128>}, {transform_indices = @transform_7, window_bounds = array<i64: 1, 72, 128>}, {transform_indices = @transform_8, window_bounds = array<i64: 1, 8, 128>}]} {
    %0 = tpu.iota {dimensions = array<i32: 0>} : vector<72x1xi32>
    %c9_i32 = arith.constant 9 : i32
    %c0_i32 = arith.constant 0 : i32
    %1 = arith.cmpi eq, %c9_i32, %c0_i32 : i32
    %c1_i32 = arith.constant 1 : i32
    %2 = arith.select %1, %c1_i32, %c9_i32 : i32
    %3 = vector.broadcast %2 : i32 to vector<72x1xi32>
    %4 = arith.remsi %0, %3 : vector<72x1xi32>
    %c0_i32_0 = arith.constant 0 : i32
    %5 = vector.broadcast %c0_i32_0 : i32 to vector<72x1xi32>
    %6 = arith.cmpi ne, %4, %5 : vector<72x1xi32>
    %c0_i32_1 = arith.constant 0 : i32
    %7 = vector.broadcast %c0_i32_1 : i32 to vector<72x1xi32>
    %8 = arith.cmpi slt, %4, %7 : vector<72x1xi32>
    %c0_i32_2 = arith.constant 0 : i32
    %9 = arith.cmpi slt, %2, %c0_i32_2 : i32
    %10 = vector.broadcast %9 : i1 to vector<72x1xi1>
    %11 = vector.broadcast %10 : vector<72x1xi1> to vector<72x1xi1>
    %12 = arith.xori %8, %11 : vector<72x1xi1>
    %13 = arith.andi %12, %6 : vector<72x1xi1>
    %14 = vector.broadcast %2 : i32 to vector<72x1xi32>
    %15 = arith.addi %4, %14 : vector<72x1xi32>
    %16 = arith.select %13, %15, %4 : vector<72x1xi1>, vector<72x1xi32>
    %c8_i32 = arith.constant 8 : i32
    %17 = vector.broadcast %c8_i32 : i32 to vector<72x1xi32>
    %18 = arith.cmpi slt, %16, %17 : vector<72x1xi32>
    %cst = arith.constant 0.000000e+00 : f32
    %19 = vector.broadcast %cst : f32 to vector<1x128xf32>
    %cst_3 = arith.constant 0.000000e+00 : f32
    %20 = vector.broadcast %cst_3 : f32 to vector<1x128xf32>
    %cst_4 = arith.constant 0.000000e+00 : f32
    %21 = vector.broadcast %cst_4 : f32 to vector<1x128xf32>
    %cst_5 = arith.constant 0.000000e+00 : f32
    %22 = vector.broadcast %cst_5 : f32 to vector<1x128xf32>
    %c0 = arith.constant 0 : index
    %c0_6 = arith.constant 0 : index
    %c0_7 = arith.constant 0 : index
    %23 = vector.load %arg4[%c0, %c0_6, %c0_7] : memref<1x96x128xbf16, #tpu.memory_space<vmem>>, vector<1x72x128xbf16>
    %24 = vector.shape_cast %23 : vector<1x72x128xbf16> to vector<72x128xbf16>
    %c0_8 = arith.constant 0 : index
    %c0_9 = arith.constant 0 : index
    %25 = vector.load %arg5[%c0_8, %c0_9] : memref<128x128xbf16, #tpu.memory_space<vmem>>, vector<128x128xbf16>
    %cst_10 = arith.constant dense<0.000000e+00> : vector<72x128xf32>
    %26 = tpu.matmul %24, %25, %cst_10 {dimension_numbers = #tpu.dot_dimension_numbers<[1], [0], [0], [1], [0, 0, 1, 1], [], []>} : vector<72x128xbf16>, vector<128x128xbf16>, vector<72x128xf32> -> vector<72x128xf32>
    %cst_11 = arith.constant 0.000000e+00 : f32
    %27 = vector.broadcast %cst_11 : f32 to vector<72x128xf32>
    %c0_12 = arith.constant 0 : index
    %c0_13 = arith.constant 0 : index
    %c0_14 = arith.constant 0 : index
    %28 = vector.load %arg1[%c0_12, %c0_13, %c0_14] : memref<1x96x128xbf16, #tpu.memory_space<vmem>>, vector<1x72x128xbf16>
    %29 = vector.shape_cast %28 : vector<1x72x128xbf16> to vector<72x128xbf16>
    %c0_15 = arith.constant 0 : index
    %c0_16 = arith.constant 0 : index
    %c0_17 = arith.constant 0 : index
    %30 = vector.load %arg6[%c0_15, %c0_16, %c0_17] : memref<9x128x128xbf16, #tpu.memory_space<vmem>>, vector<1x128x128xbf16>
    %31 = vector.shape_cast %30 : vector<1x128x128xbf16> to vector<128x128xbf16>
    %cst_18 = arith.constant dense<0.000000e+00> : vector<72x128xf32>
    %32 = tpu.matmul %29, %31, %cst_18 {dimension_numbers = #tpu.dot_dimension_numbers<[1], [0], [0], [1], [0, 0, 1, 1], [], []>} : vector<72x128xbf16>, vector<128x128xbf16>, vector<72x128xf32> -> vector<72x128xf32>
    %33 = arith.addf %27, %32 : vector<72x128xf32>
    %c0_19 = arith.constant 0 : index
    %c0_20 = arith.constant 0 : index
    %c0_21 = arith.constant 0 : index
    %34 = vector.load %arg2[%c0_19, %c0_20, %c0_21] : memref<1x96x128xbf16, #tpu.memory_space<vmem>>, vector<1x72x128xbf16>
    %35 = vector.shape_cast %34 : vector<1x72x128xbf16> to vector<72x128xbf16>
    %c1 = arith.constant 1 : index
    %c0_22 = arith.constant 0 : index
    %c0_23 = arith.constant 0 : index
    %36 = vector.load %arg6[%c1, %c0_22, %c0_23] : memref<9x128x128xbf16, #tpu.memory_space<vmem>>, vector<1x128x128xbf16>
    %37 = vector.shape_cast %36 : vector<1x128x128xbf16> to vector<128x128xbf16>
    %cst_24 = arith.constant dense<0.000000e+00> : vector<72x128xf32>
    %38 = tpu.matmul %35, %37, %cst_24 {dimension_numbers = #tpu.dot_dimension_numbers<[1], [0], [0], [1], [0, 0, 1, 1], [], []>} : vector<72x128xbf16>, vector<128x128xbf16>, vector<72x128xf32> -> vector<72x128xf32>
    %39 = arith.addf %33, %38 : vector<72x128xf32>
    %c0_25 = arith.constant 0 : index
    %c1_26 = arith.constant 1 : index
    %c0_27 = arith.constant 0 : index
    %40 = vector.load %arg1[%c0_25, %c1_26, %c0_27] : memref<1x96x128xbf16, #tpu.memory_space<vmem>>, vector<1x72x128xbf16>
    %41 = vector.shape_cast %40 : vector<1x72x128xbf16> to vector<72x128xbf16>
    %c2 = arith.constant 2 : index
    %c0_28 = arith.constant 0 : index
    %c0_29 = arith.constant 0 : index
    %42 = vector.load %arg6[%c2, %c0_28, %c0_29] : memref<9x128x128xbf16, #tpu.memory_space<vmem>>, vector<1x128x128xbf16>
    %43 = vector.shape_cast %42 : vector<1x128x128xbf16> to vector<128x128xbf16>
    %cst_30 = arith.constant dense<0.000000e+00> : vector<72x128xf32>
    %44 = tpu.matmul %41, %43, %cst_30 {dimension_numbers = #tpu.dot_dimension_numbers<[1], [0], [0], [1], [0, 0, 1, 1], [], []>} : vector<72x128xbf16>, vector<128x128xbf16>, vector<72x128xf32> -> vector<72x128xf32>
    %45 = arith.addf %39, %44 : vector<72x128xf32>
    %c0_31 = arith.constant 0 : index
    %c0_32 = arith.constant 0 : index
    %c0_33 = arith.constant 0 : index
    %46 = vector.load %arg3[%c0_31, %c0_32, %c0_33] : memref<1x96x128xbf16, #tpu.memory_space<vmem>>, vector<1x72x128xbf16>
    %47 = vector.shape_cast %46 : vector<1x72x128xbf16> to vector<72x128xbf16>
    %c3 = arith.constant 3 : index
    %c0_34 = arith.constant 0 : index
    %c0_35 = arith.constant 0 : index
    %48 = vector.load %arg6[%c3, %c0_34, %c0_35] : memref<9x128x128xbf16, #tpu.memory_space<vmem>>, vector<1x128x128xbf16>
    %49 = vector.shape_cast %48 : vector<1x128x128xbf16> to vector<128x128xbf16>
    %cst_36 = arith.constant dense<0.000000e+00> : vector<72x128xf32>
    %50 = tpu.matmul %47, %49, %cst_36 {dimension_numbers = #tpu.dot_dimension_numbers<[1], [0], [0], [1], [0, 0, 1, 1], [], []>} : vector<72x128xbf16>, vector<128x128xbf16>, vector<72x128xf32> -> vector<72x128xf32>
    %51 = arith.addf %45, %50 : vector<72x128xf32>
    %c4 = arith.constant 4 : index
    %c0_37 = arith.constant 0 : index
    %c0_38 = arith.constant 0 : index
    %52 = vector.load %arg6[%c4, %c0_37, %c0_38] : memref<9x128x128xbf16, #tpu.memory_space<vmem>>, vector<1x128x128xbf16>
    %53 = vector.shape_cast %52 : vector<1x128x128xbf16> to vector<128x128xbf16>
    %cst_39 = arith.constant dense<0.000000e+00> : vector<72x128xf32>
    %54 = tpu.matmul %24, %53, %cst_39 {dimension_numbers = #tpu.dot_dimension_numbers<[1], [0], [0], [1], [0, 0, 1, 1], [], []>} : vector<72x128xbf16>, vector<128x128xbf16>, vector<72x128xf32> -> vector<72x128xf32>
    %55 = arith.addf %51, %54 : vector<72x128xf32>
    %c0_40 = arith.constant 0 : index
    %c1_41 = arith.constant 1 : index
    %c0_42 = arith.constant 0 : index
    %56 = vector.load %arg3[%c0_40, %c1_41, %c0_42] : memref<1x96x128xbf16, #tpu.memory_space<vmem>>, vector<1x72x128xbf16>
    %57 = vector.shape_cast %56 : vector<1x72x128xbf16> to vector<72x128xbf16>
    %c5 = arith.constant 5 : index
    %c0_43 = arith.constant 0 : index
    %c0_44 = arith.constant 0 : index
    %58 = vector.load %arg6[%c5, %c0_43, %c0_44] : memref<9x128x128xbf16, #tpu.memory_space<vmem>>, vector<1x128x128xbf16>
    %59 = vector.shape_cast %58 : vector<1x128x128xbf16> to vector<128x128xbf16>
    %cst_45 = arith.constant dense<0.000000e+00> : vector<72x128xf32>
    %60 = tpu.matmul %57, %59, %cst_45 {dimension_numbers = #tpu.dot_dimension_numbers<[1], [0], [0], [1], [0, 0, 1, 1], [], []>} : vector<72x128xbf16>, vector<128x128xbf16>, vector<72x128xf32> -> vector<72x128xf32>
    %61 = arith.addf %55, %60 : vector<72x128xf32>
    %c0_46 = arith.constant 0 : index
    %c9 = arith.constant 9 : index
    %c0_47 = arith.constant 0 : index
    %62 = vector.load %arg1[%c0_46, %c9, %c0_47] : memref<1x96x128xbf16, #tpu.memory_space<vmem>>, vector<1x72x128xbf16>
    %63 = vector.shape_cast %62 : vector<1x72x128xbf16> to vector<72x128xbf16>
    %c6 = arith.constant 6 : index
    %c0_48 = arith.constant 0 : index
    %c0_49 = arith.constant 0 : index
    %64 = vector.load %arg6[%c6, %c0_48, %c0_49] : memref<9x128x128xbf16, #tpu.memory_space<vmem>>, vector<1x128x128xbf16>
    %65 = vector.shape_cast %64 : vector<1x128x128xbf16> to vector<128x128xbf16>
    %cst_50 = arith.constant dense<0.000000e+00> : vector<72x128xf32>
    %66 = tpu.matmul %63, %65, %cst_50 {dimension_numbers = #tpu.dot_dimension_numbers<[1], [0], [0], [1], [0, 0, 1, 1], [], []>} : vector<72x128xbf16>, vector<128x128xbf16>, vector<72x128xf32> -> vector<72x128xf32>
    %67 = arith.addf %61, %66 : vector<72x128xf32>
    %c0_51 = arith.constant 0 : index
    %c9_52 = arith.constant 9 : index
    %c0_53 = arith.constant 0 : index
    %68 = vector.load %arg2[%c0_51, %c9_52, %c0_53] : memref<1x96x128xbf16, #tpu.memory_space<vmem>>, vector<1x72x128xbf16>
    %69 = vector.shape_cast %68 : vector<1x72x128xbf16> to vector<72x128xbf16>
    %c7 = arith.constant 7 : index
    %c0_54 = arith.constant 0 : index
    %c0_55 = arith.constant 0 : index
    %70 = vector.load %arg6[%c7, %c0_54, %c0_55] : memref<9x128x128xbf16, #tpu.memory_space<vmem>>, vector<1x128x128xbf16>
    %71 = vector.shape_cast %70 : vector<1x128x128xbf16> to vector<128x128xbf16>
    %cst_56 = arith.constant dense<0.000000e+00> : vector<72x128xf32>
    %72 = tpu.matmul %69, %71, %cst_56 {dimension_numbers = #tpu.dot_dimension_numbers<[1], [0], [0], [1], [0, 0, 1, 1], [], []>} : vector<72x128xbf16>, vector<128x128xbf16>, vector<72x128xf32> -> vector<72x128xf32>
    %73 = arith.addf %67, %72 : vector<72x128xf32>
    %c0_57 = arith.constant 0 : index
    %c10 = arith.constant 10 : index
    %c0_58 = arith.constant 0 : index
    %74 = vector.load %arg1[%c0_57, %c10, %c0_58] : memref<1x96x128xbf16, #tpu.memory_space<vmem>>, vector<1x72x128xbf16>
    %75 = vector.shape_cast %74 : vector<1x72x128xbf16> to vector<72x128xbf16>
    %c8 = arith.constant 8 : index
    %c0_59 = arith.constant 0 : index
    %c0_60 = arith.constant 0 : index
    %76 = vector.load %arg6[%c8, %c0_59, %c0_60] : memref<9x128x128xbf16, #tpu.memory_space<vmem>>, vector<1x128x128xbf16>
    %77 = vector.shape_cast %76 : vector<1x128x128xbf16> to vector<128x128xbf16>
    %cst_61 = arith.constant dense<0.000000e+00> : vector<72x128xf32>
    %78 = tpu.matmul %75, %77, %cst_61 {dimension_numbers = #tpu.dot_dimension_numbers<[1], [0], [0], [1], [0, 0, 1, 1], [], []>} : vector<72x128xbf16>, vector<128x128xbf16>, vector<72x128xf32> -> vector<72x128xf32>
    %79 = arith.addf %73, %78 : vector<72x128xf32>
    %80 = arith.truncf %26 : vector<72x128xf32> to vector<72x128xbf16>
    %c0_62 = arith.constant 0 : index
    %c0_63 = arith.constant 0 : index
    %c0_64 = arith.constant 0 : index
    %81 = vector.load %arg7[%c0_62, %c0_63, %c0_64] : memref<1x72x128xbf16, #tpu.memory_space<vmem>>, vector<1x72x128xbf16>
    %82 = vector.shape_cast %81 : vector<1x72x128xbf16> to vector<72x128xbf16>
    %83 = vector.shape_cast %80 : vector<72x128xbf16> to vector<1x72x128xbf16>
    tpu.vector_store %arg7[%c0_62, %c0_63, %c0_64], %83 {strides = array<i32>} : memref<1x72x128xbf16, #tpu.memory_space<vmem>>, vector<1x72x128xbf16>,
    %84 = arith.truncf %79 : vector<72x128xf32> to vector<72x128xbf16>
    %c0_65 = arith.constant 0 : index
    %c0_66 = arith.constant 0 : index
    %c0_67 = arith.constant 0 : index
    %85 = vector.load %arg8[%c0_65, %c0_66, %c0_67] : memref<1x72x128xbf16, #tpu.memory_space<vmem>>, vector<1x72x128xbf16>
    %86 = vector.shape_cast %85 : vector<1x72x128xbf16> to vector<72x128xbf16>
    %87 = vector.shape_cast %84 : vector<72x128xbf16> to vector<1x72x128xbf16>
    tpu.vector_store %arg8[%c0_65, %c0_66, %c0_67], %87 {strides = array<i32>} : memref<1x72x128xbf16, #tpu.memory_space<vmem>>, vector<1x72x128xbf16>,
    %cst_68 = arith.constant 0.000000e+00 : f32
    %88 = vector.shape_cast %18 : vector<72x1xi1> to vector<72x1xi1>
    %89 = vector.broadcast %88 : vector<72x1xi1> to vector<72x128xi1>
    %90 = vector.broadcast %cst_68 : f32 to vector<72x128xf32>
    %91 = arith.select %89, %26, %90 : vector<72x128xi1>, vector<72x128xf32>
    %cst_69 = arith.constant 0.000000e+00 : f32
    %92 = vector.shape_cast %18 : vector<72x1xi1> to vector<72x1xi1>
    %93 = vector.broadcast %92 : vector<72x1xi1> to vector<72x128xi1>
    %94 = vector.broadcast %cst_69 : f32 to vector<72x128xf32>
    %95 = arith.select %93, %79, %94 : vector<72x128xi1>, vector<72x128xf32>
    %cst_70 = arith.constant dense<0.000000e+00> : vector<128xf32>
    %96 = vector.multi_reduction <add>, %91, %cst_70 [0] : vector<72x128xf32> to vector<128xf32>
    %97 = vector.shape_cast %96 : vector<128xf32> to vector<1x128xf32>
    %98 = arith.addf %19, %97 : vector<1x128xf32>
    %99 = arith.mulf %91, %91 : vector<72x128xf32>
    %cst_71 = arith.constant dense<0.000000e+00> : vector<128xf32>
    %100 = vector.multi_reduction <add>, %99, %cst_71 [0] : vector<72x128xf32> to vector<128xf32>
    %101 = vector.shape_cast %100 : vector<128xf32> to vector<1x128xf32>
    %102 = arith.addf %20, %101 : vector<1x128xf32>
    %cst_72 = arith.constant dense<0.000000e+00> : vector<128xf32>
    %103 = vector.multi_reduction <add>, %95, %cst_72 [0] : vector<72x128xf32> to vector<128xf32>
    %104 = vector.shape_cast %103 : vector<128xf32> to vector<1x128xf32>
    %105 = arith.addf %21, %104 : vector<1x128xf32>
    %106 = arith.mulf %95, %95 : vector<72x128xf32>
    %cst_73 = arith.constant dense<0.000000e+00> : vector<128xf32>
    %107 = vector.multi_reduction <add>, %106, %cst_73 [0] : vector<72x128xf32> to vector<128xf32>
    %108 = vector.shape_cast %107 : vector<128xf32> to vector<1x128xf32>
    %109 = arith.addf %22, %108 : vector<1x128xf32>
    %cst_74 = arith.constant 0.000000e+00 : f32
    %110 = vector.broadcast %cst_74 : f32 to vector<4x128xf32>
    %111 = tpu.concatenate %98, %102, %105, %109, %110 in 0 : vector<1x128xf32>, vector<1x128xf32>, vector<1x128xf32>, vector<1x128xf32>, vector<4x128xf32> -> vector<8x128xf32>
    %c0_75 = arith.constant 0 : index
    %c0_76 = arith.constant 0 : index
    %c0_77 = arith.constant 0 : index
    %112 = vector.load %arg9[%c0_75, %c0_76, %c0_77] : memref<1x8x128xf32, #tpu.memory_space<vmem>>, vector<1x8x128xf32>
    %113 = vector.shape_cast %112 : vector<1x8x128xf32> to vector<8x128xf32>
    %114 = vector.shape_cast %111 : vector<8x128xf32> to vector<1x8x128xf32>
    tpu.vector_store %arg9[%c0_75, %c0_76, %c0_77], %114 {strides = array<i32>} : memref<1x8x128xf32, #tpu.memory_space<vmem>>, vector<1x8x128xf32>,
    return
  }
  func.func @transform_0(%arg0: i32) -> (i32, i32, i32) {
    %c0_i32 = arith.constant 0 : i32
    %c0_i32_0 = arith.constant 0 : i32
    %c0_i32_1 = arith.constant 0 : i32
    return %arg0, %c0_i32, %c0_i32_0 : i32, i32, i32
  }
  func.func @transform_1(%arg0: i32) -> (i32, i32, i32) {
    %c0_i32 = arith.constant 0 : i32
    %c0_i32_0 = arith.constant 0 : i32
    %c0_i32_1 = arith.constant 0 : i32
    return %arg0, %c0_i32, %c0_i32_0 : i32, i32, i32
  }
  func.func @transform_2(%arg0: i32) -> (i32, i32, i32) {
    %c0_i32 = arith.constant 0 : i32
    %c0_i32_0 = arith.constant 0 : i32
    %c0_i32_1 = arith.constant 0 : i32
    return %arg0, %c0_i32, %c0_i32_0 : i32, i32, i32
  }
  func.func @transform_3(%arg0: i32) -> (i32, i32, i32) {
    %c0_i32 = arith.constant 0 : i32
    %c0_i32_0 = arith.constant 0 : i32
    %c0_i32_1 = arith.constant 0 : i32
    return %arg0, %c0_i32, %c0_i32_0 : i32, i32, i32
  }
  func.func @transform_4(%arg0: i32) -> (i32, i32) {
    %c0_i32 = arith.constant 0 : i32
    %c0_i32_0 = arith.constant 0 : i32
    %c0_i32_1 = arith.constant 0 : i32
    return %c0_i32, %c0_i32_0 : i32, i32
  }
  func.func @transform_5(%arg0: i32) -> (i32, i32, i32) {
    %c0_i32 = arith.constant 0 : i32
    %c0_i32_0 = arith.constant 0 : i32
    %c0_i32_1 = arith.constant 0 : i32
    %c0_i32_2 = arith.constant 0 : i32
    return %c0_i32, %c0_i32_0, %c0_i32_1 : i32, i32, i32
  }
  func.func @transform_6(%arg0: i32) -> (i32, i32, i32) {
    %c0_i32 = arith.constant 0 : i32
    %c0_i32_0 = arith.constant 0 : i32
    %c0_i32_1 = arith.constant 0 : i32
    return %arg0, %c0_i32, %c0_i32_0 : i32, i32, i32
  }
  func.func @transform_7(%arg0: i32) -> (i32, i32, i32) {
    %c0_i32 = arith.constant 0 : i32
    %c0_i32_0 = arith.constant 0 : i32
    %c0_i32_1 = arith.constant 0 : i32
    return %arg0, %c0_i32, %c0_i32_0 : i32, i32, i32
  }
  func.func @transform_8(%arg0: i32) -> (i32, i32, i32) {
    %c0_i32 = arith.constant 0 : i32
    %c0_i32_0 = arith.constant 0 : i32
    %c0_i32_1 = arith.constant 0 : i32
    return %arg0, %c0_i32, %c0_i32_0 : i32, i32, i32
  }
}

module attributes {stable_mosaic.version = 11 : i64} {
  func.func @stage2_kernel(%arg0: i32, %arg1: memref<1x72x128xbf16, #tpu.memory_space<vmem>>, %arg2: memref<8x128xf32, #tpu.memory_space<vmem>>, %arg3: memref<1x128xf32, #tpu.memory_space<vmem>>, %arg4: memref<1x128xf32, #tpu.memory_space<vmem>>, %arg5: memref<9x128x128xbf16, #tpu.memory_space<vmem>>, %arg6: memref<1x72x128xbf16, #tpu.memory_space<vmem>>, %arg7: memref<1x8x128xf32, #tpu.memory_space<vmem>>, %arg8: memref<112x128xbf16, #tpu.memory_space<vmem>>) attributes {dimension_semantics = [#tpu.dimension_semantics<parallel>], iteration_bounds = array<i64: 2>, scalar_prefetch = 0 : i64, scratch_operands = 1 : i64, tpu.core_type = #tpu.core_type<tc>, window_params = [{transform_indices = @transform_0, window_bounds = array<i64: 1, 72, 128>}, {pipeline_mode = #tpu.pipeline_mode<synchronous>, transform_indices = @transform_1, window_bounds = array<i64: 8, 128>}, {pipeline_mode = #tpu.pipeline_mode<synchronous>, transform_indices = @transform_2, window_bounds = array<i64: 1, 128>}, {pipeline_mode = #tpu.pipeline_mode<synchronous>, transform_indices = @transform_3, window_bounds = array<i64: 1, 128>}, {pipeline_mode = #tpu.pipeline_mode<synchronous>, transform_indices = @transform_4, window_bounds = array<i64: 9, 128, 128>}, {transform_indices = @transform_5, window_bounds = array<i64: 1, 72, 128>}, {transform_indices = @transform_6, window_bounds = array<i64: 1, 8, 128>}]} {
    %c0 = arith.constant 0 : index
    %c0_0 = arith.constant 0 : index
    %0 = vector.load %arg2[%c0, %c0_0] : memref<8x128xf32, #tpu.memory_space<vmem>>, vector<8x128xf32>
    %1 = vector.extract_strided_slice %0 {offsets = [2, 0], sizes = [1, 128], strides = [1, 1]} : vector<8x128xf32> to vector<1x128xf32>
    %cst = arith.constant 7.812500e-03 : f32
    %2 = vector.broadcast %cst : f32 to vector<1x128xf32>
    %3 = arith.mulf %1, %2 : vector<1x128xf32>
    %4 = vector.extract_strided_slice %0 {offsets = [3, 0], sizes = [1, 128], strides = [1, 1]} : vector<8x128xf32> to vector<1x128xf32>
    %cst_1 = arith.constant 7.812500e-03 : f32
    %5 = vector.broadcast %cst_1 : f32 to vector<1x128xf32>
    %6 = arith.mulf %4, %5 : vector<1x128xf32>
    %7 = arith.mulf %3, %3 : vector<1x128xf32>
    %8 = arith.subf %6, %7 : vector<1x128xf32>
    %cst_2 = arith.constant 0.000000e+00 : f32
    %9 = vector.broadcast %cst_2 : f32 to vector<1x128xf32>
    %10 = arith.maximumf %8, %9 : vector<1x128xf32>
    %c0_3 = arith.constant 0 : index
    %c0_4 = arith.constant 0 : index
    %11 = vector.load %arg3[%c0_3, %c0_4] : memref<1x128xf32, #tpu.memory_space<vmem>>, vector<1x128xf32>
    %cst_5 = arith.constant 9.99999974E-6 : f32
    %12 = vector.broadcast %cst_5 : f32 to vector<1x128xf32>
    %13 = arith.addf %10, %12 : vector<1x128xf32>
    %14 = math.rsqrt %13 : vector<1x128xf32>
    %15 = arith.mulf %11, %14 : vector<1x128xf32>
    %c0_6 = arith.constant 0 : index
    %c0_7 = arith.constant 0 : index
    %16 = vector.load %arg4[%c0_6, %c0_7] : memref<1x128xf32, #tpu.memory_space<vmem>>, vector<1x128xf32>
    %17 = arith.mulf %3, %15 : vector<1x128xf32>
    %18 = arith.subf %16, %17 : vector<1x128xf32>
    %19 = tpu.iota {dimensions = array<i32: 0>} : vector<72x1xi32>
    %c9_i32 = arith.constant 9 : i32
    %c0_i32 = arith.constant 0 : i32
    %20 = arith.cmpi eq, %c9_i32, %c0_i32 : i32
    %c1_i32 = arith.constant 1 : i32
    %21 = arith.select %20, %c1_i32, %c9_i32 : i32
    %22 = vector.broadcast %21 : i32 to vector<72x1xi32>
    %23 = arith.remsi %19, %22 : vector<72x1xi32>
    %c0_i32_8 = arith.constant 0 : i32
    %24 = vector.broadcast %c0_i32_8 : i32 to vector<72x1xi32>
    %25 = arith.cmpi ne, %23, %24 : vector<72x1xi32>
    %c0_i32_9 = arith.constant 0 : i32
    %26 = vector.broadcast %c0_i32_9 : i32 to vector<72x1xi32>
    %27 = arith.cmpi slt, %23, %26 : vector<72x1xi32>
    %c0_i32_10 = arith.constant 0 : i32
    %28 = arith.cmpi slt, %21, %c0_i32_10 : i32
    %29 = vector.broadcast %28 : i1 to vector<72x1xi1>
    %30 = vector.broadcast %29 : vector<72x1xi1> to vector<72x1xi1>
    %31 = arith.xori %27, %30 : vector<72x1xi1>
    %32 = arith.andi %31, %25 : vector<72x1xi1>
    %33 = vector.broadcast %21 : i32 to vector<72x1xi32>
    %34 = arith.addi %23, %33 : vector<72x1xi32>
    %35 = arith.select %32, %34, %23 : vector<72x1xi1>, vector<72x1xi32>
    %c8_i32 = arith.constant 8 : i32
    %36 = vector.broadcast %c8_i32 : i32 to vector<72x1xi32>
    %37 = arith.cmpi slt, %35, %36 : vector<72x1xi32>
    %c0_11 = arith.constant 0 : index
    %c0_12 = arith.constant 0 : index
    %c0_13 = arith.constant 0 : index
    %38 = vector.load %arg1[%c0_11, %c0_12, %c0_13] : memref<1x72x128xbf16, #tpu.memory_space<vmem>>, vector<1x72x128xbf16>
    %39 = vector.shape_cast %38 : vector<1x72x128xbf16> to vector<72x128xbf16>
    %40 = arith.extf %39 : vector<72x128xbf16> to vector<72x128xf32>
    %41 = vector.broadcast %15 : vector<1x128xf32> to vector<72x128xf32>
    %42 = arith.mulf %40, %41 : vector<72x128xf32>
    %43 = vector.broadcast %18 : vector<1x128xf32> to vector<72x128xf32>
    %44 = arith.addf %42, %43 : vector<72x128xf32>
    %cst_14 = arith.constant 0.000000e+00 : f32
    %45 = vector.broadcast %cst_14 : f32 to vector<72x128xf32>
    %46 = arith.maximumf %44, %45 : vector<72x128xf32>
    %cst_15 = arith.constant 0.000000e+00 : f32
    %47 = vector.shape_cast %37 : vector<72x1xi1> to vector<72x1xi1>
    %48 = vector.broadcast %47 : vector<72x1xi1> to vector<72x128xi1>
    %49 = vector.broadcast %cst_15 : f32 to vector<72x128xf32>
    %50 = arith.select %48, %46, %49 : vector<72x128xi1>, vector<72x128xf32>
    %cst_16 = arith.constant 0.000000e+00 : bf16
    %51 = vector.broadcast %cst_16 : bf16 to vector<16x128xbf16>
    %c0_17 = arith.constant 0 : index
    %c0_18 = arith.constant 0 : index
    %52 = vector.load %arg8[%c0_17, %c0_18] : memref<112x128xbf16, #tpu.memory_space<vmem>>, vector<16x128xbf16>
    tpu.vector_store %arg8[%c0_17, %c0_18], %51 {strides = array<i32>} : memref<112x128xbf16, #tpu.memory_space<vmem>>, vector<16x128xbf16>,
    %cst_19 = arith.constant 0.000000e+00 : bf16
    %53 = vector.broadcast %cst_19 : bf16 to vector<24x128xbf16>
    %c88 = arith.constant 88 : index
    %c0_20 = arith.constant 0 : index
    %54 = vector.load %arg8[%c88, %c0_20] : memref<112x128xbf16, #tpu.memory_space<vmem>>, vector<24x128xbf16>
    tpu.vector_store %arg8[%c88, %c0_20], %53 {strides = array<i32>} : memref<112x128xbf16, #tpu.memory_space<vmem>>, vector<24x128xbf16>,
    %55 = arith.truncf %50 : vector<72x128xf32> to vector<72x128xbf16>
    %c16 = arith.constant 16 : index
    %c0_21 = arith.constant 0 : index
    %56 = vector.load %arg8[%c16, %c0_21] : memref<112x128xbf16, #tpu.memory_space<vmem>>, vector<72x128xbf16>
    tpu.vector_store %arg8[%c16, %c0_21], %55 {strides = array<i32>} : memref<112x128xbf16, #tpu.memory_space<vmem>>, vector<72x128xbf16>,
    %57 = tpu.iota {dimensions = array<i32: 0>} : vector<72x1xi32>
    %c9_i32_22 = arith.constant 9 : i32
    %c0_i32_23 = arith.constant 0 : i32
    %58 = arith.cmpi eq, %c9_i32_22, %c0_i32_23 : i32
    %c1_i32_24 = arith.constant 1 : i32
    %59 = arith.select %58, %c1_i32_24, %c9_i32_22 : i32
    %60 = vector.broadcast %59 : i32 to vector<72x1xi32>
    %61 = arith.remsi %57, %60 : vector<72x1xi32>
    %c0_i32_25 = arith.constant 0 : i32
    %62 = vector.broadcast %c0_i32_25 : i32 to vector<72x1xi32>
    %63 = arith.cmpi ne, %61, %62 : vector<72x1xi32>
    %c0_i32_26 = arith.constant 0 : i32
    %64 = vector.broadcast %c0_i32_26 : i32 to vector<72x1xi32>
    %65 = arith.cmpi slt, %61, %64 : vector<72x1xi32>
    %c0_i32_27 = arith.constant 0 : i32
    %66 = arith.cmpi slt, %59, %c0_i32_27 : i32
    %67 = vector.broadcast %66 : i1 to vector<72x1xi1>
    %68 = vector.broadcast %67 : vector<72x1xi1> to vector<72x1xi1>
    %69 = arith.xori %65, %68 : vector<72x1xi1>
    %70 = arith.andi %69, %63 : vector<72x1xi1>
    %71 = vector.broadcast %59 : i32 to vector<72x1xi32>
    %72 = arith.addi %61, %71 : vector<72x1xi32>
    %73 = arith.select %70, %72, %61 : vector<72x1xi1>, vector<72x1xi32>
    %c8_i32_28 = arith.constant 8 : i32
    %74 = vector.broadcast %c8_i32_28 : i32 to vector<72x1xi32>
    %75 = arith.cmpi slt, %73, %74 : vector<72x1xi32>
    %cst_29 = arith.constant 0.000000e+00 : f32
    %76 = vector.broadcast %cst_29 : f32 to vector<1x128xf32>
    %cst_30 = arith.constant 0.000000e+00 : f32
    %77 = vector.broadcast %cst_30 : f32 to vector<1x128xf32>
    %cst_31 = arith.constant 0.000000e+00 : f32
    %78 = vector.broadcast %cst_31 : f32 to vector<72x128xf32>
    %c6 = arith.constant 6 : index
    %c0_32 = arith.constant 0 : index
    %79 = vector.load %arg8[%c6, %c0_32] : memref<112x128xbf16, #tpu.memory_space<vmem>>, vector<72x128xbf16>
    %c0_33 = arith.constant 0 : index
    %c0_34 = arith.constant 0 : index
    %c0_35 = arith.constant 0 : index
    %80 = vector.load %arg5[%c0_33, %c0_34, %c0_35] : memref<9x128x128xbf16, #tpu.memory_space<vmem>>, vector<1x128x128xbf16>
    %81 = vector.shape_cast %80 : vector<1x128x128xbf16> to vector<128x128xbf16>
    %cst_36 = arith.constant dense<0.000000e+00> : vector<72x128xf32>
    %82 = tpu.matmul %79, %81, %cst_36 {dimension_numbers = #tpu.dot_dimension_numbers<[1], [0], [0], [1], [0, 0, 1, 1], [], []>} : vector<72x128xbf16>, vector<128x128xbf16>, vector<72x128xf32> -> vector<72x128xf32>
    %83 = arith.addf %78, %82 : vector<72x128xf32>
    %c7 = arith.constant 7 : index
    %c0_37 = arith.constant 0 : index
    %84 = vector.load %arg8[%c7, %c0_37] : memref<112x128xbf16, #tpu.memory_space<vmem>>, vector<72x128xbf16>
    %c1 = arith.constant 1 : index
    %c0_38 = arith.constant 0 : index
    %c0_39 = arith.constant 0 : index
    %85 = vector.load %arg5[%c1, %c0_38, %c0_39] : memref<9x128x128xbf16, #tpu.memory_space<vmem>>, vector<1x128x128xbf16>
    %86 = vector.shape_cast %85 : vector<1x128x128xbf16> to vector<128x128xbf16>
    %cst_40 = arith.constant dense<0.000000e+00> : vector<72x128xf32>
    %87 = tpu.matmul %84, %86, %cst_40 {dimension_numbers = #tpu.dot_dimension_numbers<[1], [0], [0], [1], [0, 0, 1, 1], [], []>} : vector<72x128xbf16>, vector<128x128xbf16>, vector<72x128xf32> -> vector<72x128xf32>
    %88 = arith.addf %83, %87 : vector<72x128xf32>
    %c8 = arith.constant 8 : index
    %c0_41 = arith.constant 0 : index
    %89 = vector.load %arg8[%c8, %c0_41] : memref<112x128xbf16, #tpu.memory_space<vmem>>, vector<72x128xbf16>
    %c2 = arith.constant 2 : index
    %c0_42 = arith.constant 0 : index
    %c0_43 = arith.constant 0 : index
    %90 = vector.load %arg5[%c2, %c0_42, %c0_43] : memref<9x128x128xbf16, #tpu.memory_space<vmem>>, vector<1x128x128xbf16>
    %91 = vector.shape_cast %90 : vector<1x128x128xbf16> to vector<128x128xbf16>
    %cst_44 = arith.constant dense<0.000000e+00> : vector<72x128xf32>
    %92 = tpu.matmul %89, %91, %cst_44 {dimension_numbers = #tpu.dot_dimension_numbers<[1], [0], [0], [1], [0, 0, 1, 1], [], []>} : vector<72x128xbf16>, vector<128x128xbf16>, vector<72x128xf32> -> vector<72x128xf32>
    %93 = arith.addf %88, %92 : vector<72x128xf32>
    %c15 = arith.constant 15 : index
    %c0_45 = arith.constant 0 : index
    %94 = vector.load %arg8[%c15, %c0_45] : memref<112x128xbf16, #tpu.memory_space<vmem>>, vector<72x128xbf16>
    %c3 = arith.constant 3 : index
    %c0_46 = arith.constant 0 : index
    %c0_47 = arith.constant 0 : index
    %95 = vector.load %arg5[%c3, %c0_46, %c0_47] : memref<9x128x128xbf16, #tpu.memory_space<vmem>>, vector<1x128x128xbf16>
    %96 = vector.shape_cast %95 : vector<1x128x128xbf16> to vector<128x128xbf16>
    %cst_48 = arith.constant dense<0.000000e+00> : vector<72x128xf32>
    %97 = tpu.matmul %94, %96, %cst_48 {dimension_numbers = #tpu.dot_dimension_numbers<[1], [0], [0], [1], [0, 0, 1, 1], [], []>} : vector<72x128xbf16>, vector<128x128xbf16>, vector<72x128xf32> -> vector<72x128xf32>
    %98 = arith.addf %93, %97 : vector<72x128xf32>
    %c16_49 = arith.constant 16 : index
    %c0_50 = arith.constant 0 : index
    %99 = vector.load %arg8[%c16_49, %c0_50] : memref<112x128xbf16, #tpu.memory_space<vmem>>, vector<72x128xbf16>
    %c4 = arith.constant 4 : index
    %c0_51 = arith.constant 0 : index
    %c0_52 = arith.constant 0 : index
    %100 = vector.load %arg5[%c4, %c0_51, %c0_52] : memref<9x128x128xbf16, #tpu.memory_space<vmem>>, vector<1x128x128xbf16>
    %101 = vector.shape_cast %100 : vector<1x128x128xbf16> to vector<128x128xbf16>
    %cst_53 = arith.constant dense<0.000000e+00> : vector<72x128xf32>
    %102 = tpu.matmul %99, %101, %cst_53 {dimension_numbers = #tpu.dot_dimension_numbers<[1], [0], [0], [1], [0, 0, 1, 1], [], []>} : vector<72x128xbf16>, vector<128x128xbf16>, vector<72x128xf32> -> vector<72x128xf32>
    %103 = arith.addf %98, %102 : vector<72x128xf32>
    %c17 = arith.constant 17 : index
    %c0_54 = arith.constant 0 : index
    %104 = vector.load %arg8[%c17, %c0_54] : memref<112x128xbf16, #tpu.memory_space<vmem>>, vector<72x128xbf16>
    %c5 = arith.constant 5 : index
    %c0_55 = arith.constant 0 : index
    %c0_56 = arith.constant 0 : index
    %105 = vector.load %arg5[%c5, %c0_55, %c0_56] : memref<9x128x128xbf16, #tpu.memory_space<vmem>>, vector<1x128x128xbf16>
    %106 = vector.shape_cast %105 : vector<1x128x128xbf16> to vector<128x128xbf16>
    %cst_57 = arith.constant dense<0.000000e+00> : vector<72x128xf32>
    %107 = tpu.matmul %104, %106, %cst_57 {dimension_numbers = #tpu.dot_dimension_numbers<[1], [0], [0], [1], [0, 0, 1, 1], [], []>} : vector<72x128xbf16>, vector<128x128xbf16>, vector<72x128xf32> -> vector<72x128xf32>
    %108 = arith.addf %103, %107 : vector<72x128xf32>
    %c24 = arith.constant 24 : index
    %c0_58 = arith.constant 0 : index
    %109 = vector.load %arg8[%c24, %c0_58] : memref<112x128xbf16, #tpu.memory_space<vmem>>, vector<72x128xbf16>
    %c6_59 = arith.constant 6 : index
    %c0_60 = arith.constant 0 : index
    %c0_61 = arith.constant 0 : index
    %110 = vector.load %arg5[%c6_59, %c0_60, %c0_61] : memref<9x128x128xbf16, #tpu.memory_space<vmem>>, vector<1x128x128xbf16>
    %111 = vector.shape_cast %110 : vector<1x128x128xbf16> to vector<128x128xbf16>
    %cst_62 = arith.constant dense<0.000000e+00> : vector<72x128xf32>
    %112 = tpu.matmul %109, %111, %cst_62 {dimension_numbers = #tpu.dot_dimension_numbers<[1], [0], [0], [1], [0, 0, 1, 1], [], []>} : vector<72x128xbf16>, vector<128x128xbf16>, vector<72x128xf32> -> vector<72x128xf32>
    %113 = arith.addf %108, %112 : vector<72x128xf32>
    %c25 = arith.constant 25 : index
    %c0_63 = arith.constant 0 : index
    %114 = vector.load %arg8[%c25, %c0_63] : memref<112x128xbf16, #tpu.memory_space<vmem>>, vector<72x128xbf16>
    %c7_64 = arith.constant 7 : index
    %c0_65 = arith.constant 0 : index
    %c0_66 = arith.constant 0 : index
    %115 = vector.load %arg5[%c7_64, %c0_65, %c0_66] : memref<9x128x128xbf16, #tpu.memory_space<vmem>>, vector<1x128x128xbf16>
    %116 = vector.shape_cast %115 : vector<1x128x128xbf16> to vector<128x128xbf16>
    %cst_67 = arith.constant dense<0.000000e+00> : vector<72x128xf32>
    %117 = tpu.matmul %114, %116, %cst_67 {dimension_numbers = #tpu.dot_dimension_numbers<[1], [0], [0], [1], [0, 0, 1, 1], [], []>} : vector<72x128xbf16>, vector<128x128xbf16>, vector<72x128xf32> -> vector<72x128xf32>
    %118 = arith.addf %113, %117 : vector<72x128xf32>
    %c26 = arith.constant 26 : index
    %c0_68 = arith.constant 0 : index
    %119 = vector.load %arg8[%c26, %c0_68] : memref<112x128xbf16, #tpu.memory_space<vmem>>, vector<72x128xbf16>
    %c8_69 = arith.constant 8 : index
    %c0_70 = arith.constant 0 : index
    %c0_71 = arith.constant 0 : index
    %120 = vector.load %arg5[%c8_69, %c0_70, %c0_71] : memref<9x128x128xbf16, #tpu.memory_space<vmem>>, vector<1x128x128xbf16>
    %121 = vector.shape_cast %120 : vector<1x128x128xbf16> to vector<128x128xbf16>
    %cst_72 = arith.constant dense<0.000000e+00> : vector<72x128xf32>
    %122 = tpu.matmul %119, %121, %cst_72 {dimension_numbers = #tpu.dot_dimension_numbers<[1], [0], [0], [1], [0, 0, 1, 1], [], []>} : vector<72x128xbf16>, vector<128x128xbf16>, vector<72x128xf32> -> vector<72x128xf32>
    %123 = arith.addf %118, %122 : vector<72x128xf32>
    %124 = arith.truncf %123 : vector<72x128xf32> to vector<72x128xbf16>
    %c0_73 = arith.constant 0 : index
    %c0_74 = arith.constant 0 : index
    %c0_75 = arith.constant 0 : index
    %125 = vector.load %arg6[%c0_73, %c0_74, %c0_75] : memref<1x72x128xbf16, #tpu.memory_space<vmem>>, vector<1x72x128xbf16>
    %126 = vector.shape_cast %125 : vector<1x72x128xbf16> to vector<72x128xbf16>
    %127 = vector.shape_cast %124 : vector<72x128xbf16> to vector<1x72x128xbf16>
    tpu.vector_store %arg6[%c0_73, %c0_74, %c0_75], %127 {strides = array<i32>} : memref<1x72x128xbf16, #tpu.memory_space<vmem>>, vector<1x72x128xbf16>,
    %cst_76 = arith.constant 0.000000e+00 : f32
    %128 = vector.shape_cast %75 : vector<72x1xi1> to vector<72x1xi1>
    %129 = vector.broadcast %128 : vector<72x1xi1> to vector<72x128xi1>
    %130 = vector.broadcast %cst_76 : f32 to vector<72x128xf32>
    %131 = arith.select %129, %123, %130 : vector<72x128xi1>, vector<72x128xf32>
    %cst_77 = arith.constant dense<0.000000e+00> : vector<128xf32>
    %132 = vector.multi_reduction <add>, %131, %cst_77 [0] : vector<72x128xf32> to vector<128xf32>
    %133 = vector.shape_cast %132 : vector<128xf32> to vector<1x128xf32>
    %134 = arith.addf %76, %133 : vector<1x128xf32>
    %135 = arith.mulf %131, %131 : vector<72x128xf32>
    %cst_78 = arith.constant dense<0.000000e+00> : vector<128xf32>
    %136 = vector.multi_reduction <add>, %135, %cst_78 [0] : vector<72x128xf32> to vector<128xf32>
    %137 = vector.shape_cast %136 : vector<128xf32> to vector<1x128xf32>
    %138 = arith.addf %77, %137 : vector<1x128xf32>
    %cst_79 = arith.constant 0.000000e+00 : f32
    %139 = vector.broadcast %cst_79 : f32 to vector<6x128xf32>
    %140 = tpu.concatenate %134, %138, %139 in 0 : vector<1x128xf32>, vector<1x128xf32>, vector<6x128xf32> -> vector<8x128xf32>
    %c0_80 = arith.constant 0 : index
    %c0_81 = arith.constant 0 : index
    %c0_82 = arith.constant 0 : index
    %141 = vector.load %arg7[%c0_80, %c0_81, %c0_82] : memref<1x8x128xf32, #tpu.memory_space<vmem>>, vector<1x8x128xf32>
    %142 = vector.shape_cast %141 : vector<1x8x128xf32> to vector<8x128xf32>
    %143 = vector.shape_cast %140 : vector<8x128xf32> to vector<1x8x128xf32>
    tpu.vector_store %arg7[%c0_80, %c0_81, %c0_82], %143 {strides = array<i32>} : memref<1x8x128xf32, #tpu.memory_space<vmem>>, vector<1x8x128xf32>,
    return
  }
  func.func @transform_0(%arg0: i32) -> (i32, i32, i32) {
    %c0_i32 = arith.constant 0 : i32
    %c0_i32_0 = arith.constant 0 : i32
    %c0_i32_1 = arith.constant 0 : i32
    return %arg0, %c0_i32, %c0_i32_0 : i32, i32, i32
  }
  func.func @transform_1(%arg0: i32) -> (i32, i32) {
    %c0_i32 = arith.constant 0 : i32
    %c0_i32_0 = arith.constant 0 : i32
    %c0_i32_1 = arith.constant 0 : i32
    return %c0_i32, %c0_i32_0 : i32, i32
  }
  func.func @transform_2(%arg0: i32) -> (i32, i32) {
    %c0_i32 = arith.constant 0 : i32
    %c0_i32_0 = arith.constant 0 : i32
    %c0_i32_1 = arith.constant 0 : i32
    return %c0_i32, %c0_i32_0 : i32, i32
  }
  func.func @transform_3(%arg0: i32) -> (i32, i32) {
    %c0_i32 = arith.constant 0 : i32
    %c0_i32_0 = arith.constant 0 : i32
    %c0_i32_1 = arith.constant 0 : i32
    return %c0_i32, %c0_i32_0 : i32, i32
  }
  func.func @transform_4(%arg0: i32) -> (i32, i32, i32) {
    %c0_i32 = arith.constant 0 : i32
    %c0_i32_0 = arith.constant 0 : i32
    %c0_i32_1 = arith.constant 0 : i32
    %c0_i32_2 = arith.constant 0 : i32
    return %c0_i32, %c0_i32_0, %c0_i32_1 : i32, i32, i32
  }
  func.func @transform_5(%arg0: i32) -> (i32, i32, i32) {
    %c0_i32 = arith.constant 0 : i32
    %c0_i32_0 = arith.constant 0 : i32
    %c0_i32_1 = arith.constant 0 : i32
    return %arg0, %c0_i32, %c0_i32_0 : i32, i32, i32
  }
  func.func @transform_6(%arg0: i32) -> (i32, i32, i32) {
    %c0_i32 = arith.constant 0 : i32
    %c0_i32_0 = arith.constant 0 : i32
    %c0_i32_1 = arith.constant 0 : i32
    return %arg0, %c0_i32, %c0_i32_0 : i32, i32, i32
  }
}

module attributes {stable_mosaic.version = 11 : i64} {
  func.func @stage3_kernel(%arg0: i32, %arg1: memref<1x72x128xbf16, #tpu.memory_space<vmem>>, %arg2: memref<1x72x128xbf16, #tpu.memory_space<vmem>>, %arg3: memref<8x128xf32, #tpu.memory_space<vmem>>, %arg4: memref<8x128xf32, #tpu.memory_space<vmem>>, %arg5: memref<1x128xf32, #tpu.memory_space<vmem>>, %arg6: memref<1x128xf32, #tpu.memory_space<vmem>>, %arg7: memref<1x128xf32, #tpu.memory_space<vmem>>, %arg8: memref<1x128xf32, #tpu.memory_space<vmem>>, %arg9: memref<1x72x128xbf16, #tpu.memory_space<vmem>>) attributes {dimension_semantics = [#tpu.dimension_semantics<parallel>], iteration_bounds = array<i64: 2>, scalar_prefetch = 0 : i64, scratch_operands = 0 : i64, tpu.core_type = #tpu.core_type<tc>, window_params = [{transform_indices = @transform_0, window_bounds = array<i64: 1, 72, 128>}, {transform_indices = @transform_1, window_bounds = array<i64: 1, 72, 128>}, {pipeline_mode = #tpu.pipeline_mode<synchronous>, transform_indices = @transform_2, window_bounds = array<i64: 8, 128>}, {pipeline_mode = #tpu.pipeline_mode<synchronous>, transform_indices = @transform_3, window_bounds = array<i64: 8, 128>}, {pipeline_mode = #tpu.pipeline_mode<synchronous>, transform_indices = @transform_4, window_bounds = array<i64: 1, 128>}, {pipeline_mode = #tpu.pipeline_mode<synchronous>, transform_indices = @transform_5, window_bounds = array<i64: 1, 128>}, {pipeline_mode = #tpu.pipeline_mode<synchronous>, transform_indices = @transform_6, window_bounds = array<i64: 1, 128>}, {pipeline_mode = #tpu.pipeline_mode<synchronous>, transform_indices = @transform_7, window_bounds = array<i64: 1, 128>}, {transform_indices = @transform_8, window_bounds = array<i64: 1, 72, 128>}]} {
    %c0 = arith.constant 0 : index
    %c0_0 = arith.constant 0 : index
    %0 = vector.load %arg3[%c0, %c0_0] : memref<8x128xf32, #tpu.memory_space<vmem>>, vector<8x128xf32>
    %c0_1 = arith.constant 0 : index
    %c0_2 = arith.constant 0 : index
    %1 = vector.load %arg4[%c0_1, %c0_2] : memref<8x128xf32, #tpu.memory_space<vmem>>, vector<8x128xf32>
    %2 = vector.extract_strided_slice %0 {offsets = [0, 0], sizes = [1, 128], strides = [1, 1]} : vector<8x128xf32> to vector<1x128xf32>
    %cst = arith.constant 7.812500e-03 : f32
    %3 = vector.broadcast %cst : f32 to vector<1x128xf32>
    %4 = arith.mulf %2, %3 : vector<1x128xf32>
    %5 = vector.extract_strided_slice %0 {offsets = [1, 0], sizes = [1, 128], strides = [1, 1]} : vector<8x128xf32> to vector<1x128xf32>
    %cst_3 = arith.constant 7.812500e-03 : f32
    %6 = vector.broadcast %cst_3 : f32 to vector<1x128xf32>
    %7 = arith.mulf %5, %6 : vector<1x128xf32>
    %8 = arith.mulf %4, %4 : vector<1x128xf32>
    %9 = arith.subf %7, %8 : vector<1x128xf32>
    %cst_4 = arith.constant 0.000000e+00 : f32
    %10 = vector.broadcast %cst_4 : f32 to vector<1x128xf32>
    %11 = arith.maximumf %9, %10 : vector<1x128xf32>
    %c0_5 = arith.constant 0 : index
    %c0_6 = arith.constant 0 : index
    %12 = vector.load %arg5[%c0_5, %c0_6] : memref<1x128xf32, #tpu.memory_space<vmem>>, vector<1x128xf32>
    %cst_7 = arith.constant 9.99999974E-6 : f32
    %13 = vector.broadcast %cst_7 : f32 to vector<1x128xf32>
    %14 = arith.addf %11, %13 : vector<1x128xf32>
    %15 = math.rsqrt %14 : vector<1x128xf32>
    %16 = arith.mulf %12, %15 : vector<1x128xf32>
    %c0_8 = arith.constant 0 : index
    %c0_9 = arith.constant 0 : index
    %17 = vector.load %arg6[%c0_8, %c0_9] : memref<1x128xf32, #tpu.memory_space<vmem>>, vector<1x128xf32>
    %18 = arith.mulf %4, %16 : vector<1x128xf32>
    %19 = arith.subf %17, %18 : vector<1x128xf32>
    %20 = vector.extract_strided_slice %1 {offsets = [0, 0], sizes = [1, 128], strides = [1, 1]} : vector<8x128xf32> to vector<1x128xf32>
    %cst_10 = arith.constant 7.812500e-03 : f32
    %21 = vector.broadcast %cst_10 : f32 to vector<1x128xf32>
    %22 = arith.mulf %20, %21 : vector<1x128xf32>
    %23 = vector.extract_strided_slice %1 {offsets = [1, 0], sizes = [1, 128], strides = [1, 1]} : vector<8x128xf32> to vector<1x128xf32>
    %cst_11 = arith.constant 7.812500e-03 : f32
    %24 = vector.broadcast %cst_11 : f32 to vector<1x128xf32>
    %25 = arith.mulf %23, %24 : vector<1x128xf32>
    %26 = arith.mulf %22, %22 : vector<1x128xf32>
    %27 = arith.subf %25, %26 : vector<1x128xf32>
    %cst_12 = arith.constant 0.000000e+00 : f32
    %28 = vector.broadcast %cst_12 : f32 to vector<1x128xf32>
    %29 = arith.maximumf %27, %28 : vector<1x128xf32>
    %c0_13 = arith.constant 0 : index
    %c0_14 = arith.constant 0 : index
    %30 = vector.load %arg7[%c0_13, %c0_14] : memref<1x128xf32, #tpu.memory_space<vmem>>, vector<1x128xf32>
    %cst_15 = arith.constant 9.99999974E-6 : f32
    %31 = vector.broadcast %cst_15 : f32 to vector<1x128xf32>
    %32 = arith.addf %29, %31 : vector<1x128xf32>
    %33 = math.rsqrt %32 : vector<1x128xf32>
    %34 = arith.mulf %30, %33 : vector<1x128xf32>
    %c0_16 = arith.constant 0 : index
    %c0_17 = arith.constant 0 : index
    %35 = vector.load %arg8[%c0_16, %c0_17] : memref<1x128xf32, #tpu.memory_space<vmem>>, vector<1x128xf32>
    %36 = arith.mulf %22, %34 : vector<1x128xf32>
    %37 = arith.subf %35, %36 : vector<1x128xf32>
    %c0_18 = arith.constant 0 : index
    %c0_19 = arith.constant 0 : index
    %c0_20 = arith.constant 0 : index
    %38 = vector.load %arg1[%c0_18, %c0_19, %c0_20] : memref<1x72x128xbf16, #tpu.memory_space<vmem>>, vector<1x72x128xbf16>
    %39 = vector.shape_cast %38 : vector<1x72x128xbf16> to vector<72x128xbf16>
    %40 = arith.extf %39 : vector<72x128xbf16> to vector<72x128xf32>
    %41 = vector.broadcast %16 : vector<1x128xf32> to vector<72x128xf32>
    %42 = arith.mulf %40, %41 : vector<72x128xf32>
    %43 = vector.broadcast %19 : vector<1x128xf32> to vector<72x128xf32>
    %44 = arith.addf %42, %43 : vector<72x128xf32>
    %c0_21 = arith.constant 0 : index
    %c0_22 = arith.constant 0 : index
    %c0_23 = arith.constant 0 : index
    %45 = vector.load %arg2[%c0_21, %c0_22, %c0_23] : memref<1x72x128xbf16, #tpu.memory_space<vmem>>, vector<1x72x128xbf16>
    %46 = vector.shape_cast %45 : vector<1x72x128xbf16> to vector<72x128xbf16>
    %47 = arith.extf %46 : vector<72x128xbf16> to vector<72x128xf32>
    %48 = vector.broadcast %34 : vector<1x128xf32> to vector<72x128xf32>
    %49 = arith.mulf %47, %48 : vector<72x128xf32>
    %50 = vector.broadcast %37 : vector<1x128xf32> to vector<72x128xf32>
    %51 = arith.addf %49, %50 : vector<72x128xf32>
    %52 = arith.addf %44, %51 : vector<72x128xf32>
    %cst_24 = arith.constant 0.000000e+00 : f32
    %53 = vector.broadcast %cst_24 : f32 to vector<72x128xf32>
    %54 = arith.maximumf %52, %53 : vector<72x128xf32>
    %55 = arith.truncf %54 : vector<72x128xf32> to vector<72x128xbf16>
    %c0_25 = arith.constant 0 : index
    %c0_26 = arith.constant 0 : index
    %c0_27 = arith.constant 0 : index
    %56 = vector.load %arg9[%c0_25, %c0_26, %c0_27] : memref<1x72x128xbf16, #tpu.memory_space<vmem>>, vector<1x72x128xbf16>
    %57 = vector.shape_cast %56 : vector<1x72x128xbf16> to vector<72x128xbf16>
    %58 = vector.shape_cast %55 : vector<72x128xbf16> to vector<1x72x128xbf16>
    tpu.vector_store %arg9[%c0_25, %c0_26, %c0_27], %58 {strides = array<i32>} : memref<1x72x128xbf16, #tpu.memory_space<vmem>>, vector<1x72x128xbf16>,
    return
  }
  func.func @transform_0(%arg0: i32) -> (i32, i32, i32) {
    %c0_i32 = arith.constant 0 : i32
    %c0_i32_0 = arith.constant 0 : i32
    %c0_i32_1 = arith.constant 0 : i32
    return %arg0, %c0_i32, %c0_i32_0 : i32, i32, i32
  }
  func.func @transform_1(%arg0: i32) -> (i32, i32, i32) {
    %c0_i32 = arith.constant 0 : i32
    %c0_i32_0 = arith.constant 0 : i32
    %c0_i32_1 = arith.constant 0 : i32
    return %arg0, %c0_i32, %c0_i32_0 : i32, i32, i32
  }
  func.func @transform_2(%arg0: i32) -> (i32, i32) {
    %c0_i32 = arith.constant 0 : i32
    %c0_i32_0 = arith.constant 0 : i32
    %c0_i32_1 = arith.constant 0 : i32
    return %c0_i32, %c0_i32_0 : i32, i32
  }
  func.func @transform_3(%arg0: i32) -> (i32, i32) {
    %c0_i32 = arith.constant 0 : i32
    %c0_i32_0 = arith.constant 0 : i32
    %c0_i32_1 = arith.constant 0 : i32
    return %c0_i32, %c0_i32_0 : i32, i32
  }
  func.func @transform_4(%arg0: i32) -> (i32, i32) {
    %c0_i32 = arith.constant 0 : i32
    %c0_i32_0 = arith.constant 0 : i32
    %c0_i32_1 = arith.constant 0 : i32
    return %c0_i32, %c0_i32_0 : i32, i32
  }
  func.func @transform_5(%arg0: i32) -> (i32, i32) {
    %c0_i32 = arith.constant 0 : i32
    %c0_i32_0 = arith.constant 0 : i32
    %c0_i32_1 = arith.constant 0 : i32
    return %c0_i32, %c0_i32_0 : i32, i32
  }
  func.func @transform_6(%arg0: i32) -> (i32, i32) {
    %c0_i32 = arith.constant 0 : i32
    %c0_i32_0 = arith.constant 0 : i32
    %c0_i32_1 = arith.constant 0 : i32
    return %c0_i32, %c0_i32_0 : i32, i32
  }
  func.func @transform_7(%arg0: i32) -> (i32, i32) {
    %c0_i32 = arith.constant 0 : i32
    %c0_i32_0 = arith.constant 0 : i32
    %c0_i32_1 = arith.constant 0 : i32
    return %c0_i32, %c0_i32_0 : i32, i32
  }
  func.func @transform_8(%arg0: i32) -> (i32, i32, i32) {
    %c0_i32 = arith.constant 0 : i32
    %c0_i32_0 = arith.constant 0 : i32
    %c0_i32_1 = arith.constant 0 : i32
    return %arg0, %c0_i32, %c0_i32_0 : i32, i32, i32
  }
}

</mosaic_0001>

<llo_original>
// kernel: shortcut_resblock_forward.5
$region0: #{shortcut_resblock_forward.5}
  #allocation0 [shape = 'u32[]', space=smem, size = 0x4, offset = 0x4, fixed_abs, tag = 'smem constant byte address 0x4 - core index']
  #allocation1 [shape = 'u32[144,128]{1,0:T(1,128)}', space=vmem, size = 0x12000, scoped, tag = 'internal scratch']
  %s0 = inlined_call_operand.vmem [shape: bf16[2,72,128], index: 0, kind: input, shape index: {}]
  %s1 = inlined_call_operand.vmem [shape: bf16[2,72,128], index: 1, kind: input, shape index: {}]
  %s2 = inlined_call_operand.vmem [shape: f32[8,128], index: 2, kind: input, shape index: {}]
  %s3 = inlined_call_operand.vmem [shape: f32[8,128], index: 3, kind: input, shape index: {}]
  %s4 = inlined_call_operand.vmem [shape: f32[1,128], index: 4, kind: input, shape index: {}]
  %s5 = inlined_call_operand.vmem [shape: f32[1,128], index: 5, kind: input, shape index: {}]
  %s6 = inlined_call_operand.vmem [shape: f32[1,128], index: 6, kind: input, shape index: {}]
  %s7 = inlined_call_operand.vmem [shape: f32[1,128], index: 7, kind: input, shape index: {}]
  %s8 = inlined_call_operand.vmem [shape: bf16[2,72,128], index: 8, kind: output, shape index: {}]
  %s9 = sld [smem:[#allocation0]]
  $region65: #{shortcut_resblock_forward.5} parent=0
    _
  %s11 = ssub.s32 1, %s9
  %s12 = scalar_select 0, %s11, %s9
  loop: start=0, step=1, limit=4
  $region2: #{shortcut_resblock_forward.5} parent=0 // loop_pre_header
    _
  $region3: #{shortcut_resblock_forward.5} parent=0 // loop_header
    %s14 = sphi 0, %s18
    %p15 = scmp.ge.s32.totalorder %s14, 4
    %s24 = sphi 0, %s26
    %s27 = sphi 0, %s24
    %s28 = sphi 0, %s27
    %s44 = sphi 0, %s28
    %s50 = sphi 0, %s52
    %s53 = sphi 0, %s50
    %s54 = sphi 0, %s53
    %s70 = sphi 0, %s54
    %s74 = sphi 0, %s74
    %s76 = sphi 0, %s74
    %s77 = sphi 0, %s76
    %s91 = sphi 0, %s77
    %s95 = sphi 0, %s95
    %s97 = sphi 0, %s95
    %s98 = sphi 0, %s97
    %s112 = sphi 0, %s98
    %s116 = sphi 0, %s116
    %s118 = sphi 0, %s116
    %s119 = sphi 0, %s118
    %s133 = sphi 0, %s119
    %s137 = sphi 0, %s137
    %s139 = sphi 0, %s137
    %s140 = sphi 0, %s139
    %s154 = sphi 0, %s140
    %s158 = sphi 0, %s158
    %s160 = sphi 0, %s158
    %s161 = sphi 0, %s160
    %s175 = sphi 0, %s161
    %s179 = sphi 0, %s179
    %s181 = sphi 0, %s179
    %s182 = sphi 0, %s181
    %s196 = sphi 0, %s182
    %s202 = sphi 0, %s204
    %s205 = sphi 0, %s202
    %s206 = sphi 0, %s205
    %s222 = sphi 0, %s206
  $region4: #{shortcut_resblock_forward.5} parent=0 // loop_header_branch
    %17 = sbr.rel (%p15) target = $region8
  $region5: #{shortcut_resblock_forward.5} parent=0 // loop_body
    %s19 = ssub.s32 %s14, 1
    %s20 = ssub.s32 %s14, 2
    %s21 = sadd.s32 %s14, 1
    %s22 = ssub.s32 %s14, %s21
    %p23 = scmp.eq.s32.totalorder %s22, 0
    %s25 = sadd.s32 %s24, 1
    %s26 = scalar_select %p23, %s24, %s25
    %p29 = pneg %p23
    %p30 = scmp.eq.s32.totalorder %s14, 1
    %p31 = por %p29, %p30
    %p32 = scmp.ne.s32.totalorder %s24, %s27
    %p33 = scmp.eq.s32.totalorder %s14, 0
    %p34 = por %p32, %p33
    %p35 = scmp.ne.s32.totalorder %s24, %s27
    %p36 = scmp.eq.s32.totalorder %s19, 1
    %p37 = por %p35, %p36
    %p38 = scmp.ne.s32.totalorder %s27, %s28
    %p39 = scmp.eq.s32.totalorder %s19, 0
    %p40 = por %p38, %p39
    %p41 = scmp.ne.s32.totalorder %s27, %s28
    %p42 = scmp.eq.s32.totalorder %s20, 1
    %p43 = por %p41, %p42
    %p45 = scmp.ne.s32.totalorder %s28, %s44
    %p46 = scmp.eq.s32.totalorder %s20, 0
    %p47 = por %p45, %p46
    %s48 = ssub.s32 %s14, %s21
    %p49 = scmp.eq.s32.totalorder %s48, 0
    %s51 = sadd.s32 %s50, 1
    %s52 = scalar_select %p49, %s50, %s51
    %p55 = pneg %p49
    %p56 = scmp.eq.s32.totalorder %s14, 1
    %p57 = por %p55, %p56
    %p58 = scmp.ne.s32.totalorder %s50, %s53
    %p59 = scmp.eq.s32.totalorder %s14, 0
    %p60 = por %p58, %p59
    %p61 = scmp.ne.s32.totalorder %s50, %s53
    %p62 = scmp.eq.s32.totalorder %s19, 1
    %p63 = por %p61, %p62
    %p64 = scmp.ne.s32.totalorder %s53, %s54
    %p65 = scmp.eq.s32.totalorder %s19, 0
    %p66 = por %p64, %p65
    %p67 = scmp.ne.s32.totalorder %s53, %s54
    %p68 = scmp.eq.s32.totalorder %s20, 1
    %p69 = por %p67, %p68
    %p71 = scmp.ne.s32.totalorder %s54, %s70
    %p72 = scmp.eq.s32.totalorder %s20, 0
    %p73 = por %p71, %p72
    %s75 = sadd.s32 %s74, 1
    %p78 = scmp.eq.s32.totalorder %s14, 1
    %p79 = scmp.ne.s32.totalorder %s74, %s76
    %p80 = scmp.eq.s32.totalorder %s14, 0
    %p81 = por %p79, %p80
    %p82 = scmp.ne.s32.totalorder %s74, %s76
    %p83 = scmp.eq.s32.totalorder %s19, 1
    %p84 = por %p82, %p83
    %p85 = scmp.ne.s32.totalorder %s76, %s77
    %p86 = scmp.eq.s32.totalorder %s19, 0
    %p87 = por %p85, %p86
    %p88 = scmp.ne.s32.totalorder %s76, %s77
    %p89 = scmp.eq.s32.totalorder %s20, 1
    %p90 = por %p88, %p89
    %p92 = scmp.ne.s32.totalorder %s77, %s91
    %p93 = scmp.eq.s32.totalorder %s20, 0
    %p94 = por %p92, %p93
    %s96 = sadd.s32 %s95, 1
    %p99 = scmp.eq.s32.totalorder %s14, 1
    %p100 = scmp.ne.s32.totalorder %s95, %s97
    %p101 = scmp.eq.s32.totalorder %s14, 0
    %p102 = por %p100, %p101
    %p103 = scmp.ne.s32.totalorder %s95, %s97
    %p104 = scmp.eq.s32.totalorder %s19, 1
    %p105 = por %p103, %p104
    %p106 = scmp.ne.s32.totalorder %s97, %s98
    %p107 = scmp.eq.s32.totalorder %s19, 0
    %p108 = por %p106, %p107
    %p109 = scmp.ne.s32.totalorder %s97, %s98
    %p110 = scmp.eq.s32.totalorder %s20, 1
    %p111 = por %p109, %p110
    %p113 = scmp.ne.s32.totalorder %s98, %s112
    %p114 = scmp.eq.s32.totalorder %s20, 0
    %p115 = por %p113, %p114
    %s117 = sadd.s32 %s116, 1
    %p120 = scmp.eq.s32.totalorder %s14, 1
    %p121 = scmp.ne.s32.totalorder %s116, %s118
    %p122 = scmp.eq.s32.totalorder %s14, 0
    %p123 = por %p121, %p122
    %p124 = scmp.ne.s32.totalorder %s116, %s118
    %p125 = scmp.eq.s32.totalorder %s19, 1
    %p126 = por %p124, %p125
    %p127 = scmp.ne.s32.totalorder %s118, %s119
    %p128 = scmp.eq.s32.totalorder %s19, 0
    %p129 = por %p127, %p128
    %p130 = scmp.ne.s32.totalorder %s118, %s119
    %p131 = scmp.eq.s32.totalorder %s20, 1
    %p132 = por %p130, %p131
    %p134 = scmp.ne.s32.totalorder %s119, %s133
    %p135 = scmp.eq.s32.totalorder %s20, 0
    %p136 = por %p134, %p135
    %s138 = sadd.s32 %s137, 1
    %p141 = scmp.eq.s32.totalorder %s14, 1
    %p142 = scmp.ne.s32.totalorder %s137, %s139
    %p143 = scmp.eq.s32.totalorder %s14, 0
    %p144 = por %p142, %p143
    %p145 = scmp.ne.s32.totalorder %s137, %s139
    %p146 = scmp.eq.s32.totalorder %s19, 1
    %p147 = por %p145, %p146
    %p148 = scmp.ne.s32.totalorder %s139, %s140
    %p149 = scmp.eq.s32.totalorder %s19, 0
    %p150 = por %p148, %p149
    %p151 = scmp.ne.s32.totalorder %s139, %s140
    %p152 = scmp.eq.s32.totalorder %s20, 1
    %p153 = por %p151, %p152
    %p155 = scmp.ne.s32.totalorder %s140, %s154
    %p156 = scmp.eq.s32.totalorder %s20, 0
    %p157 = por %p155, %p156
    %s159 = sadd.s32 %s158, 1
    %p162 = scmp.eq.s32.totalorder %s14, 1
    %p163 = scmp.ne.s32.totalorder %s158, %s160
    %p164 = scmp.eq.s32.totalorder %s14, 0
    %p165 = por %p163, %p164
    %p166 = scmp.ne.s32.totalorder %s158, %s160
    %p167 = scmp.eq.s32.totalorder %s19, 1
    %p168 = por %p166, %p167
    %p169 = scmp.ne.s32.totalorder %s160, %s161
    %p170 = scmp.eq.s32.totalorder %s19, 0
    %p171 = por %p169, %p170
    %p172 = scmp.ne.s32.totalorder %s160, %s161
    %p173 = scmp.eq.s32.totalorder %s20, 1
    %p174 = por %p172, %p173
    %p176 = scmp.ne.s32.totalorder %s161, %s175
    %p177 = scmp.eq.s32.totalorder %s20, 0
    %p178 = por %p176, %p177
    %s180 = sadd.s32 %s179, 1
    %p183 = scmp.eq.s32.totalorder %s14, 1
    %p184 = scmp.ne.s32.totalorder %s179, %s181
    %p185 = scmp.eq.s32.totalorder %s14, 0
    %p186 = por %p184, %p185
    %p187 = scmp.ne.s32.totalorder %s179, %s181
    %p188 = scmp.eq.s32.totalorder %s19, 1
    %p189 = por %p187, %p188
    %p190 = scmp.ne.s32.totalorder %s181, %s182
    %p191 = scmp.eq.s32.totalorder %s19, 0
    %p192 = por %p190, %p191
    %p193 = scmp.ne.s32.totalorder %s181, %s182
    %p194 = scmp.eq.s32.totalorder %s20, 1
    %p195 = por %p193, %p194
    %p197 = scmp.ne.s32.totalorder %s182, %s196
    %p198 = scmp.eq.s32.totalorder %s20, 0
    %p199 = por %p197, %p198
    %s200 = ssub.s32 %s14, %s21
    %p201 = scmp.eq.s32.totalorder %s200, 0
    %s203 = sadd.s32 %s202, 1
    %s204 = scalar_select %p201, %s202, %s203
    %p207 = pneg %p201
    %p208 = scmp.eq.s32.totalorder %s14, 1
    %p209 = por %p207, %p208
    %p210 = scmp.ne.s32.totalorder %s202, %s205
    %p211 = scmp.eq.s32.totalorder %s14, 0
    %p212 = por %p210, %p211
    %p213 = scmp.ne.s32.totalorder %s202, %s205
    %p214 = scmp.eq.s32.totalorder %s19, 1
    %p215 = por %p213, %p214
    %p216 = scmp.ne.s32.totalorder %s205, %s206
    %p217 = scmp.eq.s32.totalorder %s19, 0
    %p218 = por %p216, %p217
    %p219 = scmp.ne.s32.totalorder %s205, %s206
    %p220 = scmp.eq.s32.totalorder %s20, 1
    %p221 = por %p219, %p220
    %p223 = scmp.ne.s32.totalorder %s206, %s222
    %p224 = scmp.eq.s32.totalorder %s20, 0
    %p225 = por %p223, %p224
    %p226 = scmp.le.s32.totalorder 1, %s14
    %p227 = scmp.lt.s32.totalorder %s14, 3
    %p228 = pnand %p226, %p227
    %p229 = pneg %p228
    // Predicated region
    $region9: #{shortcut_resblock_forward.5} parent=5 // pred_check
      _
    $region10: #{shortcut_resblock_forward.5} parent=5 // pred_check_branch
      %231 = sbr.rel (%p228) target = $region12
    $region11: #{shortcut_resblock_forward.5} parent=5 // pred_region
      %s232 = ssub.s32 %s14, 1
      // Predicated region
      $region13: #{shortcut_resblock_forward.5} parent=11 // pred_check
        %p233 = pneg %p87
      $region14: #{shortcut_resblock_forward.5} parent=11 // pred_check_branch
        %235 = sbr.rel (%p233) target = $region16
      $region15: #{shortcut_resblock_forward.5} parent=11 // pred_region
        _
      $region16: #{shortcut_resblock_forward.5} parent=11 // pred_fallthru
        _
      // Predicated region
      $region17: #{shortcut_resblock_forward.5} parent=11 // pred_check
        %p236 = pneg %p108
      $region18: #{shortcut_resblock_forward.5} parent=11 // pred_check_branch
        %238 = sbr.rel (%p236) target = $region20
      $region19: #{shortcut_resblock_forward.5} parent=11 // pred_region
        _
      $region20: #{shortcut_resblock_forward.5} parent=11 // pred_fallthru
        _
      // Predicated region
      $region21: #{shortcut_resblock_forward.5} parent=11 // pred_check
        %p239 = pneg %p129
      $region22: #{shortcut_resblock_forward.5} parent=11 // pred_check_branch
        %241 = sbr.rel (%p239) target = $region24
      $region23: #{shortcut_resblock_forward.5} parent=11 // pred_region
        _
      $region24: #{shortcut_resblock_forward.5} parent=11 // pred_fallthru
        _
      // Predicated region
      $region25: #{shortcut_resblock_forward.5} parent=11 // pred_check
        %p242 = pneg %p150
      $region26: #{shortcut_resblock_forward.5} parent=11 // pred_check_branch
        %244 = sbr.rel (%p242) target = $region28
      $region27: #{shortcut_resblock_forward.5} parent=11 // pred_region
        _
      $region28: #{shortcut_resblock_forward.5} parent=11 // pred_fallthru
        _
      // Predicated region
      $region29: #{shortcut_resblock_forward.5} parent=11 // pred_check
        %p245 = pneg %p171
      $region30: #{shortcut_resblock_forward.5} parent=11 // pred_check_branch
        %247 = sbr.rel (%p245) target = $region32
      $region31: #{shortcut_resblock_forward.5} parent=11 // pred_region
        _
      $region32: #{shortcut_resblock_forward.5} parent=11 // pred_fallthru
        _
      // Predicated region
      $region33: #{shortcut_resblock_forward.5} parent=11 // pred_check
        %p248 = pneg %p192
      $region34: #{shortcut_resblock_forward.5} parent=11 // pred_check_branch
        %250 = sbr.rel (%p248) target = $region36
      $region35: #{shortcut_resblock_forward.5} parent=11 // pred_region
        _
      $region36: #{shortcut_resblock_forward.5} parent=11 // pred_fallthru
        _
    $region12: #{shortcut_resblock_forward.5} parent=5 // pred_fallthru
      _
    %p251 = scmp.lt.s32.totalorder %s14, 2
    // Predicated region
    $region37: #{shortcut_resblock_forward.5} parent=5 // pred_check
      %p252 = pneg %p251
    $region38: #{shortcut_resblock_forward.5} parent=5 // pred_check_branch
      %254 = sbr.rel (%p252) target = $region40
    $region39: #{shortcut_resblock_forward.5} parent=5 // pred_region
      // Predicated region
      $region41: #{shortcut_resblock_forward.5} parent=39 // pred_check
        %p255 = pneg %p34
      $region42: #{shortcut_resblock_forward.5} parent=39 // pred_check_branch
        %257 = sbr.rel (%p255) target = $region44
      $region43: #{shortcut_resblock_forward.5} parent=39 // pred_region
        %p258 = scmp.lt.s32.totalorder %s14, 1
        %s259 = scalar_select %p258, %s14, 1
        %s260 = smul.addr %s259, 9
        %s261 = smul.addr %s260, 4
        %s262 = scalar_lea.vmem %s0, %s261
      $region44: #{shortcut_resblock_forward.5} parent=39 // pred_fallthru
        _
      // Predicated region
      $region45: #{shortcut_resblock_forward.5} parent=39 // pred_check
        %p263 = pneg %p60
      $region46: #{shortcut_resblock_forward.5} parent=39 // pred_check_branch
        %265 = sbr.rel (%p263) target = $region48
      $region47: #{shortcut_resblock_forward.5} parent=39 // pred_region
        %p266 = scmp.lt.s32.totalorder %s14, 1
        %s267 = scalar_select %p266, %s14, 1
        %s268 = smul.addr %s267, 9
        %s269 = smul.addr %s268, 4
        %s270 = scalar_lea.vmem %s1, %s269
      $region48: #{shortcut_resblock_forward.5} parent=39 // pred_fallthru
        _
    $region40: #{shortcut_resblock_forward.5} parent=5 // pred_fallthru
      _
    %p271 = scmp.le.s32.totalorder 1, %s14
    %p272 = scmp.lt.s32.totalorder %s14, 3
    %p273 = pnand %p271, %p272
    %p274 = pneg %p273
    // Predicated region
    $region49: #{shortcut_resblock_forward.5} parent=5 // pred_check
      _
    $region50: #{shortcut_resblock_forward.5} parent=5 // pred_check_branch
      %276 = sbr.rel (%p273) target = $region52
    $region51: #{shortcut_resblock_forward.5} parent=5 // pred_region
      %s277 = ssub.s32 %s14, 1
      %p278 = scmp.lt.s32.totalorder %s19, 1
      %s279 = scalar_select %p278, %s19, 1
      %s280 = smul.addr %s279, 9
      %s281 = smul.addr %s280, 4
      %s282 = scalar_lea.vmem %s0, %s281
      %p283 = pneg %p40
      %p284 = pneg %p37
      %p285 = scmp.lt.s32.totalorder %s19, 1
      %s286 = scalar_select %p285, %s19, 1
      %s287 = smul.addr %s286, 9
      %s288 = smul.addr %s287, 4
      %s289 = scalar_lea.vmem %s1, %s288
      %p290 = pneg %p66
      %p291 = pneg %p63
      %p292 = pneg %p87
      %p293 = pneg %p84
      %p294 = pneg %p108
      %p295 = pneg %p105
      %p296 = pneg %p129
      %p297 = pneg %p126
      %p298 = pneg %p150
      %p299 = pneg %p147
      %p300 = pneg %p171
      %p301 = pneg %p168
      %p302 = pneg %p192
      %p303 = pneg %p189
      %p304 = pneg %p218
      %p305 = pneg %p215
      %p306 = scmp.lt.s32.totalorder %s19, 1
      %s307 = scalar_select %p306, %s19, 1
      %s308 = smul.addr %s307, 9
      %s309 = smul.addr %s308, 4
      %s310 = scalar_lea.vmem %s8, %s309
      %p311 = scmp.lt.s32.totalorder %s19, 1
      %s312 = scalar_select %p311, %s19, 1
      %s313 = smul.addr %s312, 9
      %s314 = smul.addr %s313, 4
      %s315 = scalar_lea.vmem %s0, %s314
      %p316 = scmp.lt.s32.totalorder %s19, 1
      %s317 = scalar_select %p316, %s19, 1
      %s318 = smul.addr %s317, 9
      %s319 = smul.addr %s318, 4
      %s320 = scalar_lea.vmem %s1, %s319
      %p321 = scmp.lt.s32.totalorder %s19, 1
      %s322 = scalar_select %p321, %s19, 1
      %s323 = smul.addr %s322, 9
      %s324 = smul.addr %s323, 4
      %s325 = scalar_lea.vmem %s8, %s324
      %v326 = vld [vmem:[%s2] sm:$0xff]
      %v327 = vld [vmem:[%s3] sm:$0xff]
      %v328 = vmul.f32 %v326, 0.0078125
      %v329 = vmul.f32 %v328, %v328
      %v331 = vrot.slane %v329, 7
      %v333 = vsub.f32 %v328, %v331
      %v334 = vmax.f32 %v333, 0.0
      %v335 = vld [vmem:[%s4] sm:$0x1]
      %v336 = vadd.f32 %v334, 1e-05
      %v337 = vrsqrt.pop %v336
      %v340 = vunpack.c.l.s4 1966171168
      %v341 = vunpack.c.0.s8 %v340
      %v342 = vlaneseq
      %v343 = vshrl.u32 %v342, 7
      %v344 = vsub.s32 %v341, %v343
      %v345 = vrot.slane %v337, %v344
      %v346 = vcombine.high %v345, %v345
      %v348 = vunpack.c.l.s4 1966171168
      %v349 = vunpack.c.0.s8 %v348
      %v350 = vlaneseq
      %v351 = vshrl.u32 %v350, 7
      %v352 = vsub.s32 %v349, %v351
      %v353 = vrot.slane %v346, %v352
      %v355 = vmul.f32 %v335, %v353
      %v356 = vld [vmem:[%s5] sm:$0x1]
      %v357 = vmul.f32 %v328, %v355
      %v358 = vsub.f32 %v356, %v357
      %v359 = vmul.f32 %v327, 0.0078125
      %v360 = vmul.f32 %v359, %v359
      %v362 = vrot.slane %v360, 7
      %v364 = vsub.f32 %v359, %v362
      %v365 = vmax.f32 %v364, 0.0
      %v366 = vld [vmem:[%s6] sm:$0x1]
      %v367 = vadd.f32 %v365, 1e-05
      %v368 = vrsqrt.pop %v367
      %v371 = vunpack.c.l.s4 1966171168
      %v372 = vunpack.c.0.s8 %v371
      %v373 = vlaneseq
      %v374 = vshrl.u32 %v373, 7
      %v375 = vsub.s32 %v372, %v374
      %v376 = vrot.slane %v368, %v375
      %v377 = vcombine.high %v376, %v376
      %v379 = vunpack.c.l.s4 1966171168
      %v380 = vunpack.c.0.s8 %v379
      %v381 = vlaneseq
      %v382 = vshrl.u32 %v381, 7
      %v383 = vsub.s32 %v380, %v382
      %v384 = vrot.slane %v377, %v383
      %v386 = vmul.f32 %v366, %v384
      %v387 = vld [vmem:[%s7] sm:$0x1]
      %v388 = vmul.f32 %v359, %v386
      %v389 = vsub.f32 %v387, %v388
      %v390 = vld [vmem:[%s315] sm:$0xf]
      %v391 = vld [vmem:[%s315 + $0x4] sm:$0xf]
      %v392 = vld [vmem:[%s315 + $0x8] sm:$0xf]
      %v393 = vld [vmem:[%s315 + $0xc] sm:$0xf]
      %v394 = vld [vmem:[%s315 + $0x10] sm:$0xf]
      %v395 = vld [vmem:[%s315 + $0x14] sm:$0xf]
      %v396 = vld [vmem:[%s315 + $0x18] sm:$0xf]
      %v397 = vld [vmem:[%s315 + $0x1c] sm:$0xf]
      %v398 = vld [vmem:[%s315 + $0x20] sm:$0xf]
      %v399 = vunpack.c.l.bf16 %v390
      %v400 = vunpack.c.l.bf16 %v391
      %v401 = vunpack.c.l.bf16 %v392
      %v402 = vunpack.c.l.bf16 %v393
      %v403 = vunpack.c.l.bf16 %v394
      %v404 = vunpack.c.l.bf16 %v395
      %v405 = vunpack.c.l.bf16 %v396
      %v406 = vunpack.c.l.bf16 %v397
      %v407 = vunpack.c.l.bf16 %v398
      %v409 = vlaneseq
      %v410 = vshrl.u32 %v409, 7
      %v411 = vsub.s32 0, %v410
      %v412 = vrot.slane %v355, %v411
      %v414 = vmul.f32 %v399, %v412
      %v415 = vmul.f32 %v400, %v412
      %v416 = vmul.f32 %v401, %v412
      %v417 = vmul.f32 %v402, %v412
      %v418 = vmul.f32 %v403, %v412
      %v419 = vmul.f32 %v404, %v412
      %v420 = vmul.f32 %v405, %v412
      %v421 = vmul.f32 %v406, %v412
      %v422 = vmul.f32 %v407, %v412
      %v424 = vlaneseq
      %v425 = vshrl.u32 %v424, 7
      %v426 = vsub.s32 0, %v425
      %v427 = vrot.slane %v358, %v426
      %v429 = vadd.f32 %v414, %v427
      %v430 = vadd.f32 %v415, %v427
      %v431 = vadd.f32 %v416, %v427
      %v432 = vadd.f32 %v417, %v427
      %v433 = vadd.f32 %v418, %v427
      %v434 = vadd.f32 %v419, %v427
      %v435 = vadd.f32 %v420, %v427
      %v436 = vadd.f32 %v421, %v427
      %v437 = vadd.f32 %v422, %v427
      %v438 = vld [vmem:[%s320] sm:$0xf]
      %v439 = vld [vmem:[%s320 + $0x4] sm:$0xf]
      %v440 = vld [vmem:[%s320 + $0x8] sm:$0xf]
      %v441 = vld [vmem:[%s320 + $0xc] sm:$0xf]
      %v442 = vld [vmem:[%s320 + $0x10] sm:$0xf]
      %v443 = vld [vmem:[%s320 + $0x14] sm:$0xf]
      %v444 = vld [vmem:[%s320 + $0x18] sm:$0xf]
      %v445 = vld [vmem:[%s320 + $0x1c] sm:$0xf]
      %v446 = vld [vmem:[%s320 + $0x20] sm:$0xf]
      %v447 = vunpack.c.l.bf16 %v438
      %v448 = vunpack.c.l.bf16 %v439
      %v449 = vunpack.c.l.bf16 %v440
      %v450 = vunpack.c.l.bf16 %v441
      %v451 = vunpack.c.l.bf16 %v442
      %v452 = vunpack.c.l.bf16 %v443
      %v453 = vunpack.c.l.bf16 %v444
      %v454 = vunpack.c.l.bf16 %v445
      %v455 = vunpack.c.l.bf16 %v446
      %v457 = vlaneseq
      %v458 = vshrl.u32 %v457, 7
      %v459 = vsub.s32 0, %v458
      %v460 = vrot.slane %v386, %v459
      %v462 = vmul.f32 %v447, %v460
      %v463 = vmul.f32 %v448, %v460
      %v464 = vmul.f32 %v449, %v460
      %v465 = vmul.f32 %v450, %v460
      %v466 = vmul.f32 %v451, %v460
      %v467 = vmul.f32 %v452, %v460
      %v468 = vmul.f32 %v453, %v460
      %v469 = vmul.f32 %v454, %v460
      %v470 = vmul.f32 %v455, %v460
      %v472 = vlaneseq
      %v473 = vshrl.u32 %v472, 7
      %v474 = vsub.s32 0, %v473
      %v475 = vrot.slane %v389, %v474
      %v477 = vadd.f32 %v462, %v475
      %v478 = vadd.f32 %v463, %v475
      %v479 = vadd.f32 %v464, %v475
      %v480 = vadd.f32 %v465, %v475
      %v481 = vadd.f32 %v466, %v475
      %v482 = vadd.f32 %v467, %v475
      %v483 = vadd.f32 %v468, %v475
      %v484 = vadd.f32 %v469, %v475
      %v485 = vadd.f32 %v470, %v475
      %v486 = vadd.f32 %v429, %v477
      %v487 = vadd.f32 %v430, %v478
      %v488 = vadd.f32 %v431, %v479
      %v489 = vadd.f32 %v432, %v480
      %v490 = vadd.f32 %v433, %v481
      %v491 = vadd.f32 %v434, %v482
      %v492 = vadd.f32 %v435, %v483
      %v493 = vadd.f32 %v436, %v484
      %v494 = vadd.f32 %v437, %v485
      %v495 = vmax.f32 %v486, 0.0
      %v496 = vmax.f32 %v487, 0.0
      %v497 = vmax.f32 %v488, 0.0
      %v498 = vmax.f32 %v489, 0.0
      %v499 = vmax.f32 %v490, 0.0
      %v500 = vmax.f32 %v491, 0.0
      %v501 = vmax.f32 %v492, 0.0
      %v502 = vmax.f32 %v493, 0.0
      %v503 = vmax.f32 %v494, 0.0
      %v504 = vpack.c.bf16 %v496, %v495
      %v505 = vpack.c.bf16 %v498, %v497
      %v506 = vpack.c.bf16 %v500, %v499
      %v507 = vpack.c.bf16 %v502, %v501
      %v508 = vpack.c.bf16 %v503, %v503
      %v514 = vunpack.c.l.b16 %v504
      %v515 = vunpack.c.h.b16 %v504
      %v516 = vunpack.c.l.b16 %v505
      %v517 = vunpack.c.h.b16 %v505
      %v518 = vunpack.c.l.b16 %v506
      %v519 = vunpack.c.h.b16 %v506
      %v520 = vunpack.c.l.b16 %v507
      %v521 = vunpack.c.h.b16 %v507
      %v522 = vunpack.c.l.b16 %v508
      %v523 = vpack.c.b16 %v514, %v514
      %v524 = vpack.c.b16 %v515, %v515
      %v525 = vpack.c.b16 %v516, %v516
      %v526 = vpack.c.b16 %v517, %v517
      %v527 = vpack.c.b16 %v518, %v518
      %v528 = vpack.c.b16 %v519, %v519
      %v529 = vpack.c.b16 %v520, %v520
      %v530 = vpack.c.b16 %v521, %v521
      %v531 = vpack.c.b16 %v522, %v522
      %541 = vst [vmem:[%s325] sm:$0xf] %v523
      %542 = vst [vmem:[%s325 + $0x4] sm:$0xf] %v524
      %543 = vst [vmem:[%s325 + $0x8] sm:$0xf] %v525
      %544 = vst [vmem:[%s325 + $0xc] sm:$0xf] %v526
      %545 = vst [vmem:[%s325 + $0x10] sm:$0xf] %v527
      %546 = vst [vmem:[%s325 + $0x14] sm:$0xf] %v528
      %547 = vst [vmem:[%s325 + $0x18] sm:$0xf] %v529
      %548 = vst [vmem:[%s325 + $0x1c] sm:$0xf] %v530
      %549 = vst [vmem:[%s325 + $0x20] sm:$0xf] %v531
      %p550 = scmp.lt.s32.totalorder %s19, 1
      %s551 = scalar_select %p550, %s19, 1
      %s552 = smul.addr %s551, 9
      %s553 = smul.addr %s552, 4
      %s554 = scalar_lea.vmem %s8, %s553
      // Predicated region
      $region53: #{shortcut_resblock_forward.5} parent=51 // pred_check
        %p555 = pneg %p215
      $region54: #{shortcut_resblock_forward.5} parent=51 // pred_check_branch
        %557 = sbr.rel (%p555) target = $region56
      $region55: #{shortcut_resblock_forward.5} parent=51 // pred_region
        _
      $region56: #{shortcut_resblock_forward.5} parent=51 // pred_fallthru
        _
    $region52: #{shortcut_resblock_forward.5} parent=5 // pred_fallthru
      _
    %p558 = scmp.le.s32.totalorder 2, %s14
    // Predicated region
    $region57: #{shortcut_resblock_forward.5} parent=5 // pred_check
      %p559 = pneg %p558
    $region58: #{shortcut_resblock_forward.5} parent=5 // pred_check_branch
      %561 = sbr.rel (%p559) target = $region60
    $region59: #{shortcut_resblock_forward.5} parent=5 // pred_region
      %s562 = ssub.s32 %s14, 2
      // Predicated region
      $region61: #{shortcut_resblock_forward.5} parent=59 // pred_check
        %p563 = pneg %p221
      $region62: #{shortcut_resblock_forward.5} parent=59 // pred_check_branch
        %565 = sbr.rel (%p563) target = $region64
      $region63: #{shortcut_resblock_forward.5} parent=59 // pred_region
        %p566 = scmp.lt.s32.totalorder %s20, 1
        %s567 = scalar_select %p566, %s20, 1
        %s568 = smul.addr %s567, 9
        %s569 = smul.addr %s568, 4
        %s570 = scalar_lea.vmem %s8, %s569
      $region64: #{shortcut_resblock_forward.5} parent=59 // pred_fallthru
        _
    $region60: #{shortcut_resblock_forward.5} parent=5 // pred_fallthru
      _
  $region6: #{shortcut_resblock_forward.5} parent=0 // loop_footer
    %s18 = sadd.s32 1, %s14
  $region7: #{shortcut_resblock_forward.5} parent=0 // loop_footer_branch
    %13 = sbr.rel target = $region3
  $region8: #{shortcut_resblock_forward.5} parent=0 // loop_exit
    _

// kernel: shortcut_resblock_forward.4
$region0: #{shortcut_resblock_forward.4}
  #allocation0 [shape = 'u32[]', space=smem, size = 0x4, offset = 0x4, fixed_abs, tag = 'smem constant byte address 0x4 - core index']
  #allocation1 [shape = 'u32[144,128]{1,0:T(1,128)}', space=vmem, size = 0x12000, scoped, tag = 'internal scratch']
  #allocation2 [shape = 'bf16[112,128]{1,0:T(16,128)(2,1)}', space=vmem, size = 0x7000, scoped, tag = 'scratch operand']
  %s0 = inlined_call_operand.vmem [shape: bf16[2,72,128], index: 0, kind: input, shape index: {}]
  %s1 = inlined_call_operand.vmem [shape: f32[8,128], index: 1, kind: input, shape index: {}]
  %s2 = inlined_call_operand.vmem [shape: f32[1,128], index: 2, kind: input, shape index: {}]
  %s3 = inlined_call_operand.vmem [shape: f32[1,128], index: 3, kind: input, shape index: {}]
  %s4 = inlined_call_operand.vmem [shape: bf16[9,128,128], index: 4, kind: input, shape index: {}]
  %s5 = inlined_call_operand.vmem [shape: bf16[2,72,128], index: 5, kind: output, shape index: {0}]
  %s6 = inlined_call_operand.vmem [shape: f32[2,8,128], index: 6, kind: output, shape index: {1}]
  %7 = xla_tuple %s5, %s6
  %s8 = sld [smem:[#allocation0]]
  $region61: #{shortcut_resblock_forward.4} parent=0
    _
  %s10 = ssub.s32 1, %s8
  %s11 = scalar_select 0, %s10, %s8
  loop: start=0, step=1, limit=4
  $region2: #{shortcut_resblock_forward.4} parent=0 // loop_pre_header
    _
  $region3: #{shortcut_resblock_forward.4} parent=0 // loop_header
    %s13 = sphi 0, %s17
    %p14 = scmp.ge.s32.totalorder %s13, 4
    %s23 = sphi 0, %s25
    %s26 = sphi 0, %s23
    %s27 = sphi 0, %s26
    %s43 = sphi 0, %s27
    %s47 = sphi 0, %s47
    %s49 = sphi 0, %s47
    %s50 = sphi 0, %s49
    %s64 = sphi 0, %s50
    %s68 = sphi 0, %s68
    %s70 = sphi 0, %s68
    %s71 = sphi 0, %s70
    %s85 = sphi 0, %s71
    %s89 = sphi 0, %s89
    %s91 = sphi 0, %s89
    %s92 = sphi 0, %s91
    %s106 = sphi 0, %s92
    %s110 = sphi 0, %s110
    %s112 = sphi 0, %s110
    %s113 = sphi 0, %s112
    %s127 = sphi 0, %s113
    %s133 = sphi 0, %s135
    %s136 = sphi 0, %s133
    %s137 = sphi 0, %s136
    %s153 = sphi 0, %s137
    %s159 = sphi 0, %s161
    %s162 = sphi 0, %s159
    %s163 = sphi 0, %s162
    %s179 = sphi 0, %s163
  $region4: #{shortcut_resblock_forward.4} parent=0 // loop_header_branch
    %16 = sbr.rel (%p14) target = $region8
  $region5: #{shortcut_resblock_forward.4} parent=0 // loop_body
    %s18 = ssub.s32 %s13, 1
    %s19 = ssub.s32 %s13, 2
    %s20 = sadd.s32 %s13, 1
    %s21 = ssub.s32 %s13, %s20
    %p22 = scmp.eq.s32.totalorder %s21, 0
    %s24 = sadd.s32 %s23, 1
    %s25 = scalar_select %p22, %s23, %s24
    %p28 = pneg %p22
    %p29 = scmp.eq.s32.totalorder %s13, 1
    %p30 = por %p28, %p29
    %p31 = scmp.ne.s32.totalorder %s23, %s26
    %p32 = scmp.eq.s32.totalorder %s13, 0
    %p33 = por %p31, %p32
    %p34 = scmp.ne.s32.totalorder %s23, %s26
    %p35 = scmp.eq.s32.totalorder %s18, 1
    %p36 = por %p34, %p35
    %p37 = scmp.ne.s32.totalorder %s26, %s27
    %p38 = scmp.eq.s32.totalorder %s18, 0
    %p39 = por %p37, %p38
    %p40 = scmp.ne.s32.totalorder %s26, %s27
    %p41 = scmp.eq.s32.totalorder %s19, 1
    %p42 = por %p40, %p41
    %p44 = scmp.ne.s32.totalorder %s27, %s43
    %p45 = scmp.eq.s32.totalorder %s19, 0
    %p46 = por %p44, %p45
    %s48 = sadd.s32 %s47, 1
    %p51 = scmp.eq.s32.totalorder %s13, 1
    %p52 = scmp.ne.s32.totalorder %s47, %s49
    %p53 = scmp.eq.s32.totalorder %s13, 0
    %p54 = por %p52, %p53
    %p55 = scmp.ne.s32.totalorder %s47, %s49
    %p56 = scmp.eq.s32.totalorder %s18, 1
    %p57 = por %p55, %p56
    %p58 = scmp.ne.s32.totalorder %s49, %s50
    %p59 = scmp.eq.s32.totalorder %s18, 0
    %p60 = por %p58, %p59
    %p61 = scmp.ne.s32.totalorder %s49, %s50
    %p62 = scmp.eq.s32.totalorder %s19, 1
    %p63 = por %p61, %p62
    %p65 = scmp.ne.s32.totalorder %s50, %s64
    %p66 = scmp.eq.s32.totalorder %s19, 0
    %p67 = por %p65, %p66
    %s69 = sadd.s32 %s68, 1
    %p72 = scmp.eq.s32.totalorder %s13, 1
    %p73 = scmp.ne.s32.totalorder %s68, %s70
    %p74 = scmp.eq.s32.totalorder %s13, 0
    %p75 = por %p73, %p74
    %p76 = scmp.ne.s32.totalorder %s68, %s70
    %p77 = scmp.eq.s32.totalorder %s18, 1
    %p78 = por %p76, %p77
    %p79 = scmp.ne.s32.totalorder %s70, %s71
    %p80 = scmp.eq.s32.totalorder %s18, 0
    %p81 = por %p79, %p80
    %p82 = scmp.ne.s32.totalorder %s70, %s71
    %p83 = scmp.eq.s32.totalorder %s19, 1
    %p84 = por %p82, %p83
    %p86 = scmp.ne.s32.totalorder %s71, %s85
    %p87 = scmp.eq.s32.totalorder %s19, 0
    %p88 = por %p86, %p87
    %s90 = sadd.s32 %s89, 1
    %p93 = scmp.eq.s32.totalorder %s13, 1
    %p94 = scmp.ne.s32.totalorder %s89, %s91
    %p95 = scmp.eq.s32.totalorder %s13, 0
    %p96 = por %p94, %p95
    %p97 = scmp.ne.s32.totalorder %s89, %s91
    %p98 = scmp.eq.s32.totalorder %s18, 1
    %p99 = por %p97, %p98
    %p100 = scmp.ne.s32.totalorder %s91, %s92
    %p101 = scmp.eq.s32.totalorder %s18, 0
    %p102 = por %p100, %p101
    %p103 = scmp.ne.s32.totalorder %s91, %s92
    %p104 = scmp.eq.s32.totalorder %s19, 1
    %p105 = por %p103, %p104
    %p107 = scmp.ne.s32.totalorder %s92, %s106
    %p108 = scmp.eq.s32.totalorder %s19, 0
    %p109 = por %p107, %p108
    %s111 = sadd.s32 %s110, 1
    %p114 = scmp.eq.s32.totalorder %s13, 1
    %p115 = scmp.ne.s32.totalorder %s110, %s112
    %p116 = scmp.eq.s32.totalorder %s13, 0
    %p117 = por %p115, %p116
    %p118 = scmp.ne.s32.totalorder %s110, %s112
    %p119 = scmp.eq.s32.totalorder %s18, 1
    %p120 = por %p118, %p119
    %p121 = scmp.ne.s32.totalorder %s112, %s113
    %p122 = scmp.eq.s32.totalorder %s18, 0
    %p123 = por %p121, %p122
    %p124 = scmp.ne.s32.totalorder %s112, %s113
    %p125 = scmp.eq.s32.totalorder %s19, 1
    %p126 = por %p124, %p125
    %p128 = scmp.ne.s32.totalorder %s113, %s127
    %p129 = scmp.eq.s32.totalorder %s19, 0
    %p130 = por %p128, %p129
    %s131 = ssub.s32 %s13, %s20
    %p132 = scmp.eq.s32.totalorder %s131, 0
    %s134 = sadd.s32 %s133, 1
    %s135 = scalar_select %p132, %s133, %s134
    %p138 = pneg %p132
    %p139 = scmp.eq.s32.totalorder %s13, 1
    %p140 = por %p138, %p139
    %p141 = scmp.ne.s32.totalorder %s133, %s136
    %p142 = scmp.eq.s32.totalorder %s13, 0
    %p143 = por %p141, %p142
    %p144 = scmp.ne.s32.totalorder %s133, %s136
    %p145 = scmp.eq.s32.totalorder %s18, 1
    %p146 = por %p144, %p145
    %p147 = scmp.ne.s32.totalorder %s136, %s137
    %p148 = scmp.eq.s32.totalorder %s18, 0
    %p149 = por %p147, %p148
    %p150 = scmp.ne.s32.totalorder %s136, %s137
    %p151 = scmp.eq.s32.totalorder %s19, 1
    %p152 = por %p150, %p151
    %p154 = scmp.ne.s32.totalorder %s137, %s153
    %p155 = scmp.eq.s32.totalorder %s19, 0
    %p156 = por %p154, %p155
    %s157 = ssub.s32 %s13, %s20
    %p158 = scmp.eq.s32.totalorder %s157, 0
    %s160 = sadd.s32 %s159, 1
    %s161 = scalar_select %p158, %s159, %s160
    %p164 = pneg %p158
    %p165 = scmp.eq.s32.totalorder %s13, 1
    %p166 = por %p164, %p165
    %p167 = scmp.ne.s32.totalorder %s159, %s162
    %p168 = scmp.eq.s32.totalorder %s13, 0
    %p169 = por %p167, %p168
    %p170 = scmp.ne.s32.totalorder %s159, %s162
    %p171 = scmp.eq.s32.totalorder %s18, 1
    %p172 = por %p170, %p171
    %p173 = scmp.ne.s32.totalorder %s162, %s163
    %p174 = scmp.eq.s32.totalorder %s18, 0
    %p175 = por %p173, %p174
    %p176 = scmp.ne.s32.totalorder %s162, %s163
    %p177 = scmp.eq.s32.totalorder %s19, 1
    %p178 = por %p176, %p177
    %p180 = scmp.ne.s32.totalorder %s163, %s179
    %p181 = scmp.eq.s32.totalorder %s19, 0
    %p182 = por %p180, %p181
    %p183 = scmp.le.s32.totalorder 1, %s13
    %p184 = scmp.lt.s32.totalorder %s13, 3
    %p185 = pnand %p183, %p184
    %p186 = pneg %p185
    // Predicated region
    $region9: #{shortcut_resblock_forward.4} parent=5 // pred_check
      _
    $region10: #{shortcut_resblock_forward.4} parent=5 // pred_check_branch
      %188 = sbr.rel (%p185) target = $region12
    $region11: #{shortcut_resblock_forward.4} parent=5 // pred_region
      %s189 = ssub.s32 %s13, 1
      // Predicated region
      $region13: #{shortcut_resblock_forward.4} parent=11 // pred_check
        %p190 = pneg %p60
      $region14: #{shortcut_resblock_forward.4} parent=11 // pred_check_branch
        %192 = sbr.rel (%p190) target = $region16
      $region15: #{shortcut_resblock_forward.4} parent=11 // pred_region
        _
      $region16: #{shortcut_resblock_forward.4} parent=11 // pred_fallthru
        _
      // Predicated region
      $region17: #{shortcut_resblock_forward.4} parent=11 // pred_check
        %p193 = pneg %p81
      $region18: #{shortcut_resblock_forward.4} parent=11 // pred_check_branch
        %195 = sbr.rel (%p193) target = $region20
      $region19: #{shortcut_resblock_forward.4} parent=11 // pred_region
        _
      $region20: #{shortcut_resblock_forward.4} parent=11 // pred_fallthru
        _
      // Predicated region
      $region21: #{shortcut_resblock_forward.4} parent=11 // pred_check
        %p196 = pneg %p102
      $region22: #{shortcut_resblock_forward.4} parent=11 // pred_check_branch
        %198 = sbr.rel (%p196) target = $region24
      $region23: #{shortcut_resblock_forward.4} parent=11 // pred_region
        _
      $region24: #{shortcut_resblock_forward.4} parent=11 // pred_fallthru
        _
      // Predicated region
      $region25: #{shortcut_resblock_forward.4} parent=11 // pred_check
        %p199 = pneg %p123
      $region26: #{shortcut_resblock_forward.4} parent=11 // pred_check_branch
        %201 = sbr.rel (%p199) target = $region28
      $region27: #{shortcut_resblock_forward.4} parent=11 // pred_region
        _
      $region28: #{shortcut_resblock_forward.4} parent=11 // pred_fallthru
        _
    $region12: #{shortcut_resblock_forward.4} parent=5 // pred_fallthru
      _
    %p202 = scmp.lt.s32.totalorder %s13, 2
    // Predicated region
    $region29: #{shortcut_resblock_forward.4} parent=5 // pred_check
      %p203 = pneg %p202
    $region30: #{shortcut_resblock_forward.4} parent=5 // pred_check_branch
      %205 = sbr.rel (%p203) target = $region32
    $region31: #{shortcut_resblock_forward.4} parent=5 // pred_region
      // Predicated region
      $region33: #{shortcut_resblock_forward.4} parent=31 // pred_check
        %p206 = pneg %p33
      $region34: #{shortcut_resblock_forward.4} parent=31 // pred_check_branch
        %208 = sbr.rel (%p206) target = $region36
      $region35: #{shortcut_resblock_forward.4} parent=31 // pred_region
        %p209 = scmp.lt.s32.totalorder %s13, 1
        %s210 = scalar_select %p209, %s13, 1
        %s211 = smul.addr %s210, 9
        %s212 = smul.addr %s211, 4
        %s213 = scalar_lea.vmem %s0, %s212
      $region36: #{shortcut_resblock_forward.4} parent=31 // pred_fallthru
        _
    $region32: #{shortcut_resblock_forward.4} parent=5 // pred_fallthru
      _
    %p214 = scmp.le.s32.totalorder 1, %s13
    %p215 = scmp.lt.s32.totalorder %s13, 3
    %p216 = pnand %p214, %p215
    %p217 = pneg %p216
    // Predicated region
    $region37: #{shortcut_resblock_forward.4} parent=5 // pred_check
      _
    $region38: #{shortcut_resblock_forward.4} parent=5 // pred_check_branch
      %219 = sbr.rel (%p216) target = $region40
    $region39: #{shortcut_resblock_forward.4} parent=5 // pred_region
      %s220 = ssub.s32 %s13, 1
      %p221 = scmp.lt.s32.totalorder %s18, 1
      %s222 = scalar_select %p221, %s18, 1
      %s223 = smul.addr %s222, 9
      %s224 = smul.addr %s223, 4
      %s225 = scalar_lea.vmem %s0, %s224
      %p226 = pneg %p39
      %p227 = pneg %p36
      %p228 = pneg %p60
      %p229 = pneg %p57
      %p230 = pneg %p81
      %p231 = pneg %p78
      %p232 = pneg %p102
      %p233 = pneg %p99
      %p234 = pneg %p123
      %p235 = pneg %p120
      %p236 = pneg %p149
      %p237 = pneg %p146
      %p238 = scmp.lt.s32.totalorder %s18, 1
      %s239 = scalar_select %p238, %s18, 1
      %s240 = smul.addr %s239, 9
      %s241 = smul.addr %s240, 4
      %s242 = scalar_lea.vmem %s5, %s241
      %p243 = pneg %p175
      %p244 = pneg %p172
      %p245 = scmp.lt.s32.totalorder %s18, 1
      %s246 = scalar_select %p245, %s18, 1
      %s247 = smul.addr %s246, 8
      %s248 = scalar_lea.vmem %s6, %s247
      %p249 = scmp.lt.s32.totalorder %s18, 1
      %s250 = scalar_select %p249, %s18, 1
      %s251 = smul.addr %s250, 9
      %s252 = smul.addr %s251, 4
      %s253 = scalar_lea.vmem %s0, %s252
      %p254 = scmp.lt.s32.totalorder %s18, 1
      %s255 = scalar_select %p254, %s18, 1
      %s256 = smul.addr %s255, 9
      %s257 = smul.addr %s256, 4
      %s258 = scalar_lea.vmem %s5, %s257
      %p259 = scmp.lt.s32.totalorder %s18, 1
      %s260 = scalar_select %p259, %s18, 1
      %s261 = smul.addr %s260, 8
      %s262 = scalar_lea.vmem %s6, %s261
      %v264 = vld [vmem:[%s1] sm:$0xff]
      %v265 = vmul.f32 %v264, 0.0078125
      %v266 = vmul.f32 %v265, %v265
      %v268 = vrot.slane %v266, 7
      %v270 = vsub.f32 %v265, %v268
      %v271 = vmax.f32 %v270, 0.0
      %v272 = vld [vmem:[%s2] sm:$0x1]
      %v273 = vadd.f32 %v271, 1e-05
      %v274 = vrsqrt.pop %v273
      %v277 = vunpack.c.l.s4 1966171168
      %v278 = vunpack.c.0.s8 %v277
      %v279 = vlaneseq
      %v280 = vshrl.u32 %v279, 7
      %v281 = vsub.s32 %v278, %v280
      %v282 = vrot.slane %v274, %v281
      %v283 = vcombine.high %v282, %v282
      %v285 = vunpack.c.l.s4 1966171168
      %v286 = vunpack.c.0.s8 %v285
      %v287 = vlaneseq
      %v288 = vshrl.u32 %v287, 7
      %v289 = vsub.s32 %v286, %v288
      %v290 = vrot.slane %v283, %v289
      %v291 = vcombine.high %v290, %v290
      %v293 = vmul.f32 %v272, %v291
      %v294 = vld [vmem:[%s3] sm:$0x1]
      %v296 = vlaneseq
      %v297 = vshrl.u32 %v296, 7
      %v298 = vsub.s32 0, %v297
      %v299 = vrot.slane %v293, %v298
      %v301 = vmul.f32 %v265, %v299
      %v304 = vunpack.c.l.s4 1966171168
      %v305 = vunpack.c.0.s8 %v304
      %v306 = vlaneseq
      %v307 = vshrl.u32 %v306, 7
      %v308 = vsub.s32 %v305, %v307
      %v309 = vrot.slane %v301, %v308
      %v311 = vunpack.c.l.s4 1966171168
      %v312 = vunpack.c.0.s8 %v311
      %v313 = vlaneseq
      %v314 = vshrl.u32 %v313, 7
      %v315 = vsub.s32 %v312, %v314
      %v316 = vrot.slane %v309, %v315
      %v317 = vcombine.high %v316, %v316
      %v319 = vsub.f32 %v294, %v317
      %v320 = vlaneseq
      %v321 = vshrl.u32 %v320, 7
      %v322 = vadd.s32 %v321, 8
      %v323 = vadd.s32 %v321, 16
      %v324 = vadd.s32 %v321, 24
      %v325 = vadd.s32 %v321, 32
      %v326 = vadd.s32 %v321, 40
      %v327 = vadd.s32 %v321, 48
      %v328 = vadd.s32 %v321, 56
      %v329 = vadd.s32 %v321, 64
      %vm330 = vcmp.lt.s32.totalorder %v321, 0
      %v331 = vsub.s32 0, %v321
      %v332 = vsel %vm330, %v331, %v321
      %v333 = vmul.u32.u64.compose %v332, 3817748708
      %v334 = vextract.low.u32 %v333
      %v335 = vextract.high.u32 %v333
      %v336 = vshrl.u32 %v335, 3
      %v337 = vmul.u32 %v336, 9
      %v338 = vsub.s32 %v332, %v337
      %v339 = vsub.s32 0, %v338
      %v340 = vsel %vm330, %v339, %v338
      %vm341 = vcmp.lt.s32.totalorder %v322, 0
      %v342 = vsub.s32 0, %v322
      %v343 = vsel %vm341, %v342, %v322
      %v344 = vmul.u32.u64.compose %v343, 3817748708
      %v345 = vextract.low.u32 %v344
      %v346 = vextract.high.u32 %v344
      %v347 = vshrl.u32 %v346, 3
      %v348 = vmul.u32 %v347, 9
      %v349 = vsub.s32 %v343, %v348
      %v350 = vsub.s32 0, %v349
      %v351 = vsel %vm341, %v350, %v349
      %vm352 = vcmp.lt.s32.totalorder %v323, 0
      %v353 = vsub.s32 0, %v323
      %v354 = vsel %vm352, %v353, %v323
      %v355 = vmul.u32.u64.compose %v354, 3817748708
      %v356 = vextract.low.u32 %v355
      %v357 = vextract.high.u32 %v355
      %v358 = vshrl.u32 %v357, 3
      %v359 = vmul.u32 %v358, 9
      %v360 = vsub.s32 %v354, %v359
      %v361 = vsub.s32 0, %v360
      %v362 = vsel %vm352, %v361, %v360
      %vm363 = vcmp.lt.s32.totalorder %v324, 0
      %v364 = vsub.s32 0, %v324
      %v365 = vsel %vm363, %v364, %v324
      %v366 = vmul.u32.u64.compose %v365, 3817748708
      %v367 = vextract.low.u32 %v366
      %v368 = vextract.high.u32 %v366
      %v369 = vshrl.u32 %v368, 3
      %v370 = vmul.u32 %v369, 9
      %v371 = vsub.s32 %v365, %v370
      %v372 = vsub.s32 0, %v371
      %v373 = vsel %vm363, %v372, %v371
      %vm374 = vcmp.lt.s32.totalorder %v325, 0
      %v375 = vsub.s32 0, %v325
      %v376 = vsel %vm374, %v375, %v325
      %v377 = vmul.u32.u64.compose %v376, 3817748708
      %v378 = vextract.low.u32 %v377
      %v379 = vextract.high.u32 %v377
      %v380 = vshrl.u32 %v379, 3
      %v381 = vmul.u32 %v380, 9
      %v382 = vsub.s32 %v376, %v381
      %v383 = vsub.s32 0, %v382
      %v384 = vsel %vm374, %v383, %v382
      %vm385 = vcmp.lt.s32.totalorder %v326, 0
      %v386 = vsub.s32 0, %v326
      %v387 = vsel %vm385, %v386, %v326
      %v388 = vmul.u32.u64.compose %v387, 3817748708
      %v389 = vextract.low.u32 %v388
      %v390 = vextract.high.u32 %v388
      %v391 = vshrl.u32 %v390, 3
      %v392 = vmul.u32 %v391, 9
      %v393 = vsub.s32 %v387, %v392
      %v394 = vsub.s32 0, %v393
      %v395 = vsel %vm385, %v394, %v393
      %vm396 = vcmp.lt.s32.totalorder %v327, 0
      %v397 = vsub.s32 0, %v327
      %v398 = vsel %vm396, %v397, %v327
      %v399 = vmul.u32.u64.compose %v398, 3817748708
      %v400 = vextract.low.u32 %v399
      %v401 = vextract.high.u32 %v399
      %v402 = vshrl.u32 %v401, 3
      %v403 = vmul.u32 %v402, 9
      %v404 = vsub.s32 %v398, %v403
      %v405 = vsub.s32 0, %v404
      %v406 = vsel %vm396, %v405, %v404
      %vm407 = vcmp.lt.s32.totalorder %v328, 0
      %v408 = vsub.s32 0, %v328
      %v409 = vsel %vm407, %v408, %v328
      %v410 = vmul.u32.u64.compose %v409, 3817748708
      %v411 = vextract.low.u32 %v410
      %v412 = vextract.high.u32 %v410
      %v413 = vshrl.u32 %v412, 3
      %v414 = vmul.u32 %v413, 9
      %v415 = vsub.s32 %v409, %v414
      %v416 = vsub.s32 0, %v415
      %v417 = vsel %vm407, %v416, %v415
      %vm418 = vcmp.lt.s32.totalorder %v329, 0
      %v419 = vsub.s32 0, %v329
      %v420 = vsel %vm418, %v419, %v329
      %v421 = vmul.u32.u64.compose %v420, 3817748708
      %v422 = vextract.low.u32 %v421
      %v423 = vextract.high.u32 %v421
      %v424 = vshrl.u32 %v423, 3
      %v425 = vmul.u32 %v424, 9
      %v426 = vsub.s32 %v420, %v425
      %v427 = vsub.s32 0, %v426
      %v428 = vsel %vm418, %v427, %v426
      %vm429 = vcmp.ne.s32.totalorder %v340, 0
      %vm430 = vcmp.ne.s32.totalorder %v351, 0
      %vm431 = vcmp.ne.s32.totalorder %v362, 0
      %vm432 = vcmp.ne.s32.totalorder %v373, 0
      %vm433 = vcmp.ne.s32.totalorder %v384, 0
      %vm434 = vcmp.ne.s32.totalorder %v395, 0
      %vm435 = vcmp.ne.s32.totalorder %v406, 0
      %vm436 = vcmp.ne.s32.totalorder %v417, 0
      %vm437 = vcmp.ne.s32.totalorder %v428, 0
      %vm438 = vcmp.lt.s32.totalorder %v340, 0
      %vm439 = vcmp.lt.s32.totalorder %v351, 0
      %vm440 = vcmp.lt.s32.totalorder %v362, 0
      %vm441 = vcmp.lt.s32.totalorder %v373, 0
      %vm442 = vcmp.lt.s32.totalorder %v384, 0
      %vm443 = vcmp.lt.s32.totalorder %v395, 0
      %vm444 = vcmp.lt.s32.totalorder %v406, 0
      %vm445 = vcmp.lt.s32.totalorder %v417, 0
      %vm446 = vcmp.lt.s32.totalorder %v428, 0
      %vm447 = vmand %vm438, %vm429
      %vm448 = vmand %vm439, %vm430
      %vm449 = vmand %vm440, %vm431
      %vm450 = vmand %vm441, %vm432
      %vm451 = vmand %vm442, %vm433
      %vm452 = vmand %vm443, %vm434
      %vm453 = vmand %vm444, %vm435
      %vm454 = vmand %vm445, %vm436
      %vm455 = vmand %vm446, %vm437
      %v456 = vadd.s32 %v340, 9
      %v457 = vadd.s32 %v351, 9
      %v458 = vadd.s32 %v362, 9
      %v459 = vadd.s32 %v373, 9
      %v460 = vadd.s32 %v384, 9
      %v461 = vadd.s32 %v395, 9
      %v462 = vadd.s32 %v406, 9
      %v463 = vadd.s32 %v417, 9
      %v464 = vadd.s32 %v428, 9
      %v465 = vsel %vm447, %v456, %v340
      %v466 = vsel %vm448, %v457, %v351
      %v467 = vsel %vm449, %v458, %v362
      %v468 = vsel %vm450, %v459, %v373
      %v469 = vsel %vm451, %v460, %v384
      %v470 = vsel %vm452, %v461, %v395
      %v471 = vsel %vm453, %v462, %v406
      %v472 = vsel %vm454, %v463, %v417
      %v473 = vsel %vm455, %v464, %v428
      %vm474 = vcmp.lt.s32.totalorder %v465, 8
      %vm475 = vcmp.lt.s32.totalorder %v466, 8
      %vm476 = vcmp.lt.s32.totalorder %v467, 8
      %vm477 = vcmp.lt.s32.totalorder %v468, 8
      %vm478 = vcmp.lt.s32.totalorder %v469, 8
      %vm479 = vcmp.lt.s32.totalorder %v470, 8
      %vm480 = vcmp.lt.s32.totalorder %v471, 8
      %vm481 = vcmp.lt.s32.totalorder %v472, 8
      %vm482 = vcmp.lt.s32.totalorder %v473, 8
      %v483 = vld [vmem:[%s253] sm:$0xf]
      %v484 = vld [vmem:[%s253 + $0x4] sm:$0xf]
      %v485 = vld [vmem:[%s253 + $0x8] sm:$0xf]
      %v486 = vld [vmem:[%s253 + $0xc] sm:$0xf]
      %v487 = vld [vmem:[%s253 + $0x10] sm:$0xf]
      %v488 = vld [vmem:[%s253 + $0x14] sm:$0xf]
      %v489 = vld [vmem:[%s253 + $0x18] sm:$0xf]
      %v490 = vld [vmem:[%s253 + $0x1c] sm:$0xf]
      %v491 = vld [vmem:[%s253 + $0x20] sm:$0xf]
      %v492 = vunpack.c.l.bf16 %v483
      %v493 = vunpack.c.l.bf16 %v484
      %v494 = vunpack.c.l.bf16 %v485
      %v495 = vunpack.c.l.bf16 %v486
      %v496 = vunpack.c.l.bf16 %v487
      %v497 = vunpack.c.l.bf16 %v488
      %v498 = vunpack.c.l.bf16 %v489
      %v499 = vunpack.c.l.bf16 %v490
      %v500 = vunpack.c.l.bf16 %v491
      %v501 = vmul.f32 %v492, %v299
      %v502 = vmul.f32 %v493, %v299
      %v503 = vmul.f32 %v494, %v299
      %v504 = vmul.f32 %v495, %v299
      %v505 = vmul.f32 %v496, %v299
      %v506 = vmul.f32 %v497, %v299
      %v507 = vmul.f32 %v498, %v299
      %v508 = vmul.f32 %v499, %v299
      %v509 = vmul.f32 %v500, %v299
      %v511 = vlaneseq
      %v512 = vshrl.u32 %v511, 7
      %v513 = vsub.s32 0, %v512
      %v514 = vrot.slane %v319, %v513
      %v516 = vadd.f32 %v501, %v514
      %v517 = vadd.f32 %v502, %v514
      %v518 = vadd.f32 %v503, %v514
      %v519 = vadd.f32 %v504, %v514
      %v520 = vadd.f32 %v505, %v514
      %v521 = vadd.f32 %v506, %v514
      %v522 = vadd.f32 %v507, %v514
      %v523 = vadd.f32 %v508, %v514
      %v524 = vadd.f32 %v509, %v514
      %v525 = vmax.f32 %v516, 0.0
      %v526 = vmax.f32 %v517, 0.0
      %v527 = vmax.f32 %v518, 0.0
      %v528 = vmax.f32 %v519, 0.0
      %v529 = vmax.f32 %v520, 0.0
      %v530 = vmax.f32 %v521, 0.0
      %v531 = vmax.f32 %v522, 0.0
      %v532 = vmax.f32 %v523, 0.0
      %v533 = vmax.f32 %v524, 0.0
      %v534 = vsel %vm474, 1, 0
      %v535 = vsel %vm475, 1, 0
      %v536 = vsel %vm476, 1, 0
      %v537 = vsel %vm477, 1, 0
      %v538 = vsel %vm478, 1, 0
      %v539 = vsel %vm479, 1, 0
      %v540 = vsel %vm480, 1, 0
      %v541 = vsel %vm481, 1, 0
      %v542 = vsel %vm482, 1, 0
      %vm543 = vcmp.eq.s32.totalorder %v534, 1
      %vm544 = vcmp.eq.s32.totalorder %v535, 1
      %vm545 = vcmp.eq.s32.totalorder %v536, 1
      %vm546 = vcmp.eq.s32.totalorder %v537, 1
      %vm547 = vcmp.eq.s32.totalorder %v538, 1
      %vm548 = vcmp.eq.s32.totalorder %v539, 1
      %vm549 = vcmp.eq.s32.totalorder %v540, 1
      %vm550 = vcmp.eq.s32.totalorder %v541, 1
      %vm551 = vcmp.eq.s32.totalorder %v542, 1
      %v552 = vsel %vm543, %v525, 0.0
      %v553 = vsel %vm544, %v526, 0.0
      %v554 = vsel %vm545, %v527, 0.0
      %v555 = vsel %vm546, %v528, 0.0
      %v556 = vsel %vm547, %v529, 0.0
      %v557 = vsel %vm548, %v530, 0.0
      %v558 = vsel %vm549, %v531, 0.0
      %v559 = vsel %vm550, %v532, 0.0
      %v560 = vsel %vm551, %v533, 0.0
      %561 = vst [vmem:[#allocation2] sm:$0xff] 0
      %562 = vst [vmem:[#allocation2 + $0x28] sm:$0xf0] 0
      %563 = vst [vmem:[#allocation2 + $0x30] sm:$0xff] 0
      %v564 = vpack.c.bf16 %v553, %v552
      %v565 = vpack.c.bf16 %v555, %v554
      %v566 = vpack.c.bf16 %v557, %v556
      %v567 = vpack.c.bf16 %v559, %v558
      %v568 = vpack.c.bf16 %v560, %v560
      %569 = vst [vmem:[#allocation2 + $0x8] sm:$0xff] %v564
      %570 = vst [vmem:[#allocation2 + $0x10] sm:$0xff] %v565
      %571 = vst [vmem:[#allocation2 + $0x18] sm:$0xff] %v566
      %572 = vst [vmem:[#allocation2 + $0x20] sm:$0xff] %v567
      %573 = vst [vmem:[#allocation2 + $0x28] sm:$0xf] %v568
      %v574 = vld [vmem:[#allocation2] sm:$0xf8]
      %v575 = vld [vmem:[#allocation2 + $0x8] sm:$0xff]
      %v576 = vld [vmem:[#allocation2 + $0x10] sm:$0xff]
      %v577 = vld [vmem:[#allocation2 + $0x18] sm:$0xff]
      %v578 = vld [vmem:[#allocation2 + $0x20] sm:$0x7f]
      %v579 = vld [vmem:[%s4] sm:$0xf]
      %v580 = vld [vmem:[%s4 + $0x4] sm:$0xf]
      %v581 = vld [vmem:[%s4 + $0x8] sm:$0xf]
      %v582 = vld [vmem:[%s4 + $0xc] sm:$0xf]
      %v583 = vld [vmem:[%s4 + $0x10] sm:$0xf]
      %v584 = vld [vmem:[%s4 + $0x14] sm:$0xf]
      %v585 = vld [vmem:[%s4 + $0x18] sm:$0xf]
      %v586 = vld [vmem:[%s4 + $0x1c] sm:$0xf]
      %v587 = vld [vmem:[%s4 + $0x20] sm:$0xf]
      %v588 = vld [vmem:[%s4 + $0x24] sm:$0xf]
      %v589 = vld [vmem:[%s4 + $0x28] sm:$0xf]
      %v590 = vld [vmem:[%s4 + $0x2c] sm:$0xf]
      %v591 = vld [vmem:[%s4 + $0x30] sm:$0xf]
      %v592 = vld [vmem:[%s4 + $0x34] sm:$0xf]
      %v593 = vld [vmem:[%s4 + $0x38] sm:$0xf]
      %v594 = vld [vmem:[%s4 + $0x3c] sm:$0xf]
      %v595 = vld [vmem:[#allocation2 + $0x20] sm:$0xff]
      %s596 = scalar_lea.vmem %s4, 64
      %v597 = vld [vmem:[%s596] sm:$0xf]
      %v598 = vld [vmem:[%s596 + $0x4] sm:$0xf]
      %v599 = vld [vmem:[%s596 + $0x8] sm:$0xf]
      %v600 = vld [vmem:[%s596 + $0xc] sm:$0xf]
      %v601 = vld [vmem:[%s596 + $0x10] sm:$0xf]
      %v602 = vld [vmem:[%s596 + $0x14] sm:$0xf]
      %v603 = vld [vmem:[%s596 + $0x18] sm:$0xf]
      %v604 = vld [vmem:[%s596 + $0x1c] sm:$0xf]
      %v605 = vld [vmem:[%s596 + $0x20] sm:$0xf]
      %v606 = vld [vmem:[%s596 + $0x24] sm:$0xf]
      %v607 = vld [vmem:[%s596 + $0x28] sm:$0xf]
      %v608 = vld [vmem:[%s596 + $0x2c] sm:$0xf]
      %v609 = vld [vmem:[%s596 + $0x30] sm:$0xf]
      %v610 = vld [vmem:[%s596 + $0x34] sm:$0xf]
      %v611 = vld [vmem:[%s596 + $0x38] sm:$0xf]
      %v612 = vld [vmem:[%s596 + $0x3c] sm:$0xf]
      %vm613 = vsmask.f32 4352
      %v615 = vshrl.u32 %v574, 16
      %v617 = vrot.slane %v615, 3
      %v618 = vshll.u32 %v574, 16
      %v620 = vrot.slane %v618, 4
      %v621 = vor.u32 %v617, %v620
      %v623 = vshrl.u32 %v575, 16
      %v625 = vrot.slane %v623, 3
      %v626 = vshll.u32 %v575, 16
      %v628 = vrot.slane %v626, 4
      %v629 = vor.u32 %v625, %v628
      %v630 = vsel %vm613, %v621, %v629
      %v632 = vshrl.u32 %v576, 16
      %v634 = vrot.slane %v632, 3
      %v635 = vshll.u32 %v576, 16
      %v637 = vrot.slane %v635, 4
      %v638 = vor.u32 %v634, %v637
      %v639 = vsel %vm613, %v629, %v638
      %v641 = vshrl.u32 %v577, 16
      %v643 = vrot.slane %v641, 3
      %v644 = vshll.u32 %v577, 16
      %v646 = vrot.slane %v644, 4
      %v647 = vor.u32 %v643, %v646
      %v648 = vsel %vm613, %v638, %v647
      %v650 = vshrl.u32 %v595, 16
      %v652 = vrot.slane %v650, 3
      %v653 = vshll.u32 %v595, 16
      %v655 = vrot.slane %v653, 4
      %v656 = vor.u32 %v652, %v655
      %v657 = vsel %vm613, %v647, %v656
      %v679 = vunpack.c.l.b16 %v597
      %v680 = vunpack.c.l.b16 %v598
      %v681 = vunpack.c.l.b16 %v599
      %v682 = vunpack.c.l.b16 %v600
      %v683 = vunpack.c.l.b16 %v601
      %v684 = vunpack.c.l.b16 %v602
      %v685 = vunpack.c.l.b16 %v603
      %v686 = vunpack.c.l.b16 %v604
      %v687 = vunpack.c.l.b16 %v605
      %v688 = vunpack.c.l.b16 %v606
      %v689 = vunpack.c.l.b16 %v607
      %v690 = vunpack.c.l.b16 %v608
      %v691 = vunpack.c.l.b16 %v609
      %v692 = vunpack.c.l.b16 %v610
      %v693 = vunpack.c.l.b16 %v611
      %v694 = vunpack.c.l.b16 %v612
      %v695 = vpack.c.b16 %v680, %v679
      %v696 = vpack.c.b16 %v682, %v681
      %v697 = vpack.c.b16 %v684, %v683
      %v698 = vpack.c.b16 %v686, %v685
      %v699 = vpack.c.b16 %v688, %v687
      %v700 = vpack.c.b16 %v690, %v689
      %v701 = vpack.c.b16 %v692, %v691
      %v702 = vpack.c.b16 %v694, %v693
      %711 = vmatprep.subr.bf16.mxu0 0
      %712 = vmatpush1.bf16.msra.mxu0 %v695
      %713 = vmatprep.subr.bf16.mxu0 0
      %714 = vmatpush1.bf16.msra.mxu0 %v696
      %715 = vmatprep.subr.bf16.mxu0 0
      %716 = vmatpush1.bf16.msra.mxu0 %v697
      %717 = vmatprep.subr.bf16.mxu0 0
      %718 = vmatpush1.bf16.msra.mxu0 %v698
      %719 = vmatprep.subr.bf16.mxu0 0
      %720 = vmatpush1.bf16.msra.mxu0 %v699
      %721 = vmatprep.subr.bf16.mxu0 0
      %722 = vmatpush1.bf16.msra.mxu0 %v700
      %723 = vmatprep.subr.bf16.mxu0 0
      %724 = vmatpush1.bf16.msra.mxu0 %v701
      %725 = vmatprep.subr.bf16.mxu0 0
      %726 = vmatpush1.bf16.msra.mxu0 %v702
      %727 = vmatprep.subr.bf16.mxu0 0
      %728 = vmatpush1.bf16.msra.mxu0 0
      %729 = vmatprep.subr.bf16.mxu0 0
      %730 = vmatpush1.bf16.msra.mxu0 0
      %731 = vmatprep.subr.bf16.mxu0 0
      %732 = vmatpush1.bf16.msra.mxu0 0
      %733 = vmatprep.subr.bf16.mxu0 0
      %734 = vmatpush1.bf16.msra.mxu0 0
      %735 = vmatprep.subr.bf16.mxu0 0
      %736 = vmatpush1.bf16.msra.mxu0 0
      %737 = vmatprep.subr.bf16.mxu0 0
      %738 = vmatpush1.bf16.msra.mxu0 0
      %739 = vmatprep.subr.bf16.mxu0 0
      %740 = vmatpush1.bf16.msra.mxu0 0
      %741 = vmatprep.subr.bf16.mxu0 0
      %742 = vmatpush1.bf16.msra.mxu0 0
      %743 = vmatprep.mubr.bf16.mxu0 0
      %744 = vmatmul.mubr.bf16.gmra.mrb[0].mxu0 %v630
      %v745 = vpop.f32.mrb[0].mxu0
      %v746 = vadd.f32 0.0, %v745
      %v747 = vpop.f32.mrb[0].mxu0
      %v748 = vpop.f32.mrb[0].mxu0
      %v749 = vadd.f32 0.0, %v748
      %v750 = vpop.f32.mrb[0].mxu0
      %751 = vmatprep.mubr.bf16.mxu0 0
      %752 = vmatmul.mubr.bf16.gmra.mrb[0].mxu0 %v639
      %v753 = vpop.f32.mrb[0].mxu0
      %v754 = vadd.f32 0.0, %v753
      %v755 = vpop.f32.mrb[0].mxu0
      %v756 = vpop.f32.mrb[0].mxu0
      %v757 = vadd.f32 0.0, %v756
      %v758 = vpop.f32.mrb[0].mxu0
      %759 = vmatprep.mubr.bf16.mxu0 0
      %760 = vmatmul.mubr.bf16.gmra.mrb[0].mxu0 %v648
      %v761 = vpop.f32.mrb[0].mxu0
      %v762 = vadd.f32 0.0, %v761
      %v763 = vpop.f32.mrb[0].mxu0
      %v764 = vpop.f32.mrb[0].mxu0
      %v765 = vadd.f32 0.0, %v764
      %v766 = vpop.f32.mrb[0].mxu0
      %767 = vmatprep.mubr.bf16.mxu0 0
      %768 = vmatmul.mubr.bf16.gmra.mrb[0].mxu0 %v657
      %v769 = vpop.f32.mrb[0].mxu0
      %v770 = vadd.f32 0.0, %v769
      %v771 = vpop.f32.mrb[0].mxu0
      %v772 = vpop.f32.mrb[0].mxu0
      %v773 = vadd.f32 0.0, %v772
      %v774 = vpop.f32.mrb[0].mxu0
      %775 = vmatprep.mubr.bf16.mxu0 0
      %776 = vmatmul.mubr.bf16.gmra.mrb[0].mxu0 %v656
      %v777 = vpop.f32.mrb[0].mxu0
      %v778 = vadd.f32 0.0, %v777
      %v779 = vpop.f32.mrb[0].mxu0
      %v780 = vpop.f32.mrb[0].mxu0
      %v781 = vpop.f32.mrb[0].mxu0
      %782 = vdwg.mxu0
      %vm788 = vcmask 1044480
      %v789 = vrot.slane %v574, 3
      %v790 = vrot.slane %v575, 3
      %v791 = vsel %vm788, %v789, %v790
      %v792 = vrot.slane %v576, 3
      %v793 = vsel %vm788, %v790, %v792
      %v794 = vrot.slane %v577, 3
      %v795 = vsel %vm788, %v792, %v794
      %v796 = vrot.slane %v578, 3
      %v797 = vsel %vm788, %v794, %v796
      %v819 = vunpack.c.l.b16 %v579
      %v820 = vunpack.c.l.b16 %v580
      %v821 = vunpack.c.l.b16 %v581
      %v822 = vunpack.c.l.b16 %v582
      %v823 = vunpack.c.l.b16 %v583
      %v824 = vunpack.c.l.b16 %v584
      %v825 = vunpack.c.l.b16 %v585
      %v826 = vunpack.c.l.b16 %v586
      %v827 = vunpack.c.l.b16 %v587
      %v828 = vunpack.c.l.b16 %v588
      %v829 = vunpack.c.l.b16 %v589
      %v830 = vunpack.c.l.b16 %v590
      %v831 = vunpack.c.l.b16 %v591
      %v832 = vunpack.c.l.b16 %v592
      %v833 = vunpack.c.l.b16 %v593
      %v834 = vunpack.c.l.b16 %v594
      %v835 = vpack.c.b16 %v820, %v819
      %v836 = vpack.c.b16 %v822, %v821
      %v837 = vpack.c.b16 %v824, %v823
      %v838 = vpack.c.b16 %v826, %v825
      %v839 = vpack.c.b16 %v828, %v827
      %v840 = vpack.c.b16 %v830, %v829
      %v841 = vpack.c.b16 %v832, %v831
      %v842 = vpack.c.b16 %v834, %v833
      %851 = vmatprep.subr.bf16.mxu0 0
      %852 = vmatpush1.bf16.msra.mxu0 %v835
      %853 = vmatprep.subr.bf16.mxu0 0
      %854 = vmatpush1.bf16.msra.mxu0 %v836
      %855 = vmatprep.subr.bf16.mxu0 0
      %856 = vmatpush1.bf16.msra.mxu0 %v837
      %857 = vmatprep.subr.bf16.mxu0 0
      %858 = vmatpush1.bf16.msra.mxu0 %v838
      %859 = vmatprep.subr.bf16.mxu0 0
      %860 = vmatpush1.bf16.msra.mxu0 %v839
      %861 = vmatprep.subr.bf16.mxu0 0
      %862 = vmatpush1.bf16.msra.mxu0 %v840
      %863 = vmatprep.subr.bf16.mxu0 0
      %864 = vmatpush1.bf16.msra.mxu0 %v841
      %865 = vmatprep.subr.bf16.mxu0 0
      %866 = vmatpush1.bf16.msra.mxu0 %v842
      %867 = vmatprep.subr.bf16.mxu0 0
      %868 = vmatpush1.bf16.msra.mxu0 0
      %869 = vmatprep.subr.bf16.mxu0 0
      %870 = vmatpush1.bf16.msra.mxu0 0
      %871 = vmatprep.subr.bf16.mxu0 0
      %872 = vmatpush1.bf16.msra.mxu0 0
      %873 = vmatprep.subr.bf16.mxu0 0
      %874 = vmatpush1.bf16.msra.mxu0 0
      %875 = vmatprep.subr.bf16.mxu0 0
      %876 = vmatpush1.bf16.msra.mxu0 0
      %877 = vmatprep.subr.bf16.mxu0 0
      %878 = vmatpush1.bf16.msra.mxu0 0
      %879 = vmatprep.subr.bf16.mxu0 0
      %880 = vmatpush1.bf16.msra.mxu0 0
      %881 = vmatprep.subr.bf16.mxu0 0
      %882 = vmatpush1.bf16.msra.mxu0 0
      %883 = vmatprep.mubr.bf16.mxu0 0
      %884 = vmatmul.mubr.bf16.gmra.mrb[0].mxu0 %v791
      %v885 = vpop.f32.mrb[0].mxu0
      %v886 = vadd.f32 %v746, %v885
      %v887 = vpop.f32.mrb[0].mxu0
      %v888 = vpop.f32.mrb[0].mxu0
      %v889 = vadd.f32 %v749, %v888
      %v890 = vpop.f32.mrb[0].mxu0
      %891 = vmatprep.mubr.bf16.mxu0 0
      %892 = vmatmul.mubr.bf16.gmra.mrb[0].mxu0 %v793
      %v893 = vpop.f32.mrb[0].mxu0
      %v894 = vadd.f32 %v754, %v893
      %v895 = vpop.f32.mrb[0].mxu0
      %v896 = vpop.f32.mrb[0].mxu0
      %v897 = vadd.f32 %v757, %v896
      %v898 = vpop.f32.mrb[0].mxu0
      %899 = vmatprep.mubr.bf16.mxu0 0
      %900 = vmatmul.mubr.bf16.gmra.mrb[0].mxu0 %v795
      %v901 = vpop.f32.mrb[0].mxu0
      %v902 = vadd.f32 %v762, %v901
      %v903 = vpop.f32.mrb[0].mxu0
      %v904 = vpop.f32.mrb[0].mxu0
      %v905 = vadd.f32 %v765, %v904
      %v906 = vpop.f32.mrb[0].mxu0
      %907 = vmatprep.mubr.bf16.mxu0 0
      %908 = vmatmul.mubr.bf16.gmra.mrb[0].mxu0 %v797
      %v909 = vpop.f32.mrb[0].mxu0
      %v910 = vadd.f32 %v770, %v909
      %v911 = vpop.f32.mrb[0].mxu0
      %v912 = vpop.f32.mrb[0].mxu0
      %v913 = vadd.f32 %v773, %v912
      %v914 = vpop.f32.mrb[0].mxu0
      %915 = vmatprep.mubr.bf16.mxu0 0
      %916 = vmatmul.mubr.bf16.gmra.mrb[0].mxu0 %v796
      %v917 = vpop.f32.mrb[0].mxu0
      %v918 = vadd.f32 %v778, %v917
      %v919 = vpop.f32.mrb[0].mxu0
      %v920 = vpop.f32.mrb[0].mxu0
      %v921 = vpop.f32.mrb[0].mxu0
      %922 = vdwg.mxu0
      %v923 = vld [vmem:[#allocation2] sm:$0xf0]
      %s924 = scalar_lea.vmem %s4, 128
      %v925 = vld [vmem:[%s924] sm:$0xf]
      %v926 = vld [vmem:[%s924 + $0x4] sm:$0xf]
      %v927 = vld [vmem:[%s924 + $0x8] sm:$0xf]
      %v928 = vld [vmem:[%s924 + $0xc] sm:$0xf]
      %v929 = vld [vmem:[%s924 + $0x10] sm:$0xf]
      %v930 = vld [vmem:[%s924 + $0x14] sm:$0xf]
      %v931 = vld [vmem:[%s924 + $0x18] sm:$0xf]
      %v932 = vld [vmem:[%s924 + $0x1c] sm:$0xf]
      %v933 = vld [vmem:[%s924 + $0x20] sm:$0xf]
      %v934 = vld [vmem:[%s924 + $0x24] sm:$0xf]
      %v935 = vld [vmem:[%s924 + $0x28] sm:$0xf]
      %v936 = vld [vmem:[%s924 + $0x2c] sm:$0xf]
      %v937 = vld [vmem:[%s924 + $0x30] sm:$0xf]
      %v938 = vld [vmem:[%s924 + $0x34] sm:$0xf]
      %v939 = vld [vmem:[%s924 + $0x38] sm:$0xf]
      %v940 = vld [vmem:[%s924 + $0x3c] sm:$0xf]
      %vm943 = vcmask 1043456
      %v944 = vrot.slane %v923, 4
      %v945 = vrot.slane %v575, 4
      %v946 = vsel %vm943, %v944, %v945
      %v947 = vrot.slane %v576, 4
      %v948 = vsel %vm943, %v945, %v947
      %v949 = vrot.slane %v577, 4
      %v950 = vsel %vm943, %v947, %v949
      %v951 = vrot.slane %v595, 4
      %v952 = vsel %vm943, %v949, %v951
      %v974 = vunpack.c.l.b16 %v925
      %v975 = vunpack.c.l.b16 %v926
      %v976 = vunpack.c.l.b16 %v927
      %v977 = vunpack.c.l.b16 %v928
      %v978 = vunpack.c.l.b16 %v929
      %v979 = vunpack.c.l.b16 %v930
      %v980 = vunpack.c.l.b16 %v931
      %v981 = vunpack.c.l.b16 %v932
      %v982 = vunpack.c.l.b16 %v933
      %v983 = vunpack.c.l.b16 %v934
      %v984 = vunpack.c.l.b16 %v935
      %v985 = vunpack.c.l.b16 %v936
      %v986 = vunpack.c.l.b16 %v937
      %v987 = vunpack.c.l.b16 %v938
      %v988 = vunpack.c.l.b16 %v939
      %v989 = vunpack.c.l.b16 %v940
      %v990 = vpack.c.b16 %v975, %v974
      %v991 = vpack.c.b16 %v977, %v976
      %v992 = vpack.c.b16 %v979, %v978
      %v993 = vpack.c.b16 %v981, %v980
      %v994 = vpack.c.b16 %v983, %v982
      %v995 = vpack.c.b16 %v985, %v984
      %v996 = vpack.c.b16 %v987, %v986
      %v997 = vpack.c.b16 %v989, %v988
      %1006 = vmatprep.subr.bf16.mxu0 0
      %1007 = vmatpush1.bf16.msra.mxu0 %v990
      %1008 = vmatprep.subr.bf16.mxu0 0
      %1009 = vmatpush1.bf16.msra.mxu0 %v991
      %1010 = vmatprep.subr.bf16.mxu0 0
      %1011 = vmatpush1.bf16.msra.mxu0 %v992
      %1012 = vmatprep.subr.bf16.mxu0 0
      %1013 = vmatpush1.bf16.msra.mxu0 %v993
      %1014 = vmatprep.subr.bf16.mxu0 0
      %1015 = vmatpush1.bf16.msra.mxu0 %v994
      %1016 = vmatprep.subr.bf16.mxu0 0
      %1017 = vmatpush1.bf16.msra.mxu0 %v995
      %1018 = vmatprep.subr.bf16.mxu0 0
      %1019 = vmatpush1.bf16.msra.mxu0 %v996
      %1020 = vmatprep.subr.bf16.mxu0 0
      %1021 = vmatpush1.bf16.msra.mxu0 %v997
      %1022 = vmatprep.subr.bf16.mxu0 0
      %1023 = vmatpush1.bf16.msra.mxu0 0
      %1024 = vmatprep.subr.bf16.mxu0 0
      %1025 = vmatpush1.bf16.msra.mxu0 0
      %1026 = vmatprep.subr.bf16.mxu0 0
      %1027 = vmatpush1.bf16.msra.mxu0 0
      %1028 = vmatprep.subr.bf16.mxu0 0
      %1029 = vmatpush1.bf16.msra.mxu0 0
      %1030 = vmatprep.subr.bf16.mxu0 0
      %1031 = vmatpush1.bf16.msra.mxu0 0
      %1032 = vmatprep.subr.bf16.mxu0 0
      %1033 = vmatpush1.bf16.msra.mxu0 0
      %1034 = vmatprep.subr.bf16.mxu0 0
      %1035 = vmatpush1.bf16.msra.mxu0 0
      %1036 = vmatprep.subr.bf16.mxu0 0
      %1037 = vmatpush1.bf16.msra.mxu0 0
      %1038 = vmatprep.mubr.bf16.mxu0 0
      %1039 = vmatmul.mubr.bf16.gmra.mrb[0].mxu0 %v946
      %v1040 = vpop.f32.mrb[0].mxu0
      %v1041 = vadd.f32 0.0, %v1040
      %v1042 = vpop.f32.mrb[0].mxu0
      %v1043 = vpop.f32.mrb[0].mxu0
      %v1044 = vadd.f32 0.0, %v1043
      %v1045 = vpop.f32.mrb[0].mxu0
      %1046 = vmatprep.mubr.bf16.mxu0 0
      %1047 = vmatmul.mubr.bf16.gmra.mrb[0].mxu0 %v948
      %v1048 = vpop.f32.mrb[0].mxu0
      %v1049 = vadd.f32 0.0, %v1048
      %v1050 = vpop.f32.mrb[0].mxu0
      %v1051 = vpop.f32.mrb[0].mxu0
      %v1052 = vadd.f32 0.0, %v1051
      %v1053 = vpop.f32.mrb[0].mxu0
      %1054 = vmatprep.mubr.bf16.mxu0 0
      %1055 = vmatmul.mubr.bf16.gmra.mrb[0].mxu0 %v950
      %v1056 = vpop.f32.mrb[0].mxu0
      %v1057 = vadd.f32 0.0, %v1056
      %v1058 = vpop.f32.mrb[0].mxu0
      %v1059 = vpop.f32.mrb[0].mxu0
      %v1060 = vadd.f32 0.0, %v1059
      %v1061 = vpop.f32.mrb[0].mxu0
      %1062 = vmatprep.mubr.bf16.mxu0 0
      %1063 = vmatmul.mubr.bf16.gmra.mrb[0].mxu0 %v952
      %v1064 = vpop.f32.mrb[0].mxu0
      %v1065 = vadd.f32 0.0, %v1064
      %v1066 = vpop.f32.mrb[0].mxu0
      %v1067 = vpop.f32.mrb[0].mxu0
      %v1068 = vadd.f32 0.0, %v1067
      %v1069 = vpop.f32.mrb[0].mxu0
      %1070 = vmatprep.mubr.bf16.mxu0 0
      %1071 = vmatmul.mubr.bf16.gmra.mrb[0].mxu0 %v951
      %v1072 = vpop.f32.mrb[0].mxu0
      %v1073 = vadd.f32 0.0, %v1072
      %v1074 = vpop.f32.mrb[0].mxu0
      %v1075 = vpop.f32.mrb[0].mxu0
      %v1076 = vpop.f32.mrb[0].mxu0
      %1077 = vdwg.mxu0
      %v1078 = vadd.f32 %v886, %v1041
      %v1079 = vadd.f32 %v889, %v1044
      %v1080 = vadd.f32 %v894, %v1049
      %v1081 = vadd.f32 %v897, %v1052
      %v1082 = vadd.f32 %v902, %v1057
      %v1083 = vadd.f32 %v905, %v1060
      %v1084 = vadd.f32 %v910, %v1065
      %v1085 = vadd.f32 %v913, %v1068
      %v1086 = vadd.f32 %v918, %v1073
      %v1087 = vld [vmem:[#allocation2] sm:$0x80]
      %v1088 = vld [vmem:[#allocation2 + $0x8] sm:$0xff]
      %v1089 = vld [vmem:[#allocation2 + $0x10] sm:$0xff]
      %v1090 = vld [vmem:[#allocation2 + $0x18] sm:$0xff]
      %v1091 = vld [vmem:[#allocation2 + $0x20] sm:$0xff]
      %v1092 = vld [vmem:[#allocation2 + $0x28] sm:$0xf]
      %s1093 = scalar_lea.vmem %s4, 192
      %v1094 = vld [vmem:[%s1093] sm:$0xf]
      %v1095 = vld [vmem:[%s1093 + $0x4] sm:$0xf]
      %v1096 = vld [vmem:[%s1093 + $0x8] sm:$0xf]
      %v1097 = vld [vmem:[%s1093 + $0xc] sm:$0xf]
      %v1098 = vld [vmem:[%s1093 + $0x10] sm:$0xf]
      %v1099 = vld [vmem:[%s1093 + $0x14] sm:$0xf]
      %v1100 = vld [vmem:[%s1093 + $0x18] sm:$0xf]
      %v1101 = vld [vmem:[%s1093 + $0x1c] sm:$0xf]
      %v1102 = vld [vmem:[%s1093 + $0x20] sm:$0xf]
      %v1103 = vld [vmem:[%s1093 + $0x24] sm:$0xf]
      %v1104 = vld [vmem:[%s1093 + $0x28] sm:$0xf]
      %v1105 = vld [vmem:[%s1093 + $0x2c] sm:$0xf]
      %v1106 = vld [vmem:[%s1093 + $0x30] sm:$0xf]
      %v1107 = vld [vmem:[%s1093 + $0x34] sm:$0xf]
      %v1108 = vld [vmem:[%s1093 + $0x38] sm:$0xf]
      %v1109 = vld [vmem:[%s1093 + $0x3c] sm:$0xf]
      %vm1110 = vsmask.f32 256
      %v1112 = vshrl.u32 %v1087, 16
      %v1114 = vrot.slane %v1112, 7
      %v1116 = vshrl.u32 %v1088, 16
      %v1118 = vrot.slane %v1116, 7
      %v1119 = vshll.u32 %v1088, 16
      %v1121 = vor.u32 %v1118, %v1119
      %v1122 = vsel %vm1110, %v1114, %v1121
      %v1124 = vshrl.u32 %v1089, 16
      %v1126 = vrot.slane %v1124, 7
      %v1127 = vshll.u32 %v1089, 16
      %v1129 = vor.u32 %v1126, %v1127
      %v1130 = vsel %vm1110, %v1118, %v1129
      %v1132 = vshrl.u32 %v1090, 16
      %v1134 = vrot.slane %v1132, 7
      %v1135 = vshll.u32 %v1090, 16
      %v1137 = vor.u32 %v1134, %v1135
      %v1138 = vsel %vm1110, %v1126, %v1137
      %v1140 = vshrl.u32 %v1091, 16
      %v1142 = vrot.slane %v1140, 7
      %v1143 = vshll.u32 %v1091, 16
      %v1145 = vor.u32 %v1142, %v1143
      %v1146 = vsel %vm1110, %v1134, %v1145
      %v1148 = vshrl.u32 %v1092, 16
      %v1150 = vrot.slane %v1148, 7
      %v1151 = vshll.u32 %v1092, 16
      %v1153 = vor.u32 %v1150, %v1151
      %v1154 = vsel %vm1110, %v1142, %v1153
      %v1176 = vunpack.c.l.b16 %v1094
      %v1177 = vunpack.c.l.b16 %v1095
      %v1178 = vunpack.c.l.b16 %v1096
      %v1179 = vunpack.c.l.b16 %v1097
      %v1180 = vunpack.c.l.b16 %v1098
      %v1181 = vunpack.c.l.b16 %v1099
      %v1182 = vunpack.c.l.b16 %v1100
      %v1183 = vunpack.c.l.b16 %v1101
      %v1184 = vunpack.c.l.b16 %v1102
      %v1185 = vunpack.c.l.b16 %v1103
      %v1186 = vunpack.c.l.b16 %v1104
      %v1187 = vunpack.c.l.b16 %v1105
      %v1188 = vunpack.c.l.b16 %v1106
      %v1189 = vunpack.c.l.b16 %v1107
      %v1190 = vunpack.c.l.b16 %v1108
      %v1191 = vunpack.c.l.b16 %v1109
      %v1192 = vpack.c.b16 %v1177, %v1176
      %v1193 = vpack.c.b16 %v1179, %v1178
      %v1194 = vpack.c.b16 %v1181, %v1180
      %v1195 = vpack.c.b16 %v1183, %v1182
      %v1196 = vpack.c.b16 %v1185, %v1184
      %v1197 = vpack.c.b16 %v1187, %v1186
      %v1198 = vpack.c.b16 %v1189, %v1188
      %v1199 = vpack.c.b16 %v1191, %v1190
      %1208 = vmatprep.subr.bf16.mxu0 0
      %1209 = vmatpush1.bf16.msra.mxu0 %v1192
      %1210 = vmatprep.subr.bf16.mxu0 0
      %1211 = vmatpush1.bf16.msra.mxu0 %v1193
      %1212 = vmatprep.subr.bf16.mxu0 0
      %1213 = vmatpush1.bf16.msra.mxu0 %v1194
      %1214 = vmatprep.subr.bf16.mxu0 0
      %1215 = vmatpush1.bf16.msra.mxu0 %v1195
      %1216 = vmatprep.subr.bf16.mxu0 0
      %1217 = vmatpush1.bf16.msra.mxu0 %v1196
      %1218 = vmatprep.subr.bf16.mxu0 0
      %1219 = vmatpush1.bf16.msra.mxu0 %v1197
      %1220 = vmatprep.subr.bf16.mxu0 0
      %1221 = vmatpush1.bf16.msra.mxu0 %v1198
      %1222 = vmatprep.subr.bf16.mxu0 0
      %1223 = vmatpush1.bf16.msra.mxu0 %v1199
      %1224 = vmatprep.subr.bf16.mxu0 0
      %1225 = vmatpush1.bf16.msra.mxu0 0
      %1226 = vmatprep.subr.bf16.mxu0 0
      %1227 = vmatpush1.bf16.msra.mxu0 0
      %1228 = vmatprep.subr.bf16.mxu0 0
      %1229 = vmatpush1.bf16.msra.mxu0 0
      %1230 = vmatprep.subr.bf16.mxu0 0
      %1231 = vmatpush1.bf16.msra.mxu0 0
      %1232 = vmatprep.subr.bf16.mxu0 0
      %1233 = vmatpush1.bf16.msra.mxu0 0
      %1234 = vmatprep.subr.bf16.mxu0 0
      %1235 = vmatpush1.bf16.msra.mxu0 0
      %1236 = vmatprep.subr.bf16.mxu0 0
      %1237 = vmatpush1.bf16.msra.mxu0 0
      %1238 = vmatprep.subr.bf16.mxu0 0
      %1239 = vmatpush1.bf16.msra.mxu0 0
      %1240 = vmatprep.mubr.bf16.mxu0 0
      %1241 = vmatmul.mubr.bf16.gmra.mrb[0].mxu0 %v1122
      %v1242 = vpop.f32.mrb[0].mxu0
      %v1243 = vadd.f32 0.0, %v1242
      %v1244 = vpop.f32.mrb[0].mxu0
      %v1245 = vpop.f32.mrb[0].mxu0
      %v1246 = vadd.f32 0.0, %v1245
      %v1247 = vpop.f32.mrb[0].mxu0
      %1248 = vmatprep.mubr.bf16.mxu0 0
      %1249 = vmatmul.mubr.bf16.gmra.mrb[0].mxu0 %v1130
      %v1250 = vpop.f32.mrb[0].mxu0
      %v1251 = vadd.f32 0.0, %v1250
      %v1252 = vpop.f32.mrb[0].mxu0
      %v1253 = vpop.f32.mrb[0].mxu0
      %v1254 = vadd.f32 0.0, %v1253
      %v1255 = vpop.f32.mrb[0].mxu0
      %1256 = vmatprep.mubr.bf16.mxu0 0
      %1257 = vmatmul.mubr.bf16.gmra.mrb[0].mxu0 %v1138
      %v1258 = vpop.f32.mrb[0].mxu0
      %v1259 = vadd.f32 0.0, %v1258
      %v1260 = vpop.f32.mrb[0].mxu0
      %v1261 = vpop.f32.mrb[0].mxu0
      %v1262 = vadd.f32 0.0, %v1261
      %v1263 = vpop.f32.mrb[0].mxu0
      %1264 = vmatprep.mubr.bf16.mxu0 0
      %1265 = vmatmul.mubr.bf16.gmra.mrb[0].mxu0 %v1146
      %v1266 = vpop.f32.mrb[0].mxu0
      %v1267 = vadd.f32 0.0, %v1266
      %v1268 = vpop.f32.mrb[0].mxu0
      %v1269 = vpop.f32.mrb[0].mxu0
      %v1270 = vadd.f32 0.0, %v1269
      %v1271 = vpop.f32.mrb[0].mxu0
      %1272 = vmatprep.mubr.bf16.mxu0 0
      %1273 = vmatmul.mubr.bf16.gmra.mrb[0].mxu0 %v1154
      %v1274 = vpop.f32.mrb[0].mxu0
      %v1275 = vadd.f32 0.0, %v1274
      %v1276 = vpop.f32.mrb[0].mxu0
      %v1277 = vpop.f32.mrb[0].mxu0
      %v1278 = vpop.f32.mrb[0].mxu0
      %1279 = vdwg.mxu0
      %v1280 = vadd.f32 %v1078, %v1243
      %v1281 = vadd.f32 %v1079, %v1246
      %v1282 = vadd.f32 %v1080, %v1251
      %v1283 = vadd.f32 %v1081, %v1254
      %v1284 = vadd.f32 %v1082, %v1259
      %v1285 = vadd.f32 %v1083, %v1262
      %v1286 = vadd.f32 %v1084, %v1267
      %v1287 = vadd.f32 %v1085, %v1270
      %v1288 = vadd.f32 %v1086, %v1275
      %s1289 = scalar_lea.vmem %s4, 256
      %v1290 = vld [vmem:[%s1289] sm:$0xf]
      %v1291 = vld [vmem:[%s1289 + $0x4] sm:$0xf]
      %v1292 = vld [vmem:[%s1289 + $0x8] sm:$0xf]
      %v1293 = vld [vmem:[%s1289 + $0xc] sm:$0xf]
      %v1294 = vld [vmem:[%s1289 + $0x10] sm:$0xf]
      %v1295 = vld [vmem:[%s1289 + $0x14] sm:$0xf]
      %v1296 = vld [vmem:[%s1289 + $0x18] sm:$0xf]
      %v1297 = vld [vmem:[%s1289 + $0x1c] sm:$0xf]
      %v1298 = vld [vmem:[%s1289 + $0x20] sm:$0xf]
      %v1299 = vld [vmem:[%s1289 + $0x24] sm:$0xf]
      %v1300 = vld [vmem:[%s1289 + $0x28] sm:$0xf]
      %v1301 = vld [vmem:[%s1289 + $0x2c] sm:$0xf]
      %v1302 = vld [vmem:[%s1289 + $0x30] sm:$0xf]
      %v1303 = vld [vmem:[%s1289 + $0x34] sm:$0xf]
      %v1304 = vld [vmem:[%s1289 + $0x38] sm:$0xf]
      %v1305 = vld [vmem:[%s1289 + $0x3c] sm:$0xf]
      %v1322 = vunpack.c.l.b16 %v1290
      %v1323 = vunpack.c.l.b16 %v1291
      %v1324 = vunpack.c.l.b16 %v1292
      %v1325 = vunpack.c.l.b16 %v1293
      %v1326 = vunpack.c.l.b16 %v1294
      %v1327 = vunpack.c.l.b16 %v1295
      %v1328 = vunpack.c.l.b16 %v1296
      %v1329 = vunpack.c.l.b16 %v1297
      %v1330 = vunpack.c.l.b16 %v1298
      %v1331 = vunpack.c.l.b16 %v1299
      %v1332 = vunpack.c.l.b16 %v1300
      %v1333 = vunpack.c.l.b16 %v1301
      %v1334 = vunpack.c.l.b16 %v1302
      %v1335 = vunpack.c.l.b16 %v1303
      %v1336 = vunpack.c.l.b16 %v1304
      %v1337 = vunpack.c.l.b16 %v1305
      %v1338 = vpack.c.b16 %v1323, %v1322
      %v1339 = vpack.c.b16 %v1325, %v1324
      %v1340 = vpack.c.b16 %v1327, %v1326
      %v1341 = vpack.c.b16 %v1329, %v1328
      %v1342 = vpack.c.b16 %v1331, %v1330
      %v1343 = vpack.c.b16 %v1333, %v1332
      %v1344 = vpack.c.b16 %v1335, %v1334
      %v1345 = vpack.c.b16 %v1337, %v1336
      %1354 = vmatprep.subr.bf16.mxu0 0
      %1355 = vmatpush1.bf16.msra.mxu0 %v1338
      %1356 = vmatprep.subr.bf16.mxu0 0
      %1357 = vmatpush1.bf16.msra.mxu0 %v1339
      %1358 = vmatprep.subr.bf16.mxu0 0
      %1359 = vmatpush1.bf16.msra.mxu0 %v1340
      %1360 = vmatprep.subr.bf16.mxu0 0
      %1361 = vmatpush1.bf16.msra.mxu0 %v1341
      %1362 = vmatprep.subr.bf16.mxu0 0
      %1363 = vmatpush1.bf16.msra.mxu0 %v1342
      %1364 = vmatprep.subr.bf16.mxu0 0
      %1365 = vmatpush1.bf16.msra.mxu0 %v1343
      %1366 = vmatprep.subr.bf16.mxu0 0
      %1367 = vmatpush1.bf16.msra.mxu0 %v1344
      %1368 = vmatprep.subr.bf16.mxu0 0
      %1369 = vmatpush1.bf16.msra.mxu0 %v1345
      %1370 = vmatprep.subr.bf16.mxu0 0
      %1371 = vmatpush1.bf16.msra.mxu0 0
      %1372 = vmatprep.subr.bf16.mxu0 0
      %1373 = vmatpush1.bf16.msra.mxu0 0
      %1374 = vmatprep.subr.bf16.mxu0 0
      %1375 = vmatpush1.bf16.msra.mxu0 0
      %1376 = vmatprep.subr.bf16.mxu0 0
      %1377 = vmatpush1.bf16.msra.mxu0 0
      %1378 = vmatprep.subr.bf16.mxu0 0
      %1379 = vmatpush1.bf16.msra.mxu0 0
      %1380 = vmatprep.subr.bf16.mxu0 0
      %1381 = vmatpush1.bf16.msra.mxu0 0
      %1382 = vmatprep.subr.bf16.mxu0 0
      %1383 = vmatpush1.bf16.msra.mxu0 0
      %1384 = vmatprep.subr.bf16.mxu0 0
      %1385 = vmatpush1.bf16.msra.mxu0 0
      %1386 = vmatprep.mubr.bf16.mxu0 0
      %1387 = vmatmul.mubr.bf16.gmra.mrb[0].mxu0 %v1088
      %v1388 = vpop.f32.mrb[0].mxu0
      %v1389 = vadd.f32 0.0, %v1388
      %v1390 = vpop.f32.mrb[0].mxu0
      %v1391 = vpop.f32.mrb[0].mxu0
      %v1392 = vadd.f32 0.0, %v1391
      %v1393 = vpop.f32.mrb[0].mxu0
      %1394 = vmatprep.mubr.bf16.mxu0 0
      %1395 = vmatmul.mubr.bf16.gmra.mrb[0].mxu0 %v1089
      %v1396 = vpop.f32.mrb[0].mxu0
      %v1397 = vadd.f32 0.0, %v1396
      %v1398 = vpop.f32.mrb[0].mxu0
      %v1399 = vpop.f32.mrb[0].mxu0
      %v1400 = vadd.f32 0.0, %v1399
      %v1401 = vpop.f32.mrb[0].mxu0
      %1402 = vmatprep.mubr.bf16.mxu0 0
      %1403 = vmatmul.mubr.bf16.gmra.mrb[0].mxu0 %v1090
      %v1404 = vpop.f32.mrb[0].mxu0
      %v1405 = vadd.f32 0.0, %v1404
      %v1406 = vpop.f32.mrb[0].mxu0
      %v1407 = vpop.f32.mrb[0].mxu0
      %v1408 = vadd.f32 0.0, %v1407
      %v1409 = vpop.f32.mrb[0].mxu0
      %1410 = vmatprep.mubr.bf16.mxu0 0
      %1411 = vmatmul.mubr.bf16.gmra.mrb[0].mxu0 %v1091
      %v1412 = vpop.f32.mrb[0].mxu0
      %v1413 = vadd.f32 0.0, %v1412
      %v1414 = vpop.f32.mrb[0].mxu0
      %v1415 = vpop.f32.mrb[0].mxu0
      %v1416 = vadd.f32 0.0, %v1415
      %v1417 = vpop.f32.mrb[0].mxu0
      %1418 = vmatprep.mubr.bf16.mxu0 0
      %1419 = vmatmul.mubr.bf16.gmra.mrb[0].mxu0 %v1092
      %v1420 = vpop.f32.mrb[0].mxu0
      %v1421 = vadd.f32 0.0, %v1420
      %v1422 = vpop.f32.mrb[0].mxu0
      %v1423 = vpop.f32.mrb[0].mxu0
      %v1424 = vpop.f32.mrb[0].mxu0
      %1425 = vdwg.mxu0
      %v1426 = vadd.f32 %v1280, %v1389
      %v1427 = vadd.f32 %v1281, %v1392
      %v1428 = vadd.f32 %v1282, %v1397
      %v1429 = vadd.f32 %v1283, %v1400
      %v1430 = vadd.f32 %v1284, %v1405
      %v1431 = vadd.f32 %v1285, %v1408
      %v1432 = vadd.f32 %v1286, %v1413
      %v1433 = vadd.f32 %v1287, %v1416
      %v1434 = vadd.f32 %v1288, %v1421
      %v1435 = vld [vmem:[#allocation2 + $0x28] sm:$0x1f]
      %s1436 = scalar_lea.vmem %s4, 320
      %v1437 = vld [vmem:[%s1436] sm:$0xf]
      %v1438 = vld [vmem:[%s1436 + $0x4] sm:$0xf]
      %v1439 = vld [vmem:[%s1436 + $0x8] sm:$0xf]
      %v1440 = vld [vmem:[%s1436 + $0xc] sm:$0xf]
      %v1441 = vld [vmem:[%s1436 + $0x10] sm:$0xf]
      %v1442 = vld [vmem:[%s1436 + $0x14] sm:$0xf]
      %v1443 = vld [vmem:[%s1436 + $0x18] sm:$0xf]
      %v1444 = vld [vmem:[%s1436 + $0x1c] sm:$0xf]
      %v1445 = vld [vmem:[%s1436 + $0x20] sm:$0xf]
      %v1446 = vld [vmem:[%s1436 + $0x24] sm:$0xf]
      %v1447 = vld [vmem:[%s1436 + $0x28] sm:$0xf]
      %v1448 = vld [vmem:[%s1436 + $0x2c] sm:$0xf]
      %v1449 = vld [vmem:[%s1436 + $0x30] sm:$0xf]
      %v1450 = vld [vmem:[%s1436 + $0x34] sm:$0xf]
      %v1451 = vld [vmem:[%s1436 + $0x38] sm:$0xf]
      %v1452 = vld [vmem:[%s1436 + $0x3c] sm:$0xf]
      %vm1453 = vsmask.f32 7424
      %v1454 = vrot.slane %v1119, 1
      %v1455 = vor.u32 %v1116, %v1454
      %v1456 = vrot.slane %v1127, 1
      %v1457 = vsel %vm1453, %v1455, %v1456
      %v1458 = vor.u32 %v1124, %v1456
      %v1459 = vrot.slane %v1135, 1
      %v1460 = vsel %vm1453, %v1458, %v1459
      %v1461 = vor.u32 %v1132, %v1459
      %v1462 = vrot.slane %v1143, 1
      %v1463 = vsel %vm1453, %v1461, %v1462
      %v1464 = vor.u32 %v1140, %v1462
      %v1466 = vshll.u32 %v1435, 16
      %v1468 = vrot.slane %v1466, 1
      %v1469 = vsel %vm1453, %v1464, %v1468
      %v1470 = vshrl.u32 %v1435, 16
      %v1472 = vor.u32 %v1470, %v1468
      %v1494 = vunpack.c.l.b16 %v1437
      %v1495 = vunpack.c.l.b16 %v1438
      %v1496 = vunpack.c.l.b16 %v1439
      %v1497 = vunpack.c.l.b16 %v1440
      %v1498 = vunpack.c.l.b16 %v1441
      %v1499 = vunpack.c.l.b16 %v1442
      %v1500 = vunpack.c.l.b16 %v1443
      %v1501 = vunpack.c.l.b16 %v1444
      %v1502 = vunpack.c.l.b16 %v1445
      %v1503 = vunpack.c.l.b16 %v1446
      %v1504 = vunpack.c.l.b16 %v1447
      %v1505 = vunpack.c.l.b16 %v1448
      %v1506 = vunpack.c.l.b16 %v1449
      %v1507 = vunpack.c.l.b16 %v1450
      %v1508 = vunpack.c.l.b16 %v1451
      %v1509 = vunpack.c.l.b16 %v1452
      %v1510 = vpack.c.b16 %v1495, %v1494
      %v1511 = vpack.c.b16 %v1497, %v1496
      %v1512 = vpack.c.b16 %v1499, %v1498
      %v1513 = vpack.c.b16 %v1501, %v1500
      %v1514 = vpack.c.b16 %v1503, %v1502
      %v1515 = vpack.c.b16 %v1505, %v1504
      %v1516 = vpack.c.b16 %v1507, %v1506
      %v1517 = vpack.c.b16 %v1509, %v1508
      %1526 = vmatprep.subr.bf16.mxu0 0
      %1527 = vmatpush1.bf16.msra.mxu0 %v1510
      %1528 = vmatprep.subr.bf16.mxu0 0
      %1529 = vmatpush1.bf16.msra.mxu0 %v1511
      %1530 = vmatprep.subr.bf16.mxu0 0
      %1531 = vmatpush1.bf16.msra.mxu0 %v1512
      %1532 = vmatprep.subr.bf16.mxu0 0
      %1533 = vmatpush1.bf16.msra.mxu0 %v1513
      %1534 = vmatprep.subr.bf16.mxu0 0
      %1535 = vmatpush1.bf16.msra.mxu0 %v1514
      %1536 = vmatprep.subr.bf16.mxu0 0
      %1537 = vmatpush1.bf16.msra.mxu0 %v1515
      %1538 = vmatprep.subr.bf16.mxu0 0
      %1539 = vmatpush1.bf16.msra.mxu0 %v1516
      %1540 = vmatprep.subr.bf16.mxu0 0
      %1541 = vmatpush1.bf16.msra.mxu0 %v1517
      %1542 = vmatprep.subr.bf16.mxu0 0
      %1543 = vmatpush1.bf16.msra.mxu0 0
      %1544 = vmatprep.subr.bf16.mxu0 0
      %1545 = vmatpush1.bf16.msra.mxu0 0
      %1546 = vmatprep.subr.bf16.mxu0 0
      %1547 = vmatpush1.bf16.msra.mxu0 0
      %1548 = vmatprep.subr.bf16.mxu0 0
      %1549 = vmatpush1.bf16.msra.mxu0 0
      %1550 = vmatprep.subr.bf16.mxu0 0
      %1551 = vmatpush1.bf16.msra.mxu0 0
      %1552 = vmatprep.subr.bf16.mxu0 0
      %1553 = vmatpush1.bf16.msra.mxu0 0
      %1554 = vmatprep.subr.bf16.mxu0 0
      %1555 = vmatpush1.bf16.msra.mxu0 0
      %1556 = vmatprep.subr.bf16.mxu0 0
      %1557 = vmatpush1.bf16.msra.mxu0 0
      %1558 = vmatprep.mubr.bf16.mxu0 0
      %1559 = vmatmul.mubr.bf16.gmra.mrb[0].mxu0 %v1457
      %v1560 = vpop.f32.mrb[0].mxu0
      %v1561 = vadd.f32 0.0, %v1560
      %v1562 = vpop.f32.mrb[0].mxu0
      %v1563 = vpop.f32.mrb[0].mxu0
      %v1564 = vadd.f32 0.0, %v1563
      %v1565 = vpop.f32.mrb[0].mxu0
      %1566 = vmatprep.mubr.bf16.mxu0 0
      %1567 = vmatmul.mubr.bf16.gmra.mrb[0].mxu0 %v1460
      %v1568 = vpop.f32.mrb[0].mxu0
      %v1569 = vadd.f32 0.0, %v1568
      %v1570 = vpop.f32.mrb[0].mxu0
      %v1571 = vpop.f32.mrb[0].mxu0
      %v1572 = vadd.f32 0.0, %v1571
      %v1573 = vpop.f32.mrb[0].mxu0
      %1574 = vmatprep.mubr.bf16.mxu0 0
      %1575 = vmatmul.mubr.bf16.gmra.mrb[0].mxu0 %v1463
      %v1576 = vpop.f32.mrb[0].mxu0
      %v1577 = vadd.f32 0.0, %v1576
      %v1578 = vpop.f32.mrb[0].mxu0
      %v1579 = vpop.f32.mrb[0].mxu0
      %v1580 = vadd.f32 0.0, %v1579
      %v1581 = vpop.f32.mrb[0].mxu0
      %1582 = vmatprep.mubr.bf16.mxu0 0
      %1583 = vmatmul.mubr.bf16.gmra.mrb[0].mxu0 %v1469
      %v1584 = vpop.f32.mrb[0].mxu0
      %v1585 = vadd.f32 0.0, %v1584
      %v1586 = vpop.f32.mrb[0].mxu0
      %v1587 = vpop.f32.mrb[0].mxu0
      %v1588 = vadd.f32 0.0, %v1587
      %v1589 = vpop.f32.mrb[0].mxu0
      %1590 = vmatprep.mubr.bf16.mxu0 0
      %1591 = vmatmul.mubr.bf16.gmra.mrb[0].mxu0 %v1472
      %v1592 = vpop.f32.mrb[0].mxu0
      %v1593 = vadd.f32 0.0, %v1592
      %v1594 = vpop.f32.mrb[0].mxu0
      %v1595 = vpop.f32.mrb[0].mxu0
      %v1596 = vpop.f32.mrb[0].mxu0
      %1597 = vdwg.mxu0
      %v1598 = vadd.f32 %v1426, %v1561
      %v1599 = vadd.f32 %v1427, %v1564
      %v1600 = vadd.f32 %v1428, %v1569
      %v1601 = vadd.f32 %v1429, %v1572
      %v1602 = vadd.f32 %v1430, %v1577
      %v1603 = vadd.f32 %v1431, %v1580
      %v1604 = vadd.f32 %v1432, %v1585
      %v1605 = vadd.f32 %v1433, %v1588
      %v1606 = vadd.f32 %v1434, %v1593
      %v1607 = vld [vmem:[#allocation2 + $0x8] sm:$0xf0]
      %v1608 = vld [vmem:[#allocation2 + $0x28] sm:$0xff]
      %s1609 = scalar_lea.vmem %s4, 384
      %v1610 = vld [vmem:[%s1609] sm:$0xf]
      %v1611 = vld [vmem:[%s1609 + $0x4] sm:$0xf]
      %v1612 = vld [vmem:[%s1609 + $0x8] sm:$0xf]
      %v1613 = vld [vmem:[%s1609 + $0xc] sm:$0xf]
      %v1614 = vld [vmem:[%s1609 + $0x10] sm:$0xf]
      %v1615 = vld [vmem:[%s1609 + $0x14] sm:$0xf]
      %v1616 = vld [vmem:[%s1609 + $0x18] sm:$0xf]
      %v1617 = vld [vmem:[%s1609 + $0x1c] sm:$0xf]
      %v1618 = vld [vmem:[%s1609 + $0x20] sm:$0xf]
      %v1619 = vld [vmem:[%s1609 + $0x24] sm:$0xf]
      %v1620 = vld [vmem:[%s1609 + $0x28] sm:$0xf]
      %v1621 = vld [vmem:[%s1609 + $0x2c] sm:$0xf]
      %v1622 = vld [vmem:[%s1609 + $0x30] sm:$0xf]
      %v1623 = vld [vmem:[%s1609 + $0x34] sm:$0xf]
      %v1624 = vld [vmem:[%s1609 + $0x38] sm:$0xf]
      %v1625 = vld [vmem:[%s1609 + $0x3c] sm:$0xf]
      %v1631 = vrot.slane %v1607, 4
      %v1632 = vrot.slane %v1089, 4
      %v1633 = vsel %vm943, %v1631, %v1632
      %v1634 = vrot.slane %v1090, 4
      %v1635 = vsel %vm943, %v1632, %v1634
      %v1636 = vrot.slane %v1091, 4
      %v1637 = vsel %vm943, %v1634, %v1636
      %v1638 = vrot.slane %v1608, 4
      %v1639 = vsel %vm943, %v1636, %v1638
      %v1661 = vunpack.c.l.b16 %v1610
      %v1662 = vunpack.c.l.b16 %v1611
      %v1663 = vunpack.c.l.b16 %v1612
      %v1664 = vunpack.c.l.b16 %v1613
      %v1665 = vunpack.c.l.b16 %v1614
      %v1666 = vunpack.c.l.b16 %v1615
      %v1667 = vunpack.c.l.b16 %v1616
      %v1668 = vunpack.c.l.b16 %v1617
      %v1669 = vunpack.c.l.b16 %v1618
      %v1670 = vunpack.c.l.b16 %v1619
      %v1671 = vunpack.c.l.b16 %v1620
      %v1672 = vunpack.c.l.b16 %v1621
      %v1673 = vunpack.c.l.b16 %v1622
      %v1674 = vunpack.c.l.b16 %v1623
      %v1675 = vunpack.c.l.b16 %v1624
      %v1676 = vunpack.c.l.b16 %v1625
      %v1677 = vpack.c.b16 %v1662, %v1661
      %v1678 = vpack.c.b16 %v1664, %v1663
      %v1679 = vpack.c.b16 %v1666, %v1665
      %v1680 = vpack.c.b16 %v1668, %v1667
      %v1681 = vpack.c.b16 %v1670, %v1669
      %v1682 = vpack.c.b16 %v1672, %v1671
      %v1683 = vpack.c.b16 %v1674, %v1673
      %v1684 = vpack.c.b16 %v1676, %v1675
      %1693 = vmatprep.subr.bf16.mxu0 0
      %1694 = vmatpush1.bf16.msra.mxu0 %v1677
      %1695 = vmatprep.subr.bf16.mxu0 0
      %1696 = vmatpush1.bf16.msra.mxu0 %v1678
      %1697 = vmatprep.subr.bf16.mxu0 0
      %1698 = vmatpush1.bf16.msra.mxu0 %v1679
      %1699 = vmatprep.subr.bf16.mxu0 0
      %1700 = vmatpush1.bf16.msra.mxu0 %v1680
      %1701 = vmatprep.subr.bf16.mxu0 0
      %1702 = vmatpush1.bf16.msra.mxu0 %v1681
      %1703 = vmatprep.subr.bf16.mxu0 0
      %1704 = vmatpush1.bf16.msra.mxu0 %v1682
      %1705 = vmatprep.subr.bf16.mxu0 0
      %1706 = vmatpush1.bf16.msra.mxu0 %v1683
      %1707 = vmatprep.subr.bf16.mxu0 0
      %1708 = vmatpush1.bf16.msra.mxu0 %v1684
      %1709 = vmatprep.subr.bf16.mxu0 0
      %1710 = vmatpush1.bf16.msra.mxu0 0
      %1711 = vmatprep.subr.bf16.mxu0 0
      %1712 = vmatpush1.bf16.msra.mxu0 0
      %1713 = vmatprep.subr.bf16.mxu0 0
      %1714 = vmatpush1.bf16.msra.mxu0 0
      %1715 = vmatprep.subr.bf16.mxu0 0
      %1716 = vmatpush1.bf16.msra.mxu0 0
      %1717 = vmatprep.subr.bf16.mxu0 0
      %1718 = vmatpush1.bf16.msra.mxu0 0
      %1719 = vmatprep.subr.bf16.mxu0 0
      %1720 = vmatpush1.bf16.msra.mxu0 0
      %1721 = vmatprep.subr.bf16.mxu0 0
      %1722 = vmatpush1.bf16.msra.mxu0 0
      %1723 = vmatprep.subr.bf16.mxu0 0
      %1724 = vmatpush1.bf16.msra.mxu0 0
      %1725 = vmatprep.mubr.bf16.mxu0 0
      %1726 = vmatmul.mubr.bf16.gmra.mrb[0].mxu0 %v1633
      %v1727 = vpop.f32.mrb[0].mxu0
      %v1728 = vadd.f32 0.0, %v1727
      %v1729 = vpop.f32.mrb[0].mxu0
      %v1730 = vpop.f32.mrb[0].mxu0
      %v1731 = vadd.f32 0.0, %v1730
      %v1732 = vpop.f32.mrb[0].mxu0
      %1733 = vmatprep.mubr.bf16.mxu0 0
      %1734 = vmatmul.mubr.bf16.gmra.mrb[0].mxu0 %v1635
      %v1735 = vpop.f32.mrb[0].mxu0
      %v1736 = vadd.f32 0.0, %v1735
      %v1737 = vpop.f32.mrb[0].mxu0
      %v1738 = vpop.f32.mrb[0].mxu0
      %v1739 = vadd.f32 0.0, %v1738
      %v1740 = vpop.f32.mrb[0].mxu0
      %1741 = vmatprep.mubr.bf16.mxu0 0
      %1742 = vmatmul.mubr.bf16.gmra.mrb[0].mxu0 %v1637
      %v1743 = vpop.f32.mrb[0].mxu0
      %v1744 = vadd.f32 0.0, %v1743
      %v1745 = vpop.f32.mrb[0].mxu0
      %v1746 = vpop.f32.mrb[0].mxu0
      %v1747 = vadd.f32 0.0, %v1746
      %v1748 = vpop.f32.mrb[0].mxu0
      %1749 = vmatprep.mubr.bf16.mxu0 0
      %1750 = vmatmul.mubr.bf16.gmra.mrb[0].mxu0 %v1639
      %v1751 = vpop.f32.mrb[0].mxu0
      %v1752 = vadd.f32 0.0, %v1751
      %v1753 = vpop.f32.mrb[0].mxu0
      %v1754 = vpop.f32.mrb[0].mxu0
      %v1755 = vadd.f32 0.0, %v1754
      %v1756 = vpop.f32.mrb[0].mxu0
      %1757 = vmatprep.mubr.bf16.mxu0 0
      %1758 = vmatmul.mubr.bf16.gmra.mrb[0].mxu0 %v1638
      %v1759 = vpop.f32.mrb[0].mxu0
      %v1760 = vadd.f32 0.0, %v1759
      %v1761 = vpop.f32.mrb[0].mxu0
      %v1762 = vpop.f32.mrb[0].mxu0
      %v1763 = vpop.f32.mrb[0].mxu0
      %1764 = vdwg.mxu0
      %v1765 = vadd.f32 %v1598, %v1728
      %v1766 = vadd.f32 %v1599, %v1731
      %v1767 = vadd.f32 %v1600, %v1736
      %v1768 = vadd.f32 %v1601, %v1739
      %v1769 = vadd.f32 %v1602, %v1744
      %v1770 = vadd.f32 %v1603, %v1747
      %v1771 = vadd.f32 %v1604, %v1752
      %v1772 = vadd.f32 %v1605, %v1755
      %v1773 = vadd.f32 %v1606, %v1760
      %v1774 = vld [vmem:[#allocation2 + $0x8] sm:$0xf0]
      %v1775 = vld [vmem:[#allocation2 + $0x10] sm:$0xff]
      %v1776 = vld [vmem:[#allocation2 + $0x18] sm:$0xff]
      %v1777 = vld [vmem:[#allocation2 + $0x20] sm:$0xff]
      %v1778 = vld [vmem:[#allocation2 + $0x28] sm:$0xff]
      %v1779 = vld [vmem:[#allocation2 + $0x30] sm:$0x1]
      %s1780 = scalar_lea.vmem %s4, 448
      %v1781 = vld [vmem:[%s1780] sm:$0xf]
      %v1782 = vld [vmem:[%s1780 + $0x4] sm:$0xf]
      %v1783 = vld [vmem:[%s1780 + $0x8] sm:$0xf]
      %v1784 = vld [vmem:[%s1780 + $0xc] sm:$0xf]
      %v1785 = vld [vmem:[%s1780 + $0x10] sm:$0xf]
      %v1786 = vld [vmem:[%s1780 + $0x14] sm:$0xf]
      %v1787 = vld [vmem:[%s1780 + $0x18] sm:$0xf]
      %v1788 = vld [vmem:[%s1780 + $0x1c] sm:$0xf]
      %v1789 = vld [vmem:[%s1780 + $0x20] sm:$0xf]
      %v1790 = vld [vmem:[%s1780 + $0x24] sm:$0xf]
      %v1791 = vld [vmem:[%s1780 + $0x28] sm:$0xf]
      %v1792 = vld [vmem:[%s1780 + $0x2c] sm:$0xf]
      %v1793 = vld [vmem:[%s1780 + $0x30] sm:$0xf]
      %v1794 = vld [vmem:[%s1780 + $0x34] sm:$0xf]
      %v1795 = vld [vmem:[%s1780 + $0x38] sm:$0xf]
      %v1796 = vld [vmem:[%s1780 + $0x3c] sm:$0xf]
      %vm1797 = vsmask.f32 3328
      %v1799 = vshrl.u32 %v1774, 16
      %v1801 = vrot.slane %v1799, 4
      %v1802 = vshll.u32 %v1774, 16
      %v1804 = vrot.slane %v1802, 5
      %v1805 = vor.u32 %v1801, %v1804
      %v1807 = vshrl.u32 %v1775, 16
      %v1809 = vrot.slane %v1807, 4
      %v1810 = vshll.u32 %v1775, 16
      %v1812 = vrot.slane %v1810, 5
      %v1813 = vor.u32 %v1809, %v1812
      %v1814 = vsel %vm1797, %v1805, %v1813
      %v1816 = vshrl.u32 %v1776, 16
      %v1818 = vrot.slane %v1816, 4
      %v1819 = vshll.u32 %v1776, 16
      %v1821 = vrot.slane %v1819, 5
      %v1822 = vor.u32 %v1818, %v1821
      %v1823 = vsel %vm1797, %v1813, %v1822
      %v1825 = vshrl.u32 %v1777, 16
      %v1827 = vrot.slane %v1825, 4
      %v1828 = vshll.u32 %v1777, 16
      %v1830 = vrot.slane %v1828, 5
      %v1831 = vor.u32 %v1827, %v1830
      %v1832 = vsel %vm1797, %v1822, %v1831
      %v1834 = vshrl.u32 %v1778, 16
      %v1836 = vrot.slane %v1834, 4
      %v1837 = vshll.u32 %v1778, 16
      %v1839 = vrot.slane %v1837, 5
      %v1840 = vor.u32 %v1836, %v1839
      %v1841 = vsel %vm1797, %v1831, %v1840
      %v1843 = vshll.u32 %v1779, 16
      %v1845 = vrot.slane %v1843, 5
      %v1846 = vsel %vm1797, %v1840, %v1845
      %v1868 = vunpack.c.l.b16 %v1781
      %v1869 = vunpack.c.l.b16 %v1782
      %v1870 = vunpack.c.l.b16 %v1783
      %v1871 = vunpack.c.l.b16 %v1784
      %v1872 = vunpack.c.l.b16 %v1785
      %v1873 = vunpack.c.l.b16 %v1786
      %v1874 = vunpack.c.l.b16 %v1787
      %v1875 = vunpack.c.l.b16 %v1788
      %v1876 = vunpack.c.l.b16 %v1789
      %v1877 = vunpack.c.l.b16 %v1790
      %v1878 = vunpack.c.l.b16 %v1791
      %v1879 = vunpack.c.l.b16 %v1792
      %v1880 = vunpack.c.l.b16 %v1793
      %v1881 = vunpack.c.l.b16 %v1794
      %v1882 = vunpack.c.l.b16 %v1795
      %v1883 = vunpack.c.l.b16 %v1796
      %v1884 = vpack.c.b16 %v1869, %v1868
      %v1885 = vpack.c.b16 %v1871, %v1870
      %v1886 = vpack.c.b16 %v1873, %v1872
      %v1887 = vpack.c.b16 %v1875, %v1874
      %v1888 = vpack.c.b16 %v1877, %v1876
      %v1889 = vpack.c.b16 %v1879, %v1878
      %v1890 = vpack.c.b16 %v1881, %v1880
      %v1891 = vpack.c.b16 %v1883, %v1882
      %1900 = vmatprep.subr.bf16.mxu0 0
      %1901 = vmatpush1.bf16.msra.mxu0 %v1884
      %1902 = vmatprep.subr.bf16.mxu0 0
      %1903 = vmatpush1.bf16.msra.mxu0 %v1885
      %1904 = vmatprep.subr.bf16.mxu0 0
      %1905 = vmatpush1.bf16.msra.mxu0 %v1886
      %1906 = vmatprep.subr.bf16.mxu0 0
      %1907 = vmatpush1.bf16.msra.mxu0 %v1887
      %1908 = vmatprep.subr.bf16.mxu0 0
      %1909 = vmatpush1.bf16.msra.mxu0 %v1888
      %1910 = vmatprep.subr.bf16.mxu0 0
      %1911 = vmatpush1.bf16.msra.mxu0 %v1889
      %1912 = vmatprep.subr.bf16.mxu0 0
      %1913 = vmatpush1.bf16.msra.mxu0 %v1890
      %1914 = vmatprep.subr.bf16.mxu0 0
      %1915 = vmatpush1.bf16.msra.mxu0 %v1891
      %1916 = vmatprep.subr.bf16.mxu0 0
      %1917 = vmatpush1.bf16.msra.mxu0 0
      %1918 = vmatprep.subr.bf16.mxu0 0
      %1919 = vmatpush1.bf16.msra.mxu0 0
      %1920 = vmatprep.subr.bf16.mxu0 0
      %1921 = vmatpush1.bf16.msra.mxu0 0
      %1922 = vmatprep.subr.bf16.mxu0 0
      %1923 = vmatpush1.bf16.msra.mxu0 0
      %1924 = vmatprep.subr.bf16.mxu0 0
      %1925 = vmatpush1.bf16.msra.mxu0 0
      %1926 = vmatprep.subr.bf16.mxu0 0
      %1927 = vmatpush1.bf16.msra.mxu0 0
      %1928 = vmatprep.subr.bf16.mxu0 0
      %1929 = vmatpush1.bf16.msra.mxu0 0
      %1930 = vmatprep.subr.bf16.mxu0 0
      %1931 = vmatpush1.bf16.msra.mxu0 0
      %1932 = vmatprep.mubr.bf16.mxu0 0
      %1933 = vmatmul.mubr.bf16.gmra.mrb[0].mxu0 %v1814
      %v1934 = vpop.f32.mrb[0].mxu0
      %v1935 = vadd.f32 0.0, %v1934
      %v1936 = vpop.f32.mrb[0].mxu0
      %v1937 = vpop.f32.mrb[0].mxu0
      %v1938 = vadd.f32 0.0, %v1937
      %v1939 = vpop.f32.mrb[0].mxu0
      %1940 = vmatprep.mubr.bf16.mxu0 0
      %1941 = vmatmul.mubr.bf16.gmra.mrb[0].mxu0 %v1823
      %v1942 = vpop.f32.mrb[0].mxu0
      %v1943 = vadd.f32 0.0, %v1942
      %v1944 = vpop.f32.mrb[0].mxu0
      %v1945 = vpop.f32.mrb[0].mxu0
      %v1946 = vadd.f32 0.0, %v1945
      %v1947 = vpop.f32.mrb[0].mxu0
      %1948 = vmatprep.mubr.bf16.mxu0 0
      %1949 = vmatmul.mubr.bf16.gmra.mrb[0].mxu0 %v1832
      %v1950 = vpop.f32.mrb[0].mxu0
      %v1951 = vadd.f32 0.0, %v1950
      %v1952 = vpop.f32.mrb[0].mxu0
      %v1953 = vpop.f32.mrb[0].mxu0
      %v1954 = vadd.f32 0.0, %v1953
      %v1955 = vpop.f32.mrb[0].mxu0
      %1956 = vmatprep.mubr.bf16.mxu0 0
      %1957 = vmatmul.mubr.bf16.gmra.mrb[0].mxu0 %v1841
      %v1958 = vpop.f32.mrb[0].mxu0
      %v1959 = vadd.f32 0.0, %v1958
      %v1960 = vpop.f32.mrb[0].mxu0
      %v1961 = vpop.f32.mrb[0].mxu0
      %v1962 = vadd.f32 0.0, %v1961
      %v1963 = vpop.f32.mrb[0].mxu0
      %1964 = vmatprep.mubr.bf16.mxu0 0
      %1965 = vmatmul.mubr.bf16.gmra.mrb[0].mxu0 %v1846
      %v1966 = vpop.f32.mrb[0].mxu0
      %v1967 = vadd.f32 0.0, %v1966
      %v1968 = vpop.f32.mrb[0].mxu0
      %v1969 = vpop.f32.mrb[0].mxu0
      %v1970 = vpop.f32.mrb[0].mxu0
      %1971 = vdwg.mxu0
      %v1972 = vadd.f32 %v1765, %v1935
      %v1973 = vadd.f32 %v1766, %v1938
      %v1974 = vadd.f32 %v1767, %v1943
      %v1975 = vadd.f32 %v1768, %v1946
      %v1976 = vadd.f32 %v1769, %v1951
      %v1977 = vadd.f32 %v1770, %v1954
      %v1978 = vadd.f32 %v1771, %v1959
      %v1979 = vadd.f32 %v1772, %v1962
      %v1980 = vadd.f32 %v1773, %v1967
      %v1981 = vld [vmem:[#allocation2 + $0x8] sm:$0xe0]
      %s1982 = scalar_lea.vmem %s4, 512
      %v1983 = vld [vmem:[%s1982] sm:$0xf]
      %v1984 = vld [vmem:[%s1982 + $0x4] sm:$0xf]
      %v1985 = vld [vmem:[%s1982 + $0x8] sm:$0xf]
      %v1986 = vld [vmem:[%s1982 + $0xc] sm:$0xf]
      %v1987 = vld [vmem:[%s1982 + $0x10] sm:$0xf]
      %v1988 = vld [vmem:[%s1982 + $0x14] sm:$0xf]
      %v1989 = vld [vmem:[%s1982 + $0x18] sm:$0xf]
      %v1990 = vld [vmem:[%s1982 + $0x1c] sm:$0xf]
      %v1991 = vld [vmem:[%s1982 + $0x20] sm:$0xf]
      %v1992 = vld [vmem:[%s1982 + $0x24] sm:$0xf]
      %v1993 = vld [vmem:[%s1982 + $0x28] sm:$0xf]
      %v1994 = vld [vmem:[%s1982 + $0x2c] sm:$0xf]
      %v1995 = vld [vmem:[%s1982 + $0x30] sm:$0xf]
      %v1996 = vld [vmem:[%s1982 + $0x34] sm:$0xf]
      %v1997 = vld [vmem:[%s1982 + $0x38] sm:$0xf]
      %v1998 = vld [vmem:[%s1982 + $0x3c] sm:$0xf]
      %vm2005 = vcmask 1042432
      %v2006 = vrot.slane %v1981, 5
      %v2007 = vrot.slane %v1775, 5
      %v2008 = vsel %vm2005, %v2006, %v2007
      %v2009 = vrot.slane %v1776, 5
      %v2010 = vsel %vm2005, %v2007, %v2009
      %v2011 = vrot.slane %v1777, 5
      %v2012 = vsel %vm2005, %v2009, %v2011
      %v2013 = vrot.slane %v1778, 5
      %v2014 = vsel %vm2005, %v2011, %v2013
      %v2015 = vrot.slane %v1779, 5
      %v2016 = vsel %vm2005, %v2013, %v2015
      %v2038 = vunpack.c.l.b16 %v1983
      %v2039 = vunpack.c.l.b16 %v1984
      %v2040 = vunpack.c.l.b16 %v1985
      %v2041 = vunpack.c.l.b16 %v1986
      %v2042 = vunpack.c.l.b16 %v1987
      %v2043 = vunpack.c.l.b16 %v1988
      %v2044 = vunpack.c.l.b16 %v1989
      %v2045 = vunpack.c.l.b16 %v1990
      %v2046 = vunpack.c.l.b16 %v1991
      %v2047 = vunpack.c.l.b16 %v1992
      %v2048 = vunpack.c.l.b16 %v1993
      %v2049 = vunpack.c.l.b16 %v1994
      %v2050 = vunpack.c.l.b16 %v1995
      %v2051 = vunpack.c.l.b16 %v1996
      %v2052 = vunpack.c.l.b16 %v1997
      %v2053 = vunpack.c.l.b16 %v1998
      %v2054 = vpack.c.b16 %v2039, %v2038
      %v2055 = vpack.c.b16 %v2041, %v2040
      %v2056 = vpack.c.b16 %v2043, %v2042
      %v2057 = vpack.c.b16 %v2045, %v2044
      %v2058 = vpack.c.b16 %v2047, %v2046
      %v2059 = vpack.c.b16 %v2049, %v2048
      %v2060 = vpack.c.b16 %v2051, %v2050
      %v2061 = vpack.c.b16 %v2053, %v2052
      %2070 = vmatprep.subr.bf16.mxu0 0
      %2071 = vmatpush1.bf16.msra.mxu0 %v2054
      %2072 = vmatprep.subr.bf16.mxu0 0
      %2073 = vmatpush1.bf16.msra.mxu0 %v2055
      %2074 = vmatprep.subr.bf16.mxu0 0
      %2075 = vmatpush1.bf16.msra.mxu0 %v2056
      %2076 = vmatprep.subr.bf16.mxu0 0
      %2077 = vmatpush1.bf16.msra.mxu0 %v2057
      %2078 = vmatprep.subr.bf16.mxu0 0
      %2079 = vmatpush1.bf16.msra.mxu0 %v2058
      %2080 = vmatprep.subr.bf16.mxu0 0
      %2081 = vmatpush1.bf16.msra.mxu0 %v2059
      %2082 = vmatprep.subr.bf16.mxu0 0
      %2083 = vmatpush1.bf16.msra.mxu0 %v2060
      %2084 = vmatprep.subr.bf16.mxu0 0
      %2085 = vmatpush1.bf16.msra.mxu0 %v2061
      %2086 = vmatprep.subr.bf16.mxu0 0
      %2087 = vmatpush1.bf16.msra.mxu0 0
      %2088 = vmatprep.subr.bf16.mxu0 0
      %2089 = vmatpush1.bf16.msra.mxu0 0
      %2090 = vmatprep.subr.bf16.mxu0 0
      %2091 = vmatpush1.bf16.msra.mxu0 0
      %2092 = vmatprep.subr.bf16.mxu0 0
      %2093 = vmatpush1.bf16.msra.mxu0 0
      %2094 = vmatprep.subr.bf16.mxu0 0
      %2095 = vmatpush1.bf16.msra.mxu0 0
      %2096 = vmatprep.subr.bf16.mxu0 0
      %2097 = vmatpush1.bf16.msra.mxu0 0
      %2098 = vmatprep.subr.bf16.mxu0 0
      %2099 = vmatpush1.bf16.msra.mxu0 0
      %2100 = vmatprep.subr.bf16.mxu0 0
      %2101 = vmatpush1.bf16.msra.mxu0 0
      %2102 = vmatprep.mubr.bf16.mxu0 0
      %2103 = vmatmul.mubr.bf16.gmra.mrb[0].mxu0 %v2008
      %v2104 = vpop.f32.mrb[0].mxu0
      %v2105 = vadd.f32 0.0, %v2104
      %v2106 = vpop.f32.mrb[0].mxu0
      %v2107 = vpop.f32.mrb[0].mxu0
      %v2108 = vadd.f32 0.0, %v2107
      %v2109 = vpop.f32.mrb[0].mxu0
      %2110 = vmatprep.mubr.bf16.mxu0 0
      %2111 = vmatmul.mubr.bf16.gmra.mrb[0].mxu0 %v2010
      %v2112 = vpop.f32.mrb[0].mxu0
      %v2113 = vadd.f32 0.0, %v2112
      %v2114 = vpop.f32.mrb[0].mxu0
      %v2115 = vpop.f32.mrb[0].mxu0
      %v2116 = vadd.f32 0.0, %v2115
      %v2117 = vpop.f32.mrb[0].mxu0
      %2118 = vmatprep.mubr.bf16.mxu0 0
      %2119 = vmatmul.mubr.bf16.gmra.mrb[0].mxu0 %v2012
      %v2120 = vpop.f32.mrb[0].mxu0
      %v2121 = vadd.f32 0.0, %v2120
      %v2122 = vpop.f32.mrb[0].mxu0
      %v2123 = vpop.f32.mrb[0].mxu0
      %v2124 = vadd.f32 0.0, %v2123
      %v2125 = vpop.f32.mrb[0].mxu0
      %2126 = vmatprep.mubr.bf16.mxu0 0
      %2127 = vmatmul.mubr.bf16.gmra.mrb[0].mxu0 %v2014
      %v2128 = vpop.f32.mrb[0].mxu0
      %v2129 = vadd.f32 0.0, %v2128
      %v2130 = vpop.f32.mrb[0].mxu0
      %v2131 = vpop.f32.mrb[0].mxu0
      %v2132 = vadd.f32 0.0, %v2131
      %v2133 = vpop.f32.mrb[0].mxu0
      %2134 = vmatprep.mubr.bf16.mxu0 0
      %2135 = vmatmul.mubr.bf16.gmra.mrb[0].mxu0 %v2016
      %v2136 = vpop.f32.mrb[0].mxu0
      %v2137 = vadd.f32 0.0, %v2136
      %v2138 = vpop.f32.mrb[0].mxu0
      %v2139 = vpop.f32.mrb[0].mxu0
      %v2140 = vpop.f32.mrb[0].mxu0
      %2141 = vdwg.mxu0
      %v2142 = vadd.f32 %v1972, %v2105
      %v2143 = vadd.f32 %v1973, %v2108
      %v2144 = vadd.f32 %v1974, %v2113
      %v2145 = vadd.f32 %v1975, %v2116
      %v2146 = vadd.f32 %v1976, %v2121
      %v2147 = vadd.f32 %v1977, %v2124
      %v2148 = vadd.f32 %v1978, %v2129
      %v2149 = vadd.f32 %v1979, %v2132
      %v2150 = vadd.f32 %v1980, %v2137
      %v2151 = vpack.c.bf16 %v2143, %v2142
      %v2152 = vpack.c.bf16 %v2145, %v2144
      %v2153 = vpack.c.bf16 %v2147, %v2146
      %v2154 = vpack.c.bf16 %v2149, %v2148
      %v2155 = vpack.c.bf16 %v2150, %v2150
      %v2161 = vunpack.c.l.b16 %v2151
      %v2162 = vunpack.c.h.b16 %v2151
      %v2163 = vunpack.c.l.b16 %v2152
      %v2164 = vunpack.c.h.b16 %v2152
      %v2165 = vunpack.c.l.b16 %v2153
      %v2166 = vunpack.c.h.b16 %v2153
      %v2167 = vunpack.c.l.b16 %v2154
      %v2168 = vunpack.c.h.b16 %v2154
      %v2169 = vunpack.c.l.b16 %v2155
      %v2170 = vpack.c.b16 %v2161, %v2161
      %v2171 = vpack.c.b16 %v2162, %v2162
      %v2172 = vpack.c.b16 %v2163, %v2163
      %v2173 = vpack.c.b16 %v2164, %v2164
      %v2174 = vpack.c.b16 %v2165, %v2165
      %v2175 = vpack.c.b16 %v2166, %v2166
      %v2176 = vpack.c.b16 %v2167, %v2167
      %v2177 = vpack.c.b16 %v2168, %v2168
      %v2178 = vpack.c.b16 %v2169, %v2169
      %2188 = vst [vmem:[%s258] sm:$0xf] %v2170
      %2189 = vst [vmem:[%s258 + $0x4] sm:$0xf] %v2171
      %2190 = vst [vmem:[%s258 + $0x8] sm:$0xf] %v2172
      %2191 = vst [vmem:[%s258 + $0xc] sm:$0xf] %v2173
      %2192 = vst [vmem:[%s258 + $0x10] sm:$0xf] %v2174
      %2193 = vst [vmem:[%s258 + $0x14] sm:$0xf] %v2175
      %2194 = vst [vmem:[%s258 + $0x18] sm:$0xf] %v2176
      %2195 = vst [vmem:[%s258 + $0x1c] sm:$0xf] %v2177
      %2196 = vst [vmem:[%s258 + $0x20] sm:$0xf] %v2178
      %v2197 = vsel %vm543, %v2142, 0.0
      %v2198 = vsel %vm544, %v2143, 0.0
      %v2199 = vsel %vm545, %v2144, 0.0
      %v2200 = vsel %vm546, %v2145, 0.0
      %v2201 = vsel %vm547, %v2146, 0.0
      %v2202 = vsel %vm548, %v2147, 0.0
      %v2203 = vsel %vm549, %v2148, 0.0
      %v2204 = vsel %vm550, %v2149, 0.0
      %v2205 = vsel %vm551, %v2150, 0.0
      %v2206 = vadd.f32 %v2197, %v2198
      %v2207 = vadd.f32 %v2206, %v2199
      %v2208 = vadd.f32 %v2207, %v2200
      %v2209 = vadd.f32 %v2208, %v2201
      %v2210 = vadd.f32 %v2209, %v2202
      %v2211 = vadd.f32 %v2210, %v2203
      %v2212 = vadd.f32 %v2211, %v2204
      %v2213 = vadd.f32 %v2212, %v2205
      %v2214 = vrot.slane %v2213, 4
      %v2215 = vadd.f32 %v2213, %v2214
      %v2216 = vrot.slane %v2215, 2
      %v2217 = vadd.f32 %v2215, %v2216
      %v2218 = vrot.slane %v2217, 1
      %v2219 = vadd.f32 %v2217, %v2218
      %v2220 = vadd.f32 %v2219, 0.0
      %v2221 = vmul.f32 %v2197, %v2197
      %v2222 = vmul.f32 %v2198, %v2198
      %v2223 = vmul.f32 %v2199, %v2199
      %v2224 = vmul.f32 %v2200, %v2200
      %v2225 = vmul.f32 %v2201, %v2201
      %v2226 = vmul.f32 %v2202, %v2202
      %v2227 = vmul.f32 %v2203, %v2203
      %v2228 = vmul.f32 %v2204, %v2204
      %v2229 = vmul.f32 %v2205, %v2205
      %v2230 = vadd.f32 %v2221, %v2222
      %v2231 = vadd.f32 %v2230, %v2223
      %v2232 = vadd.f32 %v2231, %v2224
      %v2233 = vadd.f32 %v2232, %v2225
      %v2234 = vadd.f32 %v2233, %v2226
      %v2235 = vadd.f32 %v2234, %v2227
      %v2236 = vadd.f32 %v2235, %v2228
      %v2237 = vadd.f32 %v2236, %v2229
      %v2238 = vrot.slane %v2237, 4
      %v2239 = vadd.f32 %v2237, %v2238
      %v2240 = vrot.slane %v2239, 2
      %v2241 = vadd.f32 %v2239, %v2240
      %v2242 = vrot.slane %v2241, 1
      %v2243 = vadd.f32 %v2241, %v2242
      %v2244 = vadd.f32 %v2243, 0.0
      %vm2245 = vcmask 1040384
      %v2246 = vsel %vm2245, %v2220, %v2244
      %vm2247 = vcmask 1041408
      %v2248 = vsel %vm2247, %v2246, 0.0
      %2249 = vst [vmem:[%s262] sm:$0xff] %v2248
      %p2250 = scmp.lt.s32.totalorder %s18, 1
      %s2251 = scalar_select %p2250, %s18, 1
      %s2252 = smul.addr %s2251, 9
      %s2253 = smul.addr %s2252, 4
      %s2254 = scalar_lea.vmem %s5, %s2253
      %p2255 = scmp.lt.s32.totalorder %s18, 1
      %s2256 = scalar_select %p2255, %s18, 1
      %s2257 = smul.addr %s2256, 8
      %s2258 = scalar_lea.vmem %s6, %s2257
      // Predicated region
      $region41: #{shortcut_resblock_forward.4} parent=39 // pred_check
        %p2259 = pneg %p146
      $region42: #{shortcut_resblock_forward.4} parent=39 // pred_check_branch
        %2261 = sbr.rel (%p2259) target = $region44
      $region43: #{shortcut_resblock_forward.4} parent=39 // pred_region
        _
      $region44: #{shortcut_resblock_forward.4} parent=39 // pred_fallthru
        _
      // Predicated region
      $region45: #{shortcut_resblock_forward.4} parent=39 // pred_check
        %p2262 = pneg %p172
      $region46: #{shortcut_resblock_forward.4} parent=39 // pred_check_branch
        %2264 = sbr.rel (%p2262) target = $region48
      $region47: #{shortcut_resblock_forward.4} parent=39 // pred_region
        _
      $region48: #{shortcut_resblock_forward.4} parent=39 // pred_fallthru
        _
    $region40: #{shortcut_resblock_forward.4} parent=5 // pred_fallthru
      _
    %p2265 = scmp.le.s32.totalorder 2, %s13
    // Predicated region
    $region49: #{shortcut_resblock_forward.4} parent=5 // pred_check
      %p2266 = pneg %p2265
    $region50: #{shortcut_resblock_forward.4} parent=5 // pred_check_branch
      %2268 = sbr.rel (%p2266) target = $region52
    $region51: #{shortcut_resblock_forward.4} parent=5 // pred_region
      %s2269 = ssub.s32 %s13, 2
      // Predicated region
      $region53: #{shortcut_resblock_forward.4} parent=51 // pred_check
        %p2270 = pneg %p152
      $region54: #{shortcut_resblock_forward.4} parent=51 // pred_check_branch
        %2272 = sbr.rel (%p2270) target = $region56
      $region55: #{shortcut_resblock_forward.4} parent=51 // pred_region
        %p2273 = scmp.lt.s32.totalorder %s19, 1
        %s2274 = scalar_select %p2273, %s19, 1
        %s2275 = smul.addr %s2274, 9
        %s2276 = smul.addr %s2275, 4
        %s2277 = scalar_lea.vmem %s5, %s2276
      $region56: #{shortcut_resblock_forward.4} parent=51 // pred_fallthru
        _
      // Predicated region
      $region57: #{shortcut_resblock_forward.4} parent=51 // pred_check
        %p2278 = pneg %p178
      $region58: #{shortcut_resblock_forward.4} parent=51 // pred_check_branch
        %2280 = sbr.rel (%p2278) target = $region60
      $region59: #{shortcut_resblock_forward.4} parent=51 // pred_region
        %p2281 = scmp.lt.s32.totalorder %s19, 1
        %s2282 = scalar_select %p2281, %s19, 1
        %s2283 = smul.addr %s2282, 8
        %s2284 = scalar_lea.vmem %s6, %s2283
      $region60: #{shortcut_resblock_forward.4} parent=51 // pred_fallthru
        _
    $region52: #{shortcut_resblock_forward.4} parent=5 // pred_fallthru
      _
  $region6: #{shortcut_resblock_forward.4} parent=0 // loop_footer
    %s17 = sadd.s32 1, %s13
  $region7: #{shortcut_resblock_forward.4} parent=0 // loop_footer_branch
    %12 = sbr.rel target = $region3
  $region8: #{shortcut_resblock_forward.4} parent=0 // loop_exit
    _

// kernel: shortcut_resblock_forward.3
$region0: #{shortcut_resblock_forward.3}
  #allocation0 [shape = 'u32[]', space=smem, size = 0x4, offset = 0x4, fixed_abs, tag = 'smem constant byte address 0x4 - core index']
  #allocation1 [shape = 'u32[144,128]{1,0:T(1,128)}', space=vmem, size = 0x12000, scoped, tag = 'internal scratch']
  %s0 = inlined_call_operand.vmem [shape: bf16[2,96,128], index: 0, kind: input, shape index: {}]
  %s1 = inlined_call_operand.vmem [shape: bf16[2,96,128], index: 1, kind: input, shape index: {}]
  %s2 = inlined_call_operand.vmem [shape: bf16[2,96,128], index: 2, kind: input, shape index: {}]
  %s3 = inlined_call_operand.vmem [shape: bf16[2,96,128], index: 3, kind: input, shape index: {}]
  %s4 = inlined_call_operand.vmem [shape: bf16[128,128], index: 4, kind: input, shape index: {}]
  %s5 = inlined_call_operand.vmem [shape: bf16[9,128,128], index: 5, kind: input, shape index: {}]
  %s6 = inlined_call_operand.vmem [shape: bf16[2,72,128], index: 6, kind: output, shape index: {0}]
  %s7 = inlined_call_operand.vmem [shape: bf16[2,72,128], index: 7, kind: output, shape index: {1}]
  %s8 = inlined_call_operand.vmem [shape: f32[2,8,128], index: 8, kind: output, shape index: {2}]
  %9 = xla_tuple %s6, %s7, %s8
  %s10 = sld [smem:[#allocation0]]
  $region73: #{shortcut_resblock_forward.3} parent=0
    _
  %s12 = ssub.s32 1, %s10
  %s13 = scalar_select 0, %s12, %s10
  loop: start=0, step=1, limit=4
  $region2: #{shortcut_resblock_forward.3} parent=0 // loop_pre_header
    _
  $region3: #{shortcut_resblock_forward.3} parent=0 // loop_header
    %s15 = sphi 0, %s19
    %p16 = scmp.ge.s32.totalorder %s15, 4
    %s25 = sphi 0, %s27
    %s28 = sphi 0, %s25
    %s29 = sphi 0, %s28
    %s45 = sphi 0, %s29
    %s51 = sphi 0, %s53
    %s54 = sphi 0, %s51
    %s55 = sphi 0, %s54
    %s71 = sphi 0, %s55
    %s77 = sphi 0, %s79
    %s80 = sphi 0, %s77
    %s81 = sphi 0, %s80
    %s97 = sphi 0, %s81
    %s103 = sphi 0, %s105
    %s106 = sphi 0, %s103
    %s107 = sphi 0, %s106
    %s123 = sphi 0, %s107
    %s127 = sphi 0, %s127
    %s129 = sphi 0, %s127
    %s130 = sphi 0, %s129
    %s144 = sphi 0, %s130
    %s148 = sphi 0, %s148
    %s150 = sphi 0, %s148
    %s151 = sphi 0, %s150
    %s165 = sphi 0, %s151
    %s171 = sphi 0, %s173
    %s174 = sphi 0, %s171
    %s175 = sphi 0, %s174
    %s191 = sphi 0, %s175
    %s197 = sphi 0, %s199
    %s200 = sphi 0, %s197
    %s201 = sphi 0, %s200
    %s217 = sphi 0, %s201
    %s223 = sphi 0, %s225
    %s226 = sphi 0, %s223
    %s227 = sphi 0, %s226
    %s243 = sphi 0, %s227
  $region4: #{shortcut_resblock_forward.3} parent=0 // loop_header_branch
    %18 = sbr.rel (%p16) target = $region8
  $region5: #{shortcut_resblock_forward.3} parent=0 // loop_body
    %s20 = ssub.s32 %s15, 1
    %s21 = ssub.s32 %s15, 2
    %s22 = sadd.s32 %s15, 1
    %s23 = ssub.s32 %s15, %s22
    %p24 = scmp.eq.s32.totalorder %s23, 0
    %s26 = sadd.s32 %s25, 1
    %s27 = scalar_select %p24, %s25, %s26
    %p30 = pneg %p24
    %p31 = scmp.eq.s32.totalorder %s15, 1
    %p32 = por %p30, %p31
    %p33 = scmp.ne.s32.totalorder %s25, %s28
    %p34 = scmp.eq.s32.totalorder %s15, 0
    %p35 = por %p33, %p34
    %p36 = scmp.ne.s32.totalorder %s25, %s28
    %p37 = scmp.eq.s32.totalorder %s20, 1
    %p38 = por %p36, %p37
    %p39 = scmp.ne.s32.totalorder %s28, %s29
    %p40 = scmp.eq.s32.totalorder %s20, 0
    %p41 = por %p39, %p40
    %p42 = scmp.ne.s32.totalorder %s28, %s29
    %p43 = scmp.eq.s32.totalorder %s21, 1
    %p44 = por %p42, %p43
    %p46 = scmp.ne.s32.totalorder %s29, %s45
    %p47 = scmp.eq.s32.totalorder %s21, 0
    %p48 = por %p46, %p47
    %s49 = ssub.s32 %s15, %s22
    %p50 = scmp.eq.s32.totalorder %s49, 0
    %s52 = sadd.s32 %s51, 1
    %s53 = scalar_select %p50, %s51, %s52
    %p56 = pneg %p50
    %p57 = scmp.eq.s32.totalorder %s15, 1
    %p58 = por %p56, %p57
    %p59 = scmp.ne.s32.totalorder %s51, %s54
    %p60 = scmp.eq.s32.totalorder %s15, 0
    %p61 = por %p59, %p60
    %p62 = scmp.ne.s32.totalorder %s51, %s54
    %p63 = scmp.eq.s32.totalorder %s20, 1
    %p64 = por %p62, %p63
    %p65 = scmp.ne.s32.totalorder %s54, %s55
    %p66 = scmp.eq.s32.totalorder %s20, 0
    %p67 = por %p65, %p66
    %p68 = scmp.ne.s32.totalorder %s54, %s55
    %p69 = scmp.eq.s32.totalorder %s21, 1
    %p70 = por %p68, %p69
    %p72 = scmp.ne.s32.totalorder %s55, %s71
    %p73 = scmp.eq.s32.totalorder %s21, 0
    %p74 = por %p72, %p73
    %s75 = ssub.s32 %s15, %s22
    %p76 = scmp.eq.s32.totalorder %s75, 0
    %s78 = sadd.s32 %s77, 1
    %s79 = scalar_select %p76, %s77, %s78
    %p82 = pneg %p76
    %p83 = scmp.eq.s32.totalorder %s15, 1
    %p84 = por %p82, %p83
    %p85 = scmp.ne.s32.totalorder %s77, %s80
    %p86 = scmp.eq.s32.totalorder %s15, 0
    %p87 = por %p85, %p86
    %p88 = scmp.ne.s32.totalorder %s77, %s80
    %p89 = scmp.eq.s32.totalorder %s20, 1
    %p90 = por %p88, %p89
    %p91 = scmp.ne.s32.totalorder %s80, %s81
    %p92 = scmp.eq.s32.totalorder %s20, 0
    %p93 = por %p91, %p92
    %p94 = scmp.ne.s32.totalorder %s80, %s81
    %p95 = scmp.eq.s32.totalorder %s21, 1
    %p96 = por %p94, %p95
    %p98 = scmp.ne.s32.totalorder %s81, %s97
    %p99 = scmp.eq.s32.totalorder %s21, 0
    %p100 = por %p98, %p99
    %s101 = ssub.s32 %s15, %s22
    %p102 = scmp.eq.s32.totalorder %s101, 0
    %s104 = sadd.s32 %s103, 1
    %s105 = scalar_select %p102, %s103, %s104
    %p108 = pneg %p102
    %p109 = scmp.eq.s32.totalorder %s15, 1
    %p110 = por %p108, %p109
    %p111 = scmp.ne.s32.totalorder %s103, %s106
    %p112 = scmp.eq.s32.totalorder %s15, 0
    %p113 = por %p111, %p112
    %p114 = scmp.ne.s32.totalorder %s103, %s106
    %p115 = scmp.eq.s32.totalorder %s20, 1
    %p116 = por %p114, %p115
    %p117 = scmp.ne.s32.totalorder %s106, %s107
    %p118 = scmp.eq.s32.totalorder %s20, 0
    %p119 = por %p117, %p118
    %p120 = scmp.ne.s32.totalorder %s106, %s107
    %p121 = scmp.eq.s32.totalorder %s21, 1
    %p122 = por %p120, %p121
    %p124 = scmp.ne.s32.totalorder %s107, %s123
    %p125 = scmp.eq.s32.totalorder %s21, 0
    %p126 = por %p124, %p125
    %s128 = sadd.s32 %s127, 1
    %p131 = scmp.eq.s32.totalorder %s15, 1
    %p132 = scmp.ne.s32.totalorder %s127, %s129
    %p133 = scmp.eq.s32.totalorder %s15, 0
    %p134 = por %p132, %p133
    %p135 = scmp.ne.s32.totalorder %s127, %s129
    %p136 = scmp.eq.s32.totalorder %s20, 1
    %p137 = por %p135, %p136
    %p138 = scmp.ne.s32.totalorder %s129, %s130
    %p139 = scmp.eq.s32.totalorder %s20, 0
    %p140 = por %p138, %p139
    %p141 = scmp.ne.s32.totalorder %s129, %s130
    %p142 = scmp.eq.s32.totalorder %s21, 1
    %p143 = por %p141, %p142
    %p145 = scmp.ne.s32.totalorder %s130, %s144
    %p146 = scmp.eq.s32.totalorder %s21, 0
    %p147 = por %p145, %p146
    %s149 = sadd.s32 %s148, 1
    %p152 = scmp.eq.s32.totalorder %s15, 1
    %p153 = scmp.ne.s32.totalorder %s148, %s150
    %p154 = scmp.eq.s32.totalorder %s15, 0
    %p155 = por %p153, %p154
    %p156 = scmp.ne.s32.totalorder %s148, %s150
    %p157 = scmp.eq.s32.totalorder %s20, 1
    %p158 = por %p156, %p157
    %p159 = scmp.ne.s32.totalorder %s150, %s151
    %p160 = scmp.eq.s32.totalorder %s20, 0
    %p161 = por %p159, %p160
    %p162 = scmp.ne.s32.totalorder %s150, %s151
    %p163 = scmp.eq.s32.totalorder %s21, 1
    %p164 = por %p162, %p163
    %p166 = scmp.ne.s32.totalorder %s151, %s165
    %p167 = scmp.eq.s32.totalorder %s21, 0
    %p168 = por %p166, %p167
    %s169 = ssub.s32 %s15, %s22
    %p170 = scmp.eq.s32.totalorder %s169, 0
    %s172 = sadd.s32 %s171, 1
    %s173 = scalar_select %p170, %s171, %s172
    %p176 = pneg %p170
    %p177 = scmp.eq.s32.totalorder %s15, 1
    %p178 = por %p176, %p177
    %p179 = scmp.ne.s32.totalorder %s171, %s174
    %p180 = scmp.eq.s32.totalorder %s15, 0
    %p181 = por %p179, %p180
    %p182 = scmp.ne.s32.totalorder %s171, %s174
    %p183 = scmp.eq.s32.totalorder %s20, 1
    %p184 = por %p182, %p183
    %p185 = scmp.ne.s32.totalorder %s174, %s175
    %p186 = scmp.eq.s32.totalorder %s20, 0
    %p187 = por %p185, %p186
    %p188 = scmp.ne.s32.totalorder %s174, %s175
    %p189 = scmp.eq.s32.totalorder %s21, 1
    %p190 = por %p188, %p189
    %p192 = scmp.ne.s32.totalorder %s175, %s191
    %p193 = scmp.eq.s32.totalorder %s21, 0
    %p194 = por %p192, %p193
    %s195 = ssub.s32 %s15, %s22
    %p196 = scmp.eq.s32.totalorder %s195, 0
    %s198 = sadd.s32 %s197, 1
    %s199 = scalar_select %p196, %s197, %s198
    %p202 = pneg %p196
    %p203 = scmp.eq.s32.totalorder %s15, 1
    %p204 = por %p202, %p203
    %p205 = scmp.ne.s32.totalorder %s197, %s200
    %p206 = scmp.eq.s32.totalorder %s15, 0
    %p207 = por %p205, %p206
    %p208 = scmp.ne.s32.totalorder %s197, %s200
    %p209 = scmp.eq.s32.totalorder %s20, 1
    %p210 = por %p208, %p209
    %p211 = scmp.ne.s32.totalorder %s200, %s201
    %p212 = scmp.eq.s32.totalorder %s20, 0
    %p213 = por %p211, %p212
    %p214 = scmp.ne.s32.totalorder %s200, %s201
    %p215 = scmp.eq.s32.totalorder %s21, 1
    %p216 = por %p214, %p215
    %p218 = scmp.ne.s32.totalorder %s201, %s217
    %p219 = scmp.eq.s32.totalorder %s21, 0
    %p220 = por %p218, %p219
    %s221 = ssub.s32 %s15, %s22
    %p222 = scmp.eq.s32.totalorder %s221, 0
    %s224 = sadd.s32 %s223, 1
    %s225 = scalar_select %p222, %s223, %s224
    %p228 = pneg %p222
    %p229 = scmp.eq.s32.totalorder %s15, 1
    %p230 = por %p228, %p229
    %p231 = scmp.ne.s32.totalorder %s223, %s226
    %p232 = scmp.eq.s32.totalorder %s15, 0
    %p233 = por %p231, %p232
    %p234 = scmp.ne.s32.totalorder %s223, %s226
    %p235 = scmp.eq.s32.totalorder %s20, 1
    %p236 = por %p234, %p235
    %p237 = scmp.ne.s32.totalorder %s226, %s227
    %p238 = scmp.eq.s32.totalorder %s20, 0
    %p239 = por %p237, %p238
    %p240 = scmp.ne.s32.totalorder %s226, %s227
    %p241 = scmp.eq.s32.totalorder %s21, 1
    %p242 = por %p240, %p241
    %p244 = scmp.ne.s32.totalorder %s227, %s243
    %p245 = scmp.eq.s32.totalorder %s21, 0
    %p246 = por %p244, %p245
    %p247 = scmp.le.s32.totalorder 1, %s15
    %p248 = scmp.lt.s32.totalorder %s15, 3
    %p249 = pnand %p247, %p248
    %p250 = pneg %p249
    // Predicated region
    $region9: #{shortcut_resblock_forward.3} parent=5 // pred_check
      _
    $region10: #{shortcut_resblock_forward.3} parent=5 // pred_check_branch
      %252 = sbr.rel (%p249) target = $region12
    $region11: #{shortcut_resblock_forward.3} parent=5 // pred_region
      %s253 = ssub.s32 %s15, 1
      // Predicated region
      $region13: #{shortcut_resblock_forward.3} parent=11 // pred_check
        %p254 = pneg %p140
      $region14: #{shortcut_resblock_forward.3} parent=11 // pred_check_branch
        %256 = sbr.rel (%p254) target = $region16
      $region15: #{shortcut_resblock_forward.3} parent=11 // pred_region
        _
      $region16: #{shortcut_resblock_forward.3} parent=11 // pred_fallthru
        _
      // Predicated region
      $region17: #{shortcut_resblock_forward.3} parent=11 // pred_check
        %p257 = pneg %p161
      $region18: #{shortcut_resblock_forward.3} parent=11 // pred_check_branch
        %259 = sbr.rel (%p257) target = $region20
      $region19: #{shortcut_resblock_forward.3} parent=11 // pred_region
        _
      $region20: #{shortcut_resblock_forward.3} parent=11 // pred_fallthru
        _
    $region12: #{shortcut_resblock_forward.3} parent=5 // pred_fallthru
      _
    %p260 = scmp.lt.s32.totalorder %s15, 2
    // Predicated region
    $region21: #{shortcut_resblock_forward.3} parent=5 // pred_check
      %p261 = pneg %p260
    $region22: #{shortcut_resblock_forward.3} parent=5 // pred_check_branch
      %263 = sbr.rel (%p261) target = $region24
    $region23: #{shortcut_resblock_forward.3} parent=5 // pred_region
      // Predicated region
      $region25: #{shortcut_resblock_forward.3} parent=23 // pred_check
        %p264 = pneg %p35
      $region26: #{shortcut_resblock_forward.3} parent=23 // pred_check_branch
        %266 = sbr.rel (%p264) target = $region28
      $region27: #{shortcut_resblock_forward.3} parent=23 // pred_region
        %p267 = scmp.lt.s32.totalorder %s15, 1
        %s268 = scalar_select %p267, %s15, 1
        %s269 = smul.addr %s268, 12
        %s270 = smul.addr %s269, 4
        %s271 = scalar_lea.vmem %s0, %s270
      $region28: #{shortcut_resblock_forward.3} parent=23 // pred_fallthru
        _
      // Predicated region
      $region29: #{shortcut_resblock_forward.3} parent=23 // pred_check
        %p272 = pneg %p61
      $region30: #{shortcut_resblock_forward.3} parent=23 // pred_check_branch
        %274 = sbr.rel (%p272) target = $region32
      $region31: #{shortcut_resblock_forward.3} parent=23 // pred_region
        %p275 = scmp.lt.s32.totalorder %s15, 1
        %s276 = scalar_select %p275, %s15, 1
        %s277 = smul.addr %s276, 12
        %s278 = smul.addr %s277, 4
        %s279 = scalar_lea.vmem %s1, %s278
      $region32: #{shortcut_resblock_forward.3} parent=23 // pred_fallthru
        _
      // Predicated region
      $region33: #{shortcut_resblock_forward.3} parent=23 // pred_check
        %p280 = pneg %p87
      $region34: #{shortcut_resblock_forward.3} parent=23 // pred_check_branch
        %282 = sbr.rel (%p280) target = $region36
      $region35: #{shortcut_resblock_forward.3} parent=23 // pred_region
        %p283 = scmp.lt.s32.totalorder %s15, 1
        %s284 = scalar_select %p283, %s15, 1
        %s285 = smul.addr %s284, 12
        %s286 = smul.addr %s285, 4
        %s287 = scalar_lea.vmem %s2, %s286
      $region36: #{shortcut_resblock_forward.3} parent=23 // pred_fallthru
        _
      // Predicated region
      $region37: #{shortcut_resblock_forward.3} parent=23 // pred_check
        %p288 = pneg %p113
      $region38: #{shortcut_resblock_forward.3} parent=23 // pred_check_branch
        %290 = sbr.rel (%p288) target = $region40
      $region39: #{shortcut_resblock_forward.3} parent=23 // pred_region
        %p291 = scmp.lt.s32.totalorder %s15, 1
        %s292 = scalar_select %p291, %s15, 1
        %s293 = smul.addr %s292, 12
        %s294 = smul.addr %s293, 4
        %s295 = scalar_lea.vmem %s3, %s294
      $region40: #{shortcut_resblock_forward.3} parent=23 // pred_fallthru
        _
    $region24: #{shortcut_resblock_forward.3} parent=5 // pred_fallthru
      _
    %p296 = scmp.le.s32.totalorder 1, %s15
    %p297 = scmp.lt.s32.totalorder %s15, 3
    %p298 = pnand %p296, %p297
    %p299 = pneg %p298
    // Predicated region
    $region41: #{shortcut_resblock_forward.3} parent=5 // pred_check
      _
    $region42: #{shortcut_resblock_forward.3} parent=5 // pred_check_branch
      %301 = sbr.rel (%p298) target = $region44
    $region43: #{shortcut_resblock_forward.3} parent=5 // pred_region
      %s302 = ssub.s32 %s15, 1
      %p303 = scmp.lt.s32.totalorder %s20, 1
      %s304 = scalar_select %p303, %s20, 1
      %s305 = smul.addr %s304, 12
      %s306 = smul.addr %s305, 4
      %s307 = scalar_lea.vmem %s0, %s306
      %p308 = pneg %p41
      %p309 = pneg %p38
      %p310 = scmp.lt.s32.totalorder %s20, 1
      %s311 = scalar_select %p310, %s20, 1
      %s312 = smul.addr %s311, 12
      %s313 = smul.addr %s312, 4
      %s314 = scalar_lea.vmem %s1, %s313
      %p315 = pneg %p67
      %p316 = pneg %p64
      %p317 = scmp.lt.s32.totalorder %s20, 1
      %s318 = scalar_select %p317, %s20, 1
      %s319 = smul.addr %s318, 12
      %s320 = smul.addr %s319, 4
      %s321 = scalar_lea.vmem %s2, %s320
      %p322 = pneg %p93
      %p323 = pneg %p90
      %p324 = scmp.lt.s32.totalorder %s20, 1
      %s325 = scalar_select %p324, %s20, 1
      %s326 = smul.addr %s325, 12
      %s327 = smul.addr %s326, 4
      %s328 = scalar_lea.vmem %s3, %s327
      %p329 = pneg %p119
      %p330 = pneg %p116
      %p331 = pneg %p140
      %p332 = pneg %p137
      %p333 = pneg %p161
      %p334 = pneg %p158
      %p335 = pneg %p187
      %p336 = pneg %p184
      %p337 = scmp.lt.s32.totalorder %s20, 1
      %s338 = scalar_select %p337, %s20, 1
      %s339 = smul.addr %s338, 9
      %s340 = smul.addr %s339, 4
      %s341 = scalar_lea.vmem %s6, %s340
      %p342 = pneg %p213
      %p343 = pneg %p210
      %p344 = scmp.lt.s32.totalorder %s20, 1
      %s345 = scalar_select %p344, %s20, 1
      %s346 = smul.addr %s345, 9
      %s347 = smul.addr %s346, 4
      %s348 = scalar_lea.vmem %s7, %s347
      %p349 = pneg %p239
      %p350 = pneg %p236
      %p351 = scmp.lt.s32.totalorder %s20, 1
      %s352 = scalar_select %p351, %s20, 1
      %s353 = smul.addr %s352, 8
      %s354 = scalar_lea.vmem %s8, %s353
      %p355 = scmp.lt.s32.totalorder %s20, 1
      %s356 = scalar_select %p355, %s20, 1
      %s357 = smul.addr %s356, 12
      %s358 = smul.addr %s357, 4
      %s359 = scalar_lea.vmem %s0, %s358
      %p360 = scmp.lt.s32.totalorder %s20, 1
      %s361 = scalar_select %p360, %s20, 1
      %s362 = smul.addr %s361, 12
      %s363 = smul.addr %s362, 4
      %s364 = scalar_lea.vmem %s1, %s363
      %p365 = scmp.lt.s32.totalorder %s20, 1
      %s366 = scalar_select %p365, %s20, 1
      %s367 = smul.addr %s366, 12
      %s368 = smul.addr %s367, 4
      %s369 = scalar_lea.vmem %s2, %s368
      %p370 = scmp.lt.s32.totalorder %s20, 1
      %s371 = scalar_select %p370, %s20, 1
      %s372 = smul.addr %s371, 12
      %s373 = smul.addr %s372, 4
      %s374 = scalar_lea.vmem %s3, %s373
      %p375 = scmp.lt.s32.totalorder %s20, 1
      %s376 = scalar_select %p375, %s20, 1
      %s377 = smul.addr %s376, 9
      %s378 = smul.addr %s377, 4
      %s379 = scalar_lea.vmem %s6, %s378
      %p380 = scmp.lt.s32.totalorder %s20, 1
      %s381 = scalar_select %p380, %s20, 1
      %s382 = smul.addr %s381, 9
      %s383 = smul.addr %s382, 4
      %s384 = scalar_lea.vmem %s7, %s383
      %p385 = scmp.lt.s32.totalorder %s20, 1
      %s386 = scalar_select %p385, %s20, 1
      %s387 = smul.addr %s386, 8
      %s388 = scalar_lea.vmem %s8, %s387
      %v390 = vlaneseq
      %v391 = vshrl.u32 %v390, 7
      %v392 = vadd.s32 %v391, 8
      %v393 = vadd.s32 %v391, 16
      %v394 = vadd.s32 %v391, 24
      %v395 = vadd.s32 %v391, 32
      %v396 = vadd.s32 %v391, 40
      %v397 = vadd.s32 %v391, 48
      %v398 = vadd.s32 %v391, 56
      %v399 = vadd.s32 %v391, 64
      %vm400 = vcmp.lt.s32.totalorder %v391, 0
      %v401 = vsub.s32 0, %v391
      %v402 = vsel %vm400, %v401, %v391
      %v403 = vmul.u32.u64.compose %v402, 3817748708
      %v404 = vextract.low.u32 %v403
      %v405 = vextract.high.u32 %v403
      %v406 = vshrl.u32 %v405, 3
      %v407 = vmul.u32 %v406, 9
      %v408 = vsub.s32 %v402, %v407
      %v409 = vsub.s32 0, %v408
      %v410 = vsel %vm400, %v409, %v408
      %vm411 = vcmp.lt.s32.totalorder %v392, 0
      %v412 = vsub.s32 0, %v392
      %v413 = vsel %vm411, %v412, %v392
      %v414 = vmul.u32.u64.compose %v413, 3817748708
      %v415 = vextract.low.u32 %v414
      %v416 = vextract.high.u32 %v414
      %v417 = vshrl.u32 %v416, 3
      %v418 = vmul.u32 %v417, 9
      %v419 = vsub.s32 %v413, %v418
      %v420 = vsub.s32 0, %v419
      %v421 = vsel %vm411, %v420, %v419
      %vm422 = vcmp.lt.s32.totalorder %v393, 0
      %v423 = vsub.s32 0, %v393
      %v424 = vsel %vm422, %v423, %v393
      %v425 = vmul.u32.u64.compose %v424, 3817748708
      %v426 = vextract.low.u32 %v425
      %v427 = vextract.high.u32 %v425
      %v428 = vshrl.u32 %v427, 3
      %v429 = vmul.u32 %v428, 9
      %v430 = vsub.s32 %v424, %v429
      %v431 = vsub.s32 0, %v430
      %v432 = vsel %vm422, %v431, %v430
      %vm433 = vcmp.lt.s32.totalorder %v394, 0
      %v434 = vsub.s32 0, %v394
      %v435 = vsel %vm433, %v434, %v394
      %v436 = vmul.u32.u64.compose %v435, 3817748708
      %v437 = vextract.low.u32 %v436
      %v438 = vextract.high.u32 %v436
      %v439 = vshrl.u32 %v438, 3
      %v440 = vmul.u32 %v439, 9
      %v441 = vsub.s32 %v435, %v440
      %v442 = vsub.s32 0, %v441
      %v443 = vsel %vm433, %v442, %v441
      %vm444 = vcmp.lt.s32.totalorder %v395, 0
      %v445 = vsub.s32 0, %v395
      %v446 = vsel %vm444, %v445, %v395
      %v447 = vmul.u32.u64.compose %v446, 3817748708
      %v448 = vextract.low.u32 %v447
      %v449 = vextract.high.u32 %v447
      %v450 = vshrl.u32 %v449, 3
      %v451 = vmul.u32 %v450, 9
      %v452 = vsub.s32 %v446, %v451
      %v453 = vsub.s32 0, %v452
      %v454 = vsel %vm444, %v453, %v452
      %vm455 = vcmp.lt.s32.totalorder %v396, 0
      %v456 = vsub.s32 0, %v396
      %v457 = vsel %vm455, %v456, %v396
      %v458 = vmul.u32.u64.compose %v457, 3817748708
      %v459 = vextract.low.u32 %v458
      %v460 = vextract.high.u32 %v458
      %v461 = vshrl.u32 %v460, 3
      %v462 = vmul.u32 %v461, 9
      %v463 = vsub.s32 %v457, %v462
      %v464 = vsub.s32 0, %v463
      %v465 = vsel %vm455, %v464, %v463
      %vm466 = vcmp.lt.s32.totalorder %v397, 0
      %v467 = vsub.s32 0, %v397
      %v468 = vsel %vm466, %v467, %v397
      %v469 = vmul.u32.u64.compose %v468, 3817748708
      %v470 = vextract.low.u32 %v469
      %v471 = vextract.high.u32 %v469
      %v472 = vshrl.u32 %v471, 3
      %v473 = vmul.u32 %v472, 9
      %v474 = vsub.s32 %v468, %v473
      %v475 = vsub.s32 0, %v474
      %v476 = vsel %vm466, %v475, %v474
      %vm477 = vcmp.lt.s32.totalorder %v398, 0
      %v478 = vsub.s32 0, %v398
      %v479 = vsel %vm477, %v478, %v398
      %v480 = vmul.u32.u64.compose %v479, 3817748708
      %v481 = vextract.low.u32 %v480
      %v482 = vextract.high.u32 %v480
      %v483 = vshrl.u32 %v482, 3
      %v484 = vmul.u32 %v483, 9
      %v485 = vsub.s32 %v479, %v484
      %v486 = vsub.s32 0, %v485
      %v487 = vsel %vm477, %v486, %v485
      %vm488 = vcmp.lt.s32.totalorder %v399, 0
      %v489 = vsub.s32 0, %v399
      %v490 = vsel %vm488, %v489, %v399
      %v491 = vmul.u32.u64.compose %v490, 3817748708
      %v492 = vextract.low.u32 %v491
      %v493 = vextract.high.u32 %v491
      %v494 = vshrl.u32 %v493, 3
      %v495 = vmul.u32 %v494, 9
      %v496 = vsub.s32 %v490, %v495
      %v497 = vsub.s32 0, %v496
      %v498 = vsel %vm488, %v497, %v496
      %vm499 = vcmp.ne.s32.totalorder %v410, 0
      %vm500 = vcmp.ne.s32.totalorder %v421, 0
      %vm501 = vcmp.ne.s32.totalorder %v432, 0
      %vm502 = vcmp.ne.s32.totalorder %v443, 0
      %vm503 = vcmp.ne.s32.totalorder %v454, 0
      %vm504 = vcmp.ne.s32.totalorder %v465, 0
      %vm505 = vcmp.ne.s32.totalorder %v476, 0
      %vm506 = vcmp.ne.s32.totalorder %v487, 0
      %vm507 = vcmp.ne.s32.totalorder %v498, 0
      %vm508 = vcmp.lt.s32.totalorder %v410, 0
      %vm509 = vcmp.lt.s32.totalorder %v421, 0
      %vm510 = vcmp.lt.s32.totalorder %v432, 0
      %vm511 = vcmp.lt.s32.totalorder %v443, 0
      %vm512 = vcmp.lt.s32.totalorder %v454, 0
      %vm513 = vcmp.lt.s32.totalorder %v465, 0
      %vm514 = vcmp.lt.s32.totalorder %v476, 0
      %vm515 = vcmp.lt.s32.totalorder %v487, 0
      %vm516 = vcmp.lt.s32.totalorder %v498, 0
      %vm517 = vmand %vm508, %vm499
      %vm518 = vmand %vm509, %vm500
      %vm519 = vmand %vm510, %vm501
      %vm520 = vmand %vm511, %vm502
      %vm521 = vmand %vm512, %vm503
      %vm522 = vmand %vm513, %vm504
      %vm523 = vmand %vm514, %vm505
      %vm524 = vmand %vm515, %vm506
      %vm525 = vmand %vm516, %vm507
      %v526 = vadd.s32 %v410, 9
      %v527 = vadd.s32 %v421, 9
      %v528 = vadd.s32 %v432, 9
      %v529 = vadd.s32 %v443, 9
      %v530 = vadd.s32 %v454, 9
      %v531 = vadd.s32 %v465, 9
      %v532 = vadd.s32 %v476, 9
      %v533 = vadd.s32 %v487, 9
      %v534 = vadd.s32 %v498, 9
      %v535 = vsel %vm517, %v526, %v410
      %v536 = vsel %vm518, %v527, %v421
      %v537 = vsel %vm519, %v528, %v432
      %v538 = vsel %vm520, %v529, %v443
      %v539 = vsel %vm521, %v530, %v454
      %v540 = vsel %vm522, %v531, %v465
      %v541 = vsel %vm523, %v532, %v476
      %v542 = vsel %vm524, %v533, %v487
      %v543 = vsel %vm525, %v534, %v498
      %vm544 = vcmp.lt.s32.totalorder %v535, 8
      %vm545 = vcmp.lt.s32.totalorder %v536, 8
      %vm546 = vcmp.lt.s32.totalorder %v537, 8
      %vm547 = vcmp.lt.s32.totalorder %v538, 8
      %vm548 = vcmp.lt.s32.totalorder %v539, 8
      %vm549 = vcmp.lt.s32.totalorder %v540, 8
      %vm550 = vcmp.lt.s32.totalorder %v541, 8
      %vm551 = vcmp.lt.s32.totalorder %v542, 8
      %vm552 = vcmp.lt.s32.totalorder %v543, 8
      %v553 = vld [vmem:[%s374] sm:$0xf]
      %v554 = vld [vmem:[%s374 + $0x4] sm:$0xf]
      %v555 = vld [vmem:[%s374 + $0x8] sm:$0xf]
      %v556 = vld [vmem:[%s374 + $0xc] sm:$0xf]
      %v557 = vld [vmem:[%s374 + $0x10] sm:$0xf]
      %v558 = vld [vmem:[%s374 + $0x14] sm:$0xf]
      %v559 = vld [vmem:[%s374 + $0x18] sm:$0xf]
      %v560 = vld [vmem:[%s374 + $0x1c] sm:$0xf]
      %v561 = vld [vmem:[%s374 + $0x20] sm:$0xf]
      %v562 = vld [vmem:[%s4] sm:$0xf]
      %v563 = vld [vmem:[%s4 + $0x4] sm:$0xf]
      %v564 = vld [vmem:[%s4 + $0x8] sm:$0xf]
      %v565 = vld [vmem:[%s4 + $0xc] sm:$0xf]
      %v566 = vld [vmem:[%s4 + $0x10] sm:$0xf]
      %v567 = vld [vmem:[%s4 + $0x14] sm:$0xf]
      %v568 = vld [vmem:[%s4 + $0x18] sm:$0xf]
      %v569 = vld [vmem:[%s4 + $0x1c] sm:$0xf]
      %v570 = vld [vmem:[%s4 + $0x20] sm:$0xf]
      %v571 = vld [vmem:[%s4 + $0x24] sm:$0xf]
      %v572 = vld [vmem:[%s4 + $0x28] sm:$0xf]
      %v573 = vld [vmem:[%s4 + $0x2c] sm:$0xf]
      %v574 = vld [vmem:[%s4 + $0x30] sm:$0xf]
      %v575 = vld [vmem:[%s4 + $0x34] sm:$0xf]
      %v576 = vld [vmem:[%s4 + $0x38] sm:$0xf]
      %v577 = vld [vmem:[%s4 + $0x3c] sm:$0xf]
      %v587 = vunpack.c.l.b16 %v553
      %v588 = vunpack.c.l.b16 %v554
      %v589 = vunpack.c.l.b16 %v555
      %v590 = vunpack.c.l.b16 %v556
      %v591 = vunpack.c.l.b16 %v557
      %v592 = vunpack.c.l.b16 %v558
      %v593 = vunpack.c.l.b16 %v559
      %v594 = vunpack.c.l.b16 %v560
      %v595 = vunpack.c.l.b16 %v561
      %v596 = vpack.c.b16 %v588, %v587
      %v597 = vpack.c.b16 %v590, %v589
      %v598 = vpack.c.b16 %v592, %v591
      %v599 = vpack.c.b16 %v594, %v593
      %v600 = vpack.c.b16 %v595, %v595
      %v622 = vunpack.c.l.b16 %v562
      %v623 = vunpack.c.l.b16 %v563
      %v624 = vunpack.c.l.b16 %v564
      %v625 = vunpack.c.l.b16 %v565
      %v626 = vunpack.c.l.b16 %v566
      %v627 = vunpack.c.l.b16 %v567
      %v628 = vunpack.c.l.b16 %v568
      %v629 = vunpack.c.l.b16 %v569
      %v630 = vunpack.c.l.b16 %v570
      %v631 = vunpack.c.l.b16 %v571
      %v632 = vunpack.c.l.b16 %v572
      %v633 = vunpack.c.l.b16 %v573
      %v634 = vunpack.c.l.b16 %v574
      %v635 = vunpack.c.l.b16 %v575
      %v636 = vunpack.c.l.b16 %v576
      %v637 = vunpack.c.l.b16 %v577
      %v638 = vpack.c.b16 %v623, %v622
      %v639 = vpack.c.b16 %v625, %v624
      %v640 = vpack.c.b16 %v627, %v626
      %v641 = vpack.c.b16 %v629, %v628
      %v642 = vpack.c.b16 %v631, %v630
      %v643 = vpack.c.b16 %v633, %v632
      %v644 = vpack.c.b16 %v635, %v634
      %v645 = vpack.c.b16 %v637, %v636
      %654 = vmatprep.subr.bf16.mxu0 0
      %655 = vmatpush1.bf16.msra.mxu0 %v638
      %656 = vmatprep.subr.bf16.mxu0 0
      %657 = vmatpush1.bf16.msra.mxu0 %v639
      %658 = vmatprep.subr.bf16.mxu0 0
      %659 = vmatpush1.bf16.msra.mxu0 %v640
      %660 = vmatprep.subr.bf16.mxu0 0
      %661 = vmatpush1.bf16.msra.mxu0 %v641
      %662 = vmatprep.subr.bf16.mxu0 0
      %663 = vmatpush1.bf16.msra.mxu0 %v642
      %664 = vmatprep.subr.bf16.mxu0 0
      %665 = vmatpush1.bf16.msra.mxu0 %v643
      %666 = vmatprep.subr.bf16.mxu0 0
      %667 = vmatpush1.bf16.msra.mxu0 %v644
      %668 = vmatprep.subr.bf16.mxu0 0
      %669 = vmatpush1.bf16.msra.mxu0 %v645
      %670 = vmatprep.subr.bf16.mxu0 0
      %671 = vmatpush1.bf16.msra.mxu0 0
      %672 = vmatprep.subr.bf16.mxu0 0
      %673 = vmatpush1.bf16.msra.mxu0 0
      %674 = vmatprep.subr.bf16.mxu0 0
      %675 = vmatpush1.bf16.msra.mxu0 0
      %676 = vmatprep.subr.bf16.mxu0 0
      %677 = vmatpush1.bf16.msra.mxu0 0
      %678 = vmatprep.subr.bf16.mxu0 0
      %679 = vmatpush1.bf16.msra.mxu0 0
      %680 = vmatprep.subr.bf16.mxu0 0
      %681 = vmatpush1.bf16.msra.mxu0 0
      %682 = vmatprep.subr.bf16.mxu0 0
      %683 = vmatpush1.bf16.msra.mxu0 0
      %684 = vmatprep.subr.bf16.mxu0 0
      %685 = vmatpush1.bf16.msra.mxu0 0
      %686 = vmatprep.mubr.bf16.mxu0 0
      %687 = vmatmul.mubr.bf16.gmra.mrb[0].mxu0 %v596
      %v688 = vpop.f32.mrb[0].mxu0
      %v689 = vadd.f32 0.0, %v688
      %v690 = vpop.f32.mrb[0].mxu0
      %v691 = vpop.f32.mrb[0].mxu0
      %v692 = vadd.f32 0.0, %v691
      %v693 = vpop.f32.mrb[0].mxu0
      %694 = vmatprep.mubr.bf16.mxu0 0
      %695 = vmatmul.mubr.bf16.gmra.mrb[0].mxu0 %v597
      %v696 = vpop.f32.mrb[0].mxu0
      %v697 = vadd.f32 0.0, %v696
      %v698 = vpop.f32.mrb[0].mxu0
      %v699 = vpop.f32.mrb[0].mxu0
      %v700 = vadd.f32 0.0, %v699
      %v701 = vpop.f32.mrb[0].mxu0
      %702 = vmatprep.mubr.bf16.mxu0 0
      %703 = vmatmul.mubr.bf16.gmra.mrb[0].mxu0 %v598
      %v704 = vpop.f32.mrb[0].mxu0
      %v705 = vadd.f32 0.0, %v704
      %v706 = vpop.f32.mrb[0].mxu0
      %v707 = vpop.f32.mrb[0].mxu0
      %v708 = vadd.f32 0.0, %v707
      %v709 = vpop.f32.mrb[0].mxu0
      %710 = vmatprep.mubr.bf16.mxu0 0
      %711 = vmatmul.mubr.bf16.gmra.mrb[0].mxu0 %v599
      %v712 = vpop.f32.mrb[0].mxu0
      %v713 = vadd.f32 0.0, %v712
      %v714 = vpop.f32.mrb[0].mxu0
      %v715 = vpop.f32.mrb[0].mxu0
      %v716 = vadd.f32 0.0, %v715
      %v717 = vpop.f32.mrb[0].mxu0
      %718 = vmatprep.mubr.bf16.mxu0 0
      %719 = vmatmul.mubr.bf16.gmra.mrb[0].mxu0 %v600
      %v720 = vpop.f32.mrb[0].mxu0
      %v721 = vadd.f32 0.0, %v720
      %v722 = vpop.f32.mrb[0].mxu0
      %v723 = vpop.f32.mrb[0].mxu0
      %v724 = vpop.f32.mrb[0].mxu0
      %725 = vdwg.mxu0
      %v726 = vld [vmem:[%s359] sm:$0xf]
      %v727 = vld [vmem:[%s359 + $0x4] sm:$0xf]
      %v728 = vld [vmem:[%s359 + $0x8] sm:$0xf]
      %v729 = vld [vmem:[%s359 + $0xc] sm:$0xf]
      %v730 = vld [vmem:[%s359 + $0x10] sm:$0xf]
      %v731 = vld [vmem:[%s359 + $0x14] sm:$0xf]
      %v732 = vld [vmem:[%s359 + $0x18] sm:$0xf]
      %v733 = vld [vmem:[%s359 + $0x1c] sm:$0xf]
      %v734 = vld [vmem:[%s359 + $0x20] sm:$0xf]
      %v735 = vld [vmem:[%s5] sm:$0xf]
      %v736 = vld [vmem:[%s5 + $0x4] sm:$0xf]
      %v737 = vld [vmem:[%s5 + $0x8] sm:$0xf]
      %v738 = vld [vmem:[%s5 + $0xc] sm:$0xf]
      %v739 = vld [vmem:[%s5 + $0x10] sm:$0xf]
      %v740 = vld [vmem:[%s5 + $0x14] sm:$0xf]
      %v741 = vld [vmem:[%s5 + $0x18] sm:$0xf]
      %v742 = vld [vmem:[%s5 + $0x1c] sm:$0xf]
      %v743 = vld [vmem:[%s5 + $0x20] sm:$0xf]
      %v744 = vld [vmem:[%s5 + $0x24] sm:$0xf]
      %v745 = vld [vmem:[%s5 + $0x28] sm:$0xf]
      %v746 = vld [vmem:[%s5 + $0x2c] sm:$0xf]
      %v747 = vld [vmem:[%s5 + $0x30] sm:$0xf]
      %v748 = vld [vmem:[%s5 + $0x34] sm:$0xf]
      %v749 = vld [vmem:[%s5 + $0x38] sm:$0xf]
      %v750 = vld [vmem:[%s5 + $0x3c] sm:$0xf]
      %v751 = vld [vmem:[%s364] sm:$0xf]
      %v752 = vld [vmem:[%s364 + $0x4] sm:$0xf]
      %v753 = vld [vmem:[%s364 + $0x8] sm:$0xf]
      %v754 = vld [vmem:[%s364 + $0xc] sm:$0xf]
      %v755 = vld [vmem:[%s364 + $0x10] sm:$0xf]
      %v756 = vld [vmem:[%s364 + $0x14] sm:$0xf]
      %v757 = vld [vmem:[%s364 + $0x18] sm:$0xf]
      %v758 = vld [vmem:[%s364 + $0x1c] sm:$0xf]
      %v759 = vld [vmem:[%s364 + $0x20] sm:$0xf]
      %s760 = scalar_lea.vmem %s5, 64
      %v761 = vld [vmem:[%s760] sm:$0xf]
      %v762 = vld [vmem:[%s760 + $0x4] sm:$0xf]
      %v763 = vld [vmem:[%s760 + $0x8] sm:$0xf]
      %v764 = vld [vmem:[%s760 + $0xc] sm:$0xf]
      %v765 = vld [vmem:[%s760 + $0x10] sm:$0xf]
      %v766 = vld [vmem:[%s760 + $0x14] sm:$0xf]
      %v767 = vld [vmem:[%s760 + $0x18] sm:$0xf]
      %v768 = vld [vmem:[%s760 + $0x1c] sm:$0xf]
      %v769 = vld [vmem:[%s760 + $0x20] sm:$0xf]
      %v770 = vld [vmem:[%s760 + $0x24] sm:$0xf]
      %v771 = vld [vmem:[%s760 + $0x28] sm:$0xf]
      %v772 = vld [vmem:[%s760 + $0x2c] sm:$0xf]
      %v773 = vld [vmem:[%s760 + $0x30] sm:$0xf]
      %v774 = vld [vmem:[%s760 + $0x34] sm:$0xf]
      %v775 = vld [vmem:[%s760 + $0x38] sm:$0xf]
      %v776 = vld [vmem:[%s760 + $0x3c] sm:$0xf]
      %v786 = vunpack.c.l.b16 %v751
      %v787 = vunpack.c.l.b16 %v752
      %v788 = vunpack.c.l.b16 %v753
      %v789 = vunpack.c.l.b16 %v754
      %v790 = vunpack.c.l.b16 %v755
      %v791 = vunpack.c.l.b16 %v756
      %v792 = vunpack.c.l.b16 %v757
      %v793 = vunpack.c.l.b16 %v758
      %v794 = vunpack.c.l.b16 %v759
      %v795 = vpack.c.b16 %v787, %v786
      %v796 = vpack.c.b16 %v789, %v788
      %v797 = vpack.c.b16 %v791, %v790
      %v798 = vpack.c.b16 %v793, %v792
      %v799 = vpack.c.b16 %v794, %v794
      %v821 = vunpack.c.l.b16 %v761
      %v822 = vunpack.c.l.b16 %v762
      %v823 = vunpack.c.l.b16 %v763
      %v824 = vunpack.c.l.b16 %v764
      %v825 = vunpack.c.l.b16 %v765
      %v826 = vunpack.c.l.b16 %v766
      %v827 = vunpack.c.l.b16 %v767
      %v828 = vunpack.c.l.b16 %v768
      %v829 = vunpack.c.l.b16 %v769
      %v830 = vunpack.c.l.b16 %v770
      %v831 = vunpack.c.l.b16 %v771
      %v832 = vunpack.c.l.b16 %v772
      %v833 = vunpack.c.l.b16 %v773
      %v834 = vunpack.c.l.b16 %v774
      %v835 = vunpack.c.l.b16 %v775
      %v836 = vunpack.c.l.b16 %v776
      %v837 = vpack.c.b16 %v822, %v821
      %v838 = vpack.c.b16 %v824, %v823
      %v839 = vpack.c.b16 %v826, %v825
      %v840 = vpack.c.b16 %v828, %v827
      %v841 = vpack.c.b16 %v830, %v829
      %v842 = vpack.c.b16 %v832, %v831
      %v843 = vpack.c.b16 %v834, %v833
      %v844 = vpack.c.b16 %v836, %v835
      %853 = vmatprep.subr.bf16.mxu0 0
      %854 = vmatpush1.bf16.msra.mxu0 %v837
      %855 = vmatprep.subr.bf16.mxu0 0
      %856 = vmatpush1.bf16.msra.mxu0 %v838
      %857 = vmatprep.subr.bf16.mxu0 0
      %858 = vmatpush1.bf16.msra.mxu0 %v839
      %859 = vmatprep.subr.bf16.mxu0 0
      %860 = vmatpush1.bf16.msra.mxu0 %v840
      %861 = vmatprep.subr.bf16.mxu0 0
      %862 = vmatpush1.bf16.msra.mxu0 %v841
      %863 = vmatprep.subr.bf16.mxu0 0
      %864 = vmatpush1.bf16.msra.mxu0 %v842
      %865 = vmatprep.subr.bf16.mxu0 0
      %866 = vmatpush1.bf16.msra.mxu0 %v843
      %867 = vmatprep.subr.bf16.mxu0 0
      %868 = vmatpush1.bf16.msra.mxu0 %v844
      %869 = vmatprep.subr.bf16.mxu0 0
      %870 = vmatpush1.bf16.msra.mxu0 0
      %871 = vmatprep.subr.bf16.mxu0 0
      %872 = vmatpush1.bf16.msra.mxu0 0
      %873 = vmatprep.subr.bf16.mxu0 0
      %874 = vmatpush1.bf16.msra.mxu0 0
      %875 = vmatprep.subr.bf16.mxu0 0
      %876 = vmatpush1.bf16.msra.mxu0 0
      %877 = vmatprep.subr.bf16.mxu0 0
      %878 = vmatpush1.bf16.msra.mxu0 0
      %879 = vmatprep.subr.bf16.mxu0 0
      %880 = vmatpush1.bf16.msra.mxu0 0
      %881 = vmatprep.subr.bf16.mxu0 0
      %882 = vmatpush1.bf16.msra.mxu0 0
      %883 = vmatprep.subr.bf16.mxu0 0
      %884 = vmatpush1.bf16.msra.mxu0 0
      %885 = vmatprep.mubr.bf16.mxu0 0
      %886 = vmatmul.mubr.bf16.gmra.mrb[0].mxu0 %v795
      %v887 = vpop.f32.mrb[0].mxu0
      %v888 = vadd.f32 0.0, %v887
      %v889 = vpop.f32.mrb[0].mxu0
      %v890 = vpop.f32.mrb[0].mxu0
      %v891 = vadd.f32 0.0, %v890
      %v892 = vpop.f32.mrb[0].mxu0
      %893 = vmatprep.mubr.bf16.mxu0 0
      %894 = vmatmul.mubr.bf16.gmra.mrb[0].mxu0 %v796
      %v895 = vpop.f32.mrb[0].mxu0
      %v896 = vadd.f32 0.0, %v895
      %v897 = vpop.f32.mrb[0].mxu0
      %v898 = vpop.f32.mrb[0].mxu0
      %v899 = vadd.f32 0.0, %v898
      %v900 = vpop.f32.mrb[0].mxu0
      %901 = vmatprep.mubr.bf16.mxu0 0
      %902 = vmatmul.mubr.bf16.gmra.mrb[0].mxu0 %v797
      %v903 = vpop.f32.mrb[0].mxu0
      %v904 = vadd.f32 0.0, %v903
      %v905 = vpop.f32.mrb[0].mxu0
      %v906 = vpop.f32.mrb[0].mxu0
      %v907 = vadd.f32 0.0, %v906
      %v908 = vpop.f32.mrb[0].mxu0
      %909 = vmatprep.mubr.bf16.mxu0 0
      %910 = vmatmul.mubr.bf16.gmra.mrb[0].mxu0 %v798
      %v911 = vpop.f32.mrb[0].mxu0
      %v912 = vadd.f32 0.0, %v911
      %v913 = vpop.f32.mrb[0].mxu0
      %v914 = vpop.f32.mrb[0].mxu0
      %v915 = vadd.f32 0.0, %v914
      %v916 = vpop.f32.mrb[0].mxu0
      %917 = vmatprep.mubr.bf16.mxu0 0
      %918 = vmatmul.mubr.bf16.gmra.mrb[0].mxu0 %v799
      %v919 = vpop.f32.mrb[0].mxu0
      %v920 = vadd.f32 0.0, %v919
      %v921 = vpop.f32.mrb[0].mxu0
      %v922 = vpop.f32.mrb[0].mxu0
      %v923 = vpop.f32.mrb[0].mxu0
      %924 = vdwg.mxu0
      %v934 = vunpack.c.l.b16 %v726
      %v935 = vunpack.c.l.b16 %v727
      %v936 = vunpack.c.l.b16 %v728
      %v937 = vunpack.c.l.b16 %v729
      %v938 = vunpack.c.l.b16 %v730
      %v939 = vunpack.c.l.b16 %v731
      %v940 = vunpack.c.l.b16 %v732
      %v941 = vunpack.c.l.b16 %v733
      %v942 = vunpack.c.l.b16 %v734
      %v943 = vpack.c.b16 %v935, %v934
      %v944 = vpack.c.b16 %v937, %v936
      %v945 = vpack.c.b16 %v939, %v938
      %v946 = vpack.c.b16 %v941, %v940
      %v947 = vpack.c.b16 %v942, %v942
      %v969 = vunpack.c.l.b16 %v735
      %v970 = vunpack.c.l.b16 %v736
      %v971 = vunpack.c.l.b16 %v737
      %v972 = vunpack.c.l.b16 %v738
      %v973 = vunpack.c.l.b16 %v739
      %v974 = vunpack.c.l.b16 %v740
      %v975 = vunpack.c.l.b16 %v741
      %v976 = vunpack.c.l.b16 %v742
      %v977 = vunpack.c.l.b16 %v743
      %v978 = vunpack.c.l.b16 %v744
      %v979 = vunpack.c.l.b16 %v745
      %v980 = vunpack.c.l.b16 %v746
      %v981 = vunpack.c.l.b16 %v747
      %v982 = vunpack.c.l.b16 %v748
      %v983 = vunpack.c.l.b16 %v749
      %v984 = vunpack.c.l.b16 %v750
      %v985 = vpack.c.b16 %v970, %v969
      %v986 = vpack.c.b16 %v972, %v971
      %v987 = vpack.c.b16 %v974, %v973
      %v988 = vpack.c.b16 %v976, %v975
      %v989 = vpack.c.b16 %v978, %v977
      %v990 = vpack.c.b16 %v980, %v979
      %v991 = vpack.c.b16 %v982, %v981
      %v992 = vpack.c.b16 %v984, %v983
      %1001 = vmatprep.subr.bf16.mxu0 0
      %1002 = vmatpush1.bf16.msra.mxu0 %v985
      %1003 = vmatprep.subr.bf16.mxu0 0
      %1004 = vmatpush1.bf16.msra.mxu0 %v986
      %1005 = vmatprep.subr.bf16.mxu0 0
      %1006 = vmatpush1.bf16.msra.mxu0 %v987
      %1007 = vmatprep.subr.bf16.mxu0 0
      %1008 = vmatpush1.bf16.msra.mxu0 %v988
      %1009 = vmatprep.subr.bf16.mxu0 0
      %1010 = vmatpush1.bf16.msra.mxu0 %v989
      %1011 = vmatprep.subr.bf16.mxu0 0
      %1012 = vmatpush1.bf16.msra.mxu0 %v990
      %1013 = vmatprep.subr.bf16.mxu0 0
      %1014 = vmatpush1.bf16.msra.mxu0 %v991
      %1015 = vmatprep.subr.bf16.mxu0 0
      %1016 = vmatpush1.bf16.msra.mxu0 %v992
      %1017 = vmatprep.subr.bf16.mxu0 0
      %1018 = vmatpush1.bf16.msra.mxu0 0
      %1019 = vmatprep.subr.bf16.mxu0 0
      %1020 = vmatpush1.bf16.msra.mxu0 0
      %1021 = vmatprep.subr.bf16.mxu0 0
      %1022 = vmatpush1.bf16.msra.mxu0 0
      %1023 = vmatprep.subr.bf16.mxu0 0
      %1024 = vmatpush1.bf16.msra.mxu0 0
      %1025 = vmatprep.subr.bf16.mxu0 0
      %1026 = vmatpush1.bf16.msra.mxu0 0
      %1027 = vmatprep.subr.bf16.mxu0 0
      %1028 = vmatpush1.bf16.msra.mxu0 0
      %1029 = vmatprep.subr.bf16.mxu0 0
      %1030 = vmatpush1.bf16.msra.mxu0 0
      %1031 = vmatprep.subr.bf16.mxu0 0
      %1032 = vmatpush1.bf16.msra.mxu0 0
      %1033 = vmatprep.mubr.bf16.mxu0 0
      %1034 = vmatmul.mubr.bf16.gmra.mrb[0].mxu0 %v943
      %v1035 = vpop.f32.mrb[0].mxu0
      %v1036 = vadd.f32 %v888, %v1035
      %v1037 = vpop.f32.mrb[0].mxu0
      %v1038 = vpop.f32.mrb[0].mxu0
      %v1039 = vadd.f32 %v891, %v1038
      %v1040 = vpop.f32.mrb[0].mxu0
      %1041 = vmatprep.mubr.bf16.mxu0 0
      %1042 = vmatmul.mubr.bf16.gmra.mrb[0].mxu0 %v944
      %v1043 = vpop.f32.mrb[0].mxu0
      %v1044 = vadd.f32 %v896, %v1043
      %v1045 = vpop.f32.mrb[0].mxu0
      %v1046 = vpop.f32.mrb[0].mxu0
      %v1047 = vadd.f32 %v899, %v1046
      %v1048 = vpop.f32.mrb[0].mxu0
      %1049 = vmatprep.mubr.bf16.mxu0 0
      %1050 = vmatmul.mubr.bf16.gmra.mrb[0].mxu0 %v945
      %v1051 = vpop.f32.mrb[0].mxu0
      %v1052 = vadd.f32 %v904, %v1051
      %v1053 = vpop.f32.mrb[0].mxu0
      %v1054 = vpop.f32.mrb[0].mxu0
      %v1055 = vadd.f32 %v907, %v1054
      %v1056 = vpop.f32.mrb[0].mxu0
      %1057 = vmatprep.mubr.bf16.mxu0 0
      %1058 = vmatmul.mubr.bf16.gmra.mrb[0].mxu0 %v946
      %v1059 = vpop.f32.mrb[0].mxu0
      %v1060 = vadd.f32 %v912, %v1059
      %v1061 = vpop.f32.mrb[0].mxu0
      %v1062 = vpop.f32.mrb[0].mxu0
      %v1063 = vadd.f32 %v915, %v1062
      %v1064 = vpop.f32.mrb[0].mxu0
      %1065 = vmatprep.mubr.bf16.mxu0 0
      %1066 = vmatmul.mubr.bf16.gmra.mrb[0].mxu0 %v947
      %v1067 = vpop.f32.mrb[0].mxu0
      %v1068 = vadd.f32 %v920, %v1067
      %v1069 = vpop.f32.mrb[0].mxu0
      %v1070 = vpop.f32.mrb[0].mxu0
      %v1071 = vpop.f32.mrb[0].mxu0
      %1072 = vdwg.mxu0
      %v1073 = vld [vmem:[%s359] sm:$0xf]
      %v1074 = vld [vmem:[%s359 + $0x4] sm:$0xf]
      %v1075 = vld [vmem:[%s359 + $0x8] sm:$0xf]
      %v1076 = vld [vmem:[%s359 + $0xc] sm:$0xf]
      %v1077 = vld [vmem:[%s359 + $0x10] sm:$0xf]
      %v1078 = vld [vmem:[%s359 + $0x14] sm:$0xf]
      %v1079 = vld [vmem:[%s359 + $0x18] sm:$0xf]
      %v1080 = vld [vmem:[%s359 + $0x1c] sm:$0xf]
      %v1081 = vld [vmem:[%s359 + $0x20] sm:$0xf]
      %v1082 = vld [vmem:[%s359 + $0x24] sm:$0x1]
      %s1083 = scalar_lea.vmem %s5, 128
      %v1084 = vld [vmem:[%s1083] sm:$0xf]
      %v1085 = vld [vmem:[%s1083 + $0x4] sm:$0xf]
      %v1086 = vld [vmem:[%s1083 + $0x8] sm:$0xf]
      %v1087 = vld [vmem:[%s1083 + $0xc] sm:$0xf]
      %v1088 = vld [vmem:[%s1083 + $0x10] sm:$0xf]
      %v1089 = vld [vmem:[%s1083 + $0x14] sm:$0xf]
      %v1090 = vld [vmem:[%s1083 + $0x18] sm:$0xf]
      %v1091 = vld [vmem:[%s1083 + $0x1c] sm:$0xf]
      %v1092 = vld [vmem:[%s1083 + $0x20] sm:$0xf]
      %v1093 = vld [vmem:[%s1083 + $0x24] sm:$0xf]
      %v1094 = vld [vmem:[%s1083 + $0x28] sm:$0xf]
      %v1095 = vld [vmem:[%s1083 + $0x2c] sm:$0xf]
      %v1096 = vld [vmem:[%s1083 + $0x30] sm:$0xf]
      %v1097 = vld [vmem:[%s1083 + $0x34] sm:$0xf]
      %v1098 = vld [vmem:[%s1083 + $0x38] sm:$0xf]
      %v1099 = vld [vmem:[%s1083 + $0x3c] sm:$0xf]
      %v1110 = vunpack.c.l.b16 %v1073
      %v1111 = vunpack.c.l.b16 %v1074
      %v1112 = vunpack.c.l.b16 %v1075
      %v1113 = vunpack.c.l.b16 %v1076
      %v1114 = vunpack.c.l.b16 %v1077
      %v1115 = vunpack.c.l.b16 %v1078
      %v1116 = vunpack.c.l.b16 %v1079
      %v1117 = vunpack.c.l.b16 %v1080
      %v1118 = vunpack.c.l.b16 %v1081
      %v1119 = vunpack.c.l.b16 %v1082
      %v1120 = vpack.c.b16 %v1111, %v1110
      %v1121 = vpack.c.b16 %v1113, %v1112
      %v1122 = vpack.c.b16 %v1115, %v1114
      %v1123 = vpack.c.b16 %v1117, %v1116
      %v1124 = vpack.c.b16 %v1119, %v1118
      %vm1125 = vsmask.f32 7424
      %v1127 = vshrl.u32 %v1120, 16
      %v1129 = vshll.u32 %v1120, 16
      %v1131 = vrot.slane %v1129, 1
      %v1132 = vor.u32 %v1127, %v1131
      %v1134 = vshll.u32 %v1121, 16
      %v1136 = vrot.slane %v1134, 1
      %v1137 = vsel %vm1125, %v1132, %v1136
      %v1138 = vshrl.u32 %v1121, 16
      %v1140 = vor.u32 %v1138, %v1136
      %v1142 = vshll.u32 %v1122, 16
      %v1144 = vrot.slane %v1142, 1
      %v1145 = vsel %vm1125, %v1140, %v1144
      %v1146 = vshrl.u32 %v1122, 16
      %v1148 = vor.u32 %v1146, %v1144
      %v1150 = vshll.u32 %v1123, 16
      %v1152 = vrot.slane %v1150, 1
      %v1153 = vsel %vm1125, %v1148, %v1152
      %v1154 = vshrl.u32 %v1123, 16
      %v1156 = vor.u32 %v1154, %v1152
      %v1158 = vshll.u32 %v1124, 16
      %v1160 = vrot.slane %v1158, 1
      %v1161 = vsel %vm1125, %v1156, %v1160
      %v1162 = vshrl.u32 %v1124, 16
      %v1164 = vor.u32 %v1162, %v1160
      %v1186 = vunpack.c.l.b16 %v1084
      %v1187 = vunpack.c.l.b16 %v1085
      %v1188 = vunpack.c.l.b16 %v1086
      %v1189 = vunpack.c.l.b16 %v1087
      %v1190 = vunpack.c.l.b16 %v1088
      %v1191 = vunpack.c.l.b16 %v1089
      %v1192 = vunpack.c.l.b16 %v1090
      %v1193 = vunpack.c.l.b16 %v1091
      %v1194 = vunpack.c.l.b16 %v1092
      %v1195 = vunpack.c.l.b16 %v1093
      %v1196 = vunpack.c.l.b16 %v1094
      %v1197 = vunpack.c.l.b16 %v1095
      %v1198 = vunpack.c.l.b16 %v1096
      %v1199 = vunpack.c.l.b16 %v1097
      %v1200 = vunpack.c.l.b16 %v1098
      %v1201 = vunpack.c.l.b16 %v1099
      %v1202 = vpack.c.b16 %v1187, %v1186
      %v1203 = vpack.c.b16 %v1189, %v1188
      %v1204 = vpack.c.b16 %v1191, %v1190
      %v1205 = vpack.c.b16 %v1193, %v1192
      %v1206 = vpack.c.b16 %v1195, %v1194
      %v1207 = vpack.c.b16 %v1197, %v1196
      %v1208 = vpack.c.b16 %v1199, %v1198
      %v1209 = vpack.c.b16 %v1201, %v1200
      %1218 = vmatprep.subr.bf16.mxu0 0
      %1219 = vmatpush1.bf16.msra.mxu0 %v1202
      %1220 = vmatprep.subr.bf16.mxu0 0
      %1221 = vmatpush1.bf16.msra.mxu0 %v1203
      %1222 = vmatprep.subr.bf16.mxu0 0
      %1223 = vmatpush1.bf16.msra.mxu0 %v1204
      %1224 = vmatprep.subr.bf16.mxu0 0
      %1225 = vmatpush1.bf16.msra.mxu0 %v1205
      %1226 = vmatprep.subr.bf16.mxu0 0
      %1227 = vmatpush1.bf16.msra.mxu0 %v1206
      %1228 = vmatprep.subr.bf16.mxu0 0
      %1229 = vmatpush1.bf16.msra.mxu0 %v1207
      %1230 = vmatprep.subr.bf16.mxu0 0
      %1231 = vmatpush1.bf16.msra.mxu0 %v1208
      %1232 = vmatprep.subr.bf16.mxu0 0
      %1233 = vmatpush1.bf16.msra.mxu0 %v1209
      %1234 = vmatprep.subr.bf16.mxu0 0
      %1235 = vmatpush1.bf16.msra.mxu0 0
      %1236 = vmatprep.subr.bf16.mxu0 0
      %1237 = vmatpush1.bf16.msra.mxu0 0
      %1238 = vmatprep.subr.bf16.mxu0 0
      %1239 = vmatpush1.bf16.msra.mxu0 0
      %1240 = vmatprep.subr.bf16.mxu0 0
      %1241 = vmatpush1.bf16.msra.mxu0 0
      %1242 = vmatprep.subr.bf16.mxu0 0
      %1243 = vmatpush1.bf16.msra.mxu0 0
      %1244 = vmatprep.subr.bf16.mxu0 0
      %1245 = vmatpush1.bf16.msra.mxu0 0
      %1246 = vmatprep.subr.bf16.mxu0 0
      %1247 = vmatpush1.bf16.msra.mxu0 0
      %1248 = vmatprep.subr.bf16.mxu0 0
      %1249 = vmatpush1.bf16.msra.mxu0 0
      %1250 = vmatprep.mubr.bf16.mxu0 0
      %1251 = vmatmul.mubr.bf16.gmra.mrb[0].mxu0 %v1137
      %v1252 = vpop.f32.mrb[0].mxu0
      %v1253 = vadd.f32 0.0, %v1252
      %v1254 = vpop.f32.mrb[0].mxu0
      %v1255 = vpop.f32.mrb[0].mxu0
      %v1256 = vadd.f32 0.0, %v1255
      %v1257 = vpop.f32.mrb[0].mxu0
      %1258 = vmatprep.mubr.bf16.mxu0 0
      %1259 = vmatmul.mubr.bf16.gmra.mrb[0].mxu0 %v1145
      %v1260 = vpop.f32.mrb[0].mxu0
      %v1261 = vadd.f32 0.0, %v1260
      %v1262 = vpop.f32.mrb[0].mxu0
      %v1263 = vpop.f32.mrb[0].mxu0
      %v1264 = vadd.f32 0.0, %v1263
      %v1265 = vpop.f32.mrb[0].mxu0
      %1266 = vmatprep.mubr.bf16.mxu0 0
      %1267 = vmatmul.mubr.bf16.gmra.mrb[0].mxu0 %v1153
      %v1268 = vpop.f32.mrb[0].mxu0
      %v1269 = vadd.f32 0.0, %v1268
      %v1270 = vpop.f32.mrb[0].mxu0
      %v1271 = vpop.f32.mrb[0].mxu0
      %v1272 = vadd.f32 0.0, %v1271
      %v1273 = vpop.f32.mrb[0].mxu0
      %1274 = vmatprep.mubr.bf16.mxu0 0
      %1275 = vmatmul.mubr.bf16.gmra.mrb[0].mxu0 %v1161
      %v1276 = vpop.f32.mrb[0].mxu0
      %v1277 = vadd.f32 0.0, %v1276
      %v1278 = vpop.f32.mrb[0].mxu0
      %v1279 = vpop.f32.mrb[0].mxu0
      %v1280 = vadd.f32 0.0, %v1279
      %v1281 = vpop.f32.mrb[0].mxu0
      %1282 = vmatprep.mubr.bf16.mxu0 0
      %1283 = vmatmul.mubr.bf16.gmra.mrb[0].mxu0 %v1164
      %v1284 = vpop.f32.mrb[0].mxu0
      %v1285 = vadd.f32 0.0, %v1284
      %v1286 = vpop.f32.mrb[0].mxu0
      %v1287 = vpop.f32.mrb[0].mxu0
      %v1288 = vpop.f32.mrb[0].mxu0
      %1289 = vdwg.mxu0
      %v1290 = vadd.f32 %v1036, %v1253
      %v1291 = vadd.f32 %v1039, %v1256
      %v1292 = vadd.f32 %v1044, %v1261
      %v1293 = vadd.f32 %v1047, %v1264
      %v1294 = vadd.f32 %v1052, %v1269
      %v1295 = vadd.f32 %v1055, %v1272
      %v1296 = vadd.f32 %v1060, %v1277
      %v1297 = vadd.f32 %v1063, %v1280
      %v1298 = vadd.f32 %v1068, %v1285
      %v1299 = vld [vmem:[%s369] sm:$0xf]
      %v1300 = vld [vmem:[%s369 + $0x4] sm:$0xf]
      %v1301 = vld [vmem:[%s369 + $0x8] sm:$0xf]
      %v1302 = vld [vmem:[%s369 + $0xc] sm:$0xf]
      %v1303 = vld [vmem:[%s369 + $0x10] sm:$0xf]
      %v1304 = vld [vmem:[%s369 + $0x14] sm:$0xf]
      %v1305 = vld [vmem:[%s369 + $0x18] sm:$0xf]
      %v1306 = vld [vmem:[%s369 + $0x1c] sm:$0xf]
      %v1307 = vld [vmem:[%s369 + $0x20] sm:$0xf]
      %s1308 = scalar_lea.vmem %s5, 192
      %v1309 = vld [vmem:[%s1308] sm:$0xf]
      %v1310 = vld [vmem:[%s1308 + $0x4] sm:$0xf]
      %v1311 = vld [vmem:[%s1308 + $0x8] sm:$0xf]
      %v1312 = vld [vmem:[%s1308 + $0xc] sm:$0xf]
      %v1313 = vld [vmem:[%s1308 + $0x10] sm:$0xf]
      %v1314 = vld [vmem:[%s1308 + $0x14] sm:$0xf]
      %v1315 = vld [vmem:[%s1308 + $0x18] sm:$0xf]
      %v1316 = vld [vmem:[%s1308 + $0x1c] sm:$0xf]
      %v1317 = vld [vmem:[%s1308 + $0x20] sm:$0xf]
      %v1318 = vld [vmem:[%s1308 + $0x24] sm:$0xf]
      %v1319 = vld [vmem:[%s1308 + $0x28] sm:$0xf]
      %v1320 = vld [vmem:[%s1308 + $0x2c] sm:$0xf]
      %v1321 = vld [vmem:[%s1308 + $0x30] sm:$0xf]
      %v1322 = vld [vmem:[%s1308 + $0x34] sm:$0xf]
      %v1323 = vld [vmem:[%s1308 + $0x38] sm:$0xf]
      %v1324 = vld [vmem:[%s1308 + $0x3c] sm:$0xf]
      %v1334 = vunpack.c.l.b16 %v1299
      %v1335 = vunpack.c.l.b16 %v1300
      %v1336 = vunpack.c.l.b16 %v1301
      %v1337 = vunpack.c.l.b16 %v1302
      %v1338 = vunpack.c.l.b16 %v1303
      %v1339 = vunpack.c.l.b16 %v1304
      %v1340 = vunpack.c.l.b16 %v1305
      %v1341 = vunpack.c.l.b16 %v1306
      %v1342 = vunpack.c.l.b16 %v1307
      %v1343 = vpack.c.b16 %v1335, %v1334
      %v1344 = vpack.c.b16 %v1337, %v1336
      %v1345 = vpack.c.b16 %v1339, %v1338
      %v1346 = vpack.c.b16 %v1341, %v1340
      %v1347 = vpack.c.b16 %v1342, %v1342
      %v1369 = vunpack.c.l.b16 %v1309
      %v1370 = vunpack.c.l.b16 %v1310
      %v1371 = vunpack.c.l.b16 %v1311
      %v1372 = vunpack.c.l.b16 %v1312
      %v1373 = vunpack.c.l.b16 %v1313
      %v1374 = vunpack.c.l.b16 %v1314
      %v1375 = vunpack.c.l.b16 %v1315
      %v1376 = vunpack.c.l.b16 %v1316
      %v1377 = vunpack.c.l.b16 %v1317
      %v1378 = vunpack.c.l.b16 %v1318
      %v1379 = vunpack.c.l.b16 %v1319
      %v1380 = vunpack.c.l.b16 %v1320
      %v1381 = vunpack.c.l.b16 %v1321
      %v1382 = vunpack.c.l.b16 %v1322
      %v1383 = vunpack.c.l.b16 %v1323
      %v1384 = vunpack.c.l.b16 %v1324
      %v1385 = vpack.c.b16 %v1370, %v1369
      %v1386 = vpack.c.b16 %v1372, %v1371
      %v1387 = vpack.c.b16 %v1374, %v1373
      %v1388 = vpack.c.b16 %v1376, %v1375
      %v1389 = vpack.c.b16 %v1378, %v1377
      %v1390 = vpack.c.b16 %v1380, %v1379
      %v1391 = vpack.c.b16 %v1382, %v1381
      %v1392 = vpack.c.b16 %v1384, %v1383
      %1401 = vmatprep.subr.bf16.mxu0 0
      %1402 = vmatpush1.bf16.msra.mxu0 %v1385
      %1403 = vmatprep.subr.bf16.mxu0 0
      %1404 = vmatpush1.bf16.msra.mxu0 %v1386
      %1405 = vmatprep.subr.bf16.mxu0 0
      %1406 = vmatpush1.bf16.msra.mxu0 %v1387
      %1407 = vmatprep.subr.bf16.mxu0 0
      %1408 = vmatpush1.bf16.msra.mxu0 %v1388
      %1409 = vmatprep.subr.bf16.mxu0 0
      %1410 = vmatpush1.bf16.msra.mxu0 %v1389
      %1411 = vmatprep.subr.bf16.mxu0 0
      %1412 = vmatpush1.bf16.msra.mxu0 %v1390
      %1413 = vmatprep.subr.bf16.mxu0 0
      %1414 = vmatpush1.bf16.msra.mxu0 %v1391
      %1415 = vmatprep.subr.bf16.mxu0 0
      %1416 = vmatpush1.bf16.msra.mxu0 %v1392
      %1417 = vmatprep.subr.bf16.mxu0 0
      %1418 = vmatpush1.bf16.msra.mxu0 0
      %1419 = vmatprep.subr.bf16.mxu0 0
      %1420 = vmatpush1.bf16.msra.mxu0 0
      %1421 = vmatprep.subr.bf16.mxu0 0
      %1422 = vmatpush1.bf16.msra.mxu0 0
      %1423 = vmatprep.subr.bf16.mxu0 0
      %1424 = vmatpush1.bf16.msra.mxu0 0
      %1425 = vmatprep.subr.bf16.mxu0 0
      %1426 = vmatpush1.bf16.msra.mxu0 0
      %1427 = vmatprep.subr.bf16.mxu0 0
      %1428 = vmatpush1.bf16.msra.mxu0 0
      %1429 = vmatprep.subr.bf16.mxu0 0
      %1430 = vmatpush1.bf16.msra.mxu0 0
      %1431 = vmatprep.subr.bf16.mxu0 0
      %1432 = vmatpush1.bf16.msra.mxu0 0
      %1433 = vmatprep.mubr.bf16.mxu0 0
      %1434 = vmatmul.mubr.bf16.gmra.mrb[0].mxu0 %v1343
      %v1435 = vpop.f32.mrb[0].mxu0
      %v1436 = vadd.f32 0.0, %v1435
      %v1437 = vpop.f32.mrb[0].mxu0
      %v1438 = vpop.f32.mrb[0].mxu0
      %v1439 = vadd.f32 0.0, %v1438
      %v1440 = vpop.f32.mrb[0].mxu0
      %1441 = vmatprep.mubr.bf16.mxu0 0
      %1442 = vmatmul.mubr.bf16.gmra.mrb[0].mxu0 %v1344
      %v1443 = vpop.f32.mrb[0].mxu0
      %v1444 = vadd.f32 0.0, %v1443
      %v1445 = vpop.f32.mrb[0].mxu0
      %v1446 = vpop.f32.mrb[0].mxu0
      %v1447 = vadd.f32 0.0, %v1446
      %v1448 = vpop.f32.mrb[0].mxu0
      %1449 = vmatprep.mubr.bf16.mxu0 0
      %1450 = vmatmul.mubr.bf16.gmra.mrb[0].mxu0 %v1345
      %v1451 = vpop.f32.mrb[0].mxu0
      %v1452 = vadd.f32 0.0, %v1451
      %v1453 = vpop.f32.mrb[0].mxu0
      %v1454 = vpop.f32.mrb[0].mxu0
      %v1455 = vadd.f32 0.0, %v1454
      %v1456 = vpop.f32.mrb[0].mxu0
      %1457 = vmatprep.mubr.bf16.mxu0 0
      %1458 = vmatmul.mubr.bf16.gmra.mrb[0].mxu0 %v1346
      %v1459 = vpop.f32.mrb[0].mxu0
      %v1460 = vadd.f32 0.0, %v1459
      %v1461 = vpop.f32.mrb[0].mxu0
      %v1462 = vpop.f32.mrb[0].mxu0
      %v1463 = vadd.f32 0.0, %v1462
      %v1464 = vpop.f32.mrb[0].mxu0
      %1465 = vmatprep.mubr.bf16.mxu0 0
      %1466 = vmatmul.mubr.bf16.gmra.mrb[0].mxu0 %v1347
      %v1467 = vpop.f32.mrb[0].mxu0
      %v1468 = vadd.f32 0.0, %v1467
      %v1469 = vpop.f32.mrb[0].mxu0
      %v1470 = vpop.f32.mrb[0].mxu0
      %v1471 = vpop.f32.mrb[0].mxu0
      %1472 = vdwg.mxu0
      %v1473 = vadd.f32 %v1290, %v1436
      %v1474 = vadd.f32 %v1291, %v1439
      %v1475 = vadd.f32 %v1292, %v1444
      %v1476 = vadd.f32 %v1293, %v1447
      %v1477 = vadd.f32 %v1294, %v1452
      %v1478 = vadd.f32 %v1295, %v1455
      %v1479 = vadd.f32 %v1296, %v1460
      %v1480 = vadd.f32 %v1297, %v1463
      %v1481 = vadd.f32 %v1298, %v1468
      %s1482 = scalar_lea.vmem %s5, 256
      %v1483 = vld [vmem:[%s1482] sm:$0xf]
      %v1484 = vld [vmem:[%s1482 + $0x4] sm:$0xf]
      %v1485 = vld [vmem:[%s1482 + $0x8] sm:$0xf]
      %v1486 = vld [vmem:[%s1482 + $0xc] sm:$0xf]
      %v1487 = vld [vmem:[%s1482 + $0x10] sm:$0xf]
      %v1488 = vld [vmem:[%s1482 + $0x14] sm:$0xf]
      %v1489 = vld [vmem:[%s1482 + $0x18] sm:$0xf]
      %v1490 = vld [vmem:[%s1482 + $0x1c] sm:$0xf]
      %v1491 = vld [vmem:[%s1482 + $0x20] sm:$0xf]
      %v1492 = vld [vmem:[%s1482 + $0x24] sm:$0xf]
      %v1493 = vld [vmem:[%s1482 + $0x28] sm:$0xf]
      %v1494 = vld [vmem:[%s1482 + $0x2c] sm:$0xf]
      %v1495 = vld [vmem:[%s1482 + $0x30] sm:$0xf]
      %v1496 = vld [vmem:[%s1482 + $0x34] sm:$0xf]
      %v1497 = vld [vmem:[%s1482 + $0x38] sm:$0xf]
      %v1498 = vld [vmem:[%s1482 + $0x3c] sm:$0xf]
      %v1515 = vunpack.c.l.b16 %v1483
      %v1516 = vunpack.c.l.b16 %v1484
      %v1517 = vunpack.c.l.b16 %v1485
      %v1518 = vunpack.c.l.b16 %v1486
      %v1519 = vunpack.c.l.b16 %v1487
      %v1520 = vunpack.c.l.b16 %v1488
      %v1521 = vunpack.c.l.b16 %v1489
      %v1522 = vunpack.c.l.b16 %v1490
      %v1523 = vunpack.c.l.b16 %v1491
      %v1524 = vunpack.c.l.b16 %v1492
      %v1525 = vunpack.c.l.b16 %v1493
      %v1526 = vunpack.c.l.b16 %v1494
      %v1527 = vunpack.c.l.b16 %v1495
      %v1528 = vunpack.c.l.b16 %v1496
      %v1529 = vunpack.c.l.b16 %v1497
      %v1530 = vunpack.c.l.b16 %v1498
      %v1531 = vpack.c.b16 %v1516, %v1515
      %v1532 = vpack.c.b16 %v1518, %v1517
      %v1533 = vpack.c.b16 %v1520, %v1519
      %v1534 = vpack.c.b16 %v1522, %v1521
      %v1535 = vpack.c.b16 %v1524, %v1523
      %v1536 = vpack.c.b16 %v1526, %v1525
      %v1537 = vpack.c.b16 %v1528, %v1527
      %v1538 = vpack.c.b16 %v1530, %v1529
      %1547 = vmatprep.subr.bf16.mxu0 0
      %1548 = vmatpush1.bf16.msra.mxu0 %v1531
      %1549 = vmatprep.subr.bf16.mxu0 0
      %1550 = vmatpush1.bf16.msra.mxu0 %v1532
      %1551 = vmatprep.subr.bf16.mxu0 0
      %1552 = vmatpush1.bf16.msra.mxu0 %v1533
      %1553 = vmatprep.subr.bf16.mxu0 0
      %1554 = vmatpush1.bf16.msra.mxu0 %v1534
      %1555 = vmatprep.subr.bf16.mxu0 0
      %1556 = vmatpush1.bf16.msra.mxu0 %v1535
      %1557 = vmatprep.subr.bf16.mxu0 0
      %1558 = vmatpush1.bf16.msra.mxu0 %v1536
      %1559 = vmatprep.subr.bf16.mxu0 0
      %1560 = vmatpush1.bf16.msra.mxu0 %v1537
      %1561 = vmatprep.subr.bf16.mxu0 0
      %1562 = vmatpush1.bf16.msra.mxu0 %v1538
      %1563 = vmatprep.subr.bf16.mxu0 0
      %1564 = vmatpush1.bf16.msra.mxu0 0
      %1565 = vmatprep.subr.bf16.mxu0 0
      %1566 = vmatpush1.bf16.msra.mxu0 0
      %1567 = vmatprep.subr.bf16.mxu0 0
      %1568 = vmatpush1.bf16.msra.mxu0 0
      %1569 = vmatprep.subr.bf16.mxu0 0
      %1570 = vmatpush1.bf16.msra.mxu0 0
      %1571 = vmatprep.subr.bf16.mxu0 0
      %1572 = vmatpush1.bf16.msra.mxu0 0
      %1573 = vmatprep.subr.bf16.mxu0 0
      %1574 = vmatpush1.bf16.msra.mxu0 0
      %1575 = vmatprep.subr.bf16.mxu0 0
      %1576 = vmatpush1.bf16.msra.mxu0 0
      %1577 = vmatprep.subr.bf16.mxu0 0
      %1578 = vmatpush1.bf16.msra.mxu0 0
      %1579 = vmatprep.mubr.bf16.mxu0 0
      %1580 = vmatmul.mubr.bf16.gmra.mrb[0].mxu0 %v596
      %v1581 = vpop.f32.mrb[0].mxu0
      %v1582 = vadd.f32 0.0, %v1581
      %v1583 = vpop.f32.mrb[0].mxu0
      %v1584 = vpop.f32.mrb[0].mxu0
      %v1585 = vadd.f32 0.0, %v1584
      %v1586 = vpop.f32.mrb[0].mxu0
      %1587 = vmatprep.mubr.bf16.mxu0 0
      %1588 = vmatmul.mubr.bf16.gmra.mrb[0].mxu0 %v597
      %v1589 = vpop.f32.mrb[0].mxu0
      %v1590 = vadd.f32 0.0, %v1589
      %v1591 = vpop.f32.mrb[0].mxu0
      %v1592 = vpop.f32.mrb[0].mxu0
      %v1593 = vadd.f32 0.0, %v1592
      %v1594 = vpop.f32.mrb[0].mxu0
      %1595 = vmatprep.mubr.bf16.mxu0 0
      %1596 = vmatmul.mubr.bf16.gmra.mrb[0].mxu0 %v598
      %v1597 = vpop.f32.mrb[0].mxu0
      %v1598 = vadd.f32 0.0, %v1597
      %v1599 = vpop.f32.mrb[0].mxu0
      %v1600 = vpop.f32.mrb[0].mxu0
      %v1601 = vadd.f32 0.0, %v1600
      %v1602 = vpop.f32.mrb[0].mxu0
      %1603 = vmatprep.mubr.bf16.mxu0 0
      %1604 = vmatmul.mubr.bf16.gmra.mrb[0].mxu0 %v599
      %v1605 = vpop.f32.mrb[0].mxu0
      %v1606 = vadd.f32 0.0, %v1605
      %v1607 = vpop.f32.mrb[0].mxu0
      %v1608 = vpop.f32.mrb[0].mxu0
      %v1609 = vadd.f32 0.0, %v1608
      %v1610 = vpop.f32.mrb[0].mxu0
      %1611 = vmatprep.mubr.bf16.mxu0 0
      %1612 = vmatmul.mubr.bf16.gmra.mrb[0].mxu0 %v600
      %v1613 = vpop.f32.mrb[0].mxu0
      %v1614 = vadd.f32 0.0, %v1613
      %v1615 = vpop.f32.mrb[0].mxu0
      %v1616 = vpop.f32.mrb[0].mxu0
      %v1617 = vpop.f32.mrb[0].mxu0
      %1618 = vdwg.mxu0
      %v1619 = vadd.f32 %v1473, %v1582
      %v1620 = vadd.f32 %v1474, %v1585
      %v1621 = vadd.f32 %v1475, %v1590
      %v1622 = vadd.f32 %v1476, %v1593
      %v1623 = vadd.f32 %v1477, %v1598
      %v1624 = vadd.f32 %v1478, %v1601
      %v1625 = vadd.f32 %v1479, %v1606
      %v1626 = vadd.f32 %v1480, %v1609
      %v1627 = vadd.f32 %v1481, %v1614
      %v1628 = vld [vmem:[%s369] sm:$0xf]
      %v1629 = vld [vmem:[%s369 + $0x4] sm:$0xf]
      %v1630 = vld [vmem:[%s369 + $0x8] sm:$0xf]
      %v1631 = vld [vmem:[%s369 + $0xc] sm:$0xf]
      %v1632 = vld [vmem:[%s369 + $0x10] sm:$0xf]
      %v1633 = vld [vmem:[%s369 + $0x14] sm:$0xf]
      %v1634 = vld [vmem:[%s369 + $0x18] sm:$0xf]
      %v1635 = vld [vmem:[%s369 + $0x1c] sm:$0xf]
      %v1636 = vld [vmem:[%s369 + $0x20] sm:$0xf]
      %v1637 = vld [vmem:[%s369 + $0x24] sm:$0x1]
      %s1638 = scalar_lea.vmem %s5, 320
      %v1639 = vld [vmem:[%s1638] sm:$0xf]
      %v1640 = vld [vmem:[%s1638 + $0x4] sm:$0xf]
      %v1641 = vld [vmem:[%s1638 + $0x8] sm:$0xf]
      %v1642 = vld [vmem:[%s1638 + $0xc] sm:$0xf]
      %v1643 = vld [vmem:[%s1638 + $0x10] sm:$0xf]
      %v1644 = vld [vmem:[%s1638 + $0x14] sm:$0xf]
      %v1645 = vld [vmem:[%s1638 + $0x18] sm:$0xf]
      %v1646 = vld [vmem:[%s1638 + $0x1c] sm:$0xf]
      %v1647 = vld [vmem:[%s1638 + $0x20] sm:$0xf]
      %v1648 = vld [vmem:[%s1638 + $0x24] sm:$0xf]
      %v1649 = vld [vmem:[%s1638 + $0x28] sm:$0xf]
      %v1650 = vld [vmem:[%s1638 + $0x2c] sm:$0xf]
      %v1651 = vld [vmem:[%s1638 + $0x30] sm:$0xf]
      %v1652 = vld [vmem:[%s1638 + $0x34] sm:$0xf]
      %v1653 = vld [vmem:[%s1638 + $0x38] sm:$0xf]
      %v1654 = vld [vmem:[%s1638 + $0x3c] sm:$0xf]
      %v1665 = vunpack.c.l.b16 %v1628
      %v1666 = vunpack.c.l.b16 %v1629
      %v1667 = vunpack.c.l.b16 %v1630
      %v1668 = vunpack.c.l.b16 %v1631
      %v1669 = vunpack.c.l.b16 %v1632
      %v1670 = vunpack.c.l.b16 %v1633
      %v1671 = vunpack.c.l.b16 %v1634
      %v1672 = vunpack.c.l.b16 %v1635
      %v1673 = vunpack.c.l.b16 %v1636
      %v1674 = vunpack.c.l.b16 %v1637
      %v1675 = vpack.c.b16 %v1666, %v1665
      %v1676 = vpack.c.b16 %v1668, %v1667
      %v1677 = vpack.c.b16 %v1670, %v1669
      %v1678 = vpack.c.b16 %v1672, %v1671
      %v1679 = vpack.c.b16 %v1674, %v1673
      %v1681 = vshrl.u32 %v1675, 16
      %v1683 = vshll.u32 %v1675, 16
      %v1685 = vrot.slane %v1683, 1
      %v1686 = vor.u32 %v1681, %v1685
      %v1688 = vshll.u32 %v1676, 16
      %v1690 = vrot.slane %v1688, 1
      %v1691 = vsel %vm1125, %v1686, %v1690
      %v1692 = vshrl.u32 %v1676, 16
      %v1694 = vor.u32 %v1692, %v1690
      %v1696 = vshll.u32 %v1677, 16
      %v1698 = vrot.slane %v1696, 1
      %v1699 = vsel %vm1125, %v1694, %v1698
      %v1700 = vshrl.u32 %v1677, 16
      %v1702 = vor.u32 %v1700, %v1698
      %v1704 = vshll.u32 %v1678, 16
      %v1706 = vrot.slane %v1704, 1
      %v1707 = vsel %vm1125, %v1702, %v1706
      %v1708 = vshrl.u32 %v1678, 16
      %v1710 = vor.u32 %v1708, %v1706
      %v1712 = vshll.u32 %v1679, 16
      %v1714 = vrot.slane %v1712, 1
      %v1715 = vsel %vm1125, %v1710, %v1714
      %v1716 = vshrl.u32 %v1679, 16
      %v1718 = vor.u32 %v1716, %v1714
      %v1740 = vunpack.c.l.b16 %v1639
      %v1741 = vunpack.c.l.b16 %v1640
      %v1742 = vunpack.c.l.b16 %v1641
      %v1743 = vunpack.c.l.b16 %v1642
      %v1744 = vunpack.c.l.b16 %v1643
      %v1745 = vunpack.c.l.b16 %v1644
      %v1746 = vunpack.c.l.b16 %v1645
      %v1747 = vunpack.c.l.b16 %v1646
      %v1748 = vunpack.c.l.b16 %v1647
      %v1749 = vunpack.c.l.b16 %v1648
      %v1750 = vunpack.c.l.b16 %v1649
      %v1751 = vunpack.c.l.b16 %v1650
      %v1752 = vunpack.c.l.b16 %v1651
      %v1753 = vunpack.c.l.b16 %v1652
      %v1754 = vunpack.c.l.b16 %v1653
      %v1755 = vunpack.c.l.b16 %v1654
      %v1756 = vpack.c.b16 %v1741, %v1740
      %v1757 = vpack.c.b16 %v1743, %v1742
      %v1758 = vpack.c.b16 %v1745, %v1744
      %v1759 = vpack.c.b16 %v1747, %v1746
      %v1760 = vpack.c.b16 %v1749, %v1748
      %v1761 = vpack.c.b16 %v1751, %v1750
      %v1762 = vpack.c.b16 %v1753, %v1752
      %v1763 = vpack.c.b16 %v1755, %v1754
      %1772 = vmatprep.subr.bf16.mxu0 0
      %1773 = vmatpush1.bf16.msra.mxu0 %v1756
      %1774 = vmatprep.subr.bf16.mxu0 0
      %1775 = vmatpush1.bf16.msra.mxu0 %v1757
      %1776 = vmatprep.subr.bf16.mxu0 0
      %1777 = vmatpush1.bf16.msra.mxu0 %v1758
      %1778 = vmatprep.subr.bf16.mxu0 0
      %1779 = vmatpush1.bf16.msra.mxu0 %v1759
      %1780 = vmatprep.subr.bf16.mxu0 0
      %1781 = vmatpush1.bf16.msra.mxu0 %v1760
      %1782 = vmatprep.subr.bf16.mxu0 0
      %1783 = vmatpush1.bf16.msra.mxu0 %v1761
      %1784 = vmatprep.subr.bf16.mxu0 0
      %1785 = vmatpush1.bf16.msra.mxu0 %v1762
      %1786 = vmatprep.subr.bf16.mxu0 0
      %1787 = vmatpush1.bf16.msra.mxu0 %v1763
      %1788 = vmatprep.subr.bf16.mxu0 0
      %1789 = vmatpush1.bf16.msra.mxu0 0
      %1790 = vmatprep.subr.bf16.mxu0 0
      %1791 = vmatpush1.bf16.msra.mxu0 0
      %1792 = vmatprep.subr.bf16.mxu0 0
      %1793 = vmatpush1.bf16.msra.mxu0 0
      %1794 = vmatprep.subr.bf16.mxu0 0
      %1795 = vmatpush1.bf16.msra.mxu0 0
      %1796 = vmatprep.subr.bf16.mxu0 0
      %1797 = vmatpush1.bf16.msra.mxu0 0
      %1798 = vmatprep.subr.bf16.mxu0 0
      %1799 = vmatpush1.bf16.msra.mxu0 0
      %1800 = vmatprep.subr.bf16.mxu0 0
      %1801 = vmatpush1.bf16.msra.mxu0 0
      %1802 = vmatprep.subr.bf16.mxu0 0
      %1803 = vmatpush1.bf16.msra.mxu0 0
      %1804 = vmatprep.mubr.bf16.mxu0 0
      %1805 = vmatmul.mubr.bf16.gmra.mrb[0].mxu0 %v1691
      %v1806 = vpop.f32.mrb[0].mxu0
      %v1807 = vadd.f32 0.0, %v1806
      %v1808 = vpop.f32.mrb[0].mxu0
      %v1809 = vpop.f32.mrb[0].mxu0
      %v1810 = vadd.f32 0.0, %v1809
      %v1811 = vpop.f32.mrb[0].mxu0
      %1812 = vmatprep.mubr.bf16.mxu0 0
      %1813 = vmatmul.mubr.bf16.gmra.mrb[0].mxu0 %v1699
      %v1814 = vpop.f32.mrb[0].mxu0
      %v1815 = vadd.f32 0.0, %v1814
      %v1816 = vpop.f32.mrb[0].mxu0
      %v1817 = vpop.f32.mrb[0].mxu0
      %v1818 = vadd.f32 0.0, %v1817
      %v1819 = vpop.f32.mrb[0].mxu0
      %1820 = vmatprep.mubr.bf16.mxu0 0
      %1821 = vmatmul.mubr.bf16.gmra.mrb[0].mxu0 %v1707
      %v1822 = vpop.f32.mrb[0].mxu0
      %v1823 = vadd.f32 0.0, %v1822
      %v1824 = vpop.f32.mrb[0].mxu0
      %v1825 = vpop.f32.mrb[0].mxu0
      %v1826 = vadd.f32 0.0, %v1825
      %v1827 = vpop.f32.mrb[0].mxu0
      %1828 = vmatprep.mubr.bf16.mxu0 0
      %1829 = vmatmul.mubr.bf16.gmra.mrb[0].mxu0 %v1715
      %v1830 = vpop.f32.mrb[0].mxu0
      %v1831 = vadd.f32 0.0, %v1830
      %v1832 = vpop.f32.mrb[0].mxu0
      %v1833 = vpop.f32.mrb[0].mxu0
      %v1834 = vadd.f32 0.0, %v1833
      %v1835 = vpop.f32.mrb[0].mxu0
      %1836 = vmatprep.mubr.bf16.mxu0 0
      %1837 = vmatmul.mubr.bf16.gmra.mrb[0].mxu0 %v1718
      %v1838 = vpop.f32.mrb[0].mxu0
      %v1839 = vadd.f32 0.0, %v1838
      %v1840 = vpop.f32.mrb[0].mxu0
      %v1841 = vpop.f32.mrb[0].mxu0
      %v1842 = vpop.f32.mrb[0].mxu0
      %1843 = vdwg.mxu0
      %v1844 = vadd.f32 %v1619, %v1807
      %v1845 = vadd.f32 %v1620, %v1810
      %v1846 = vadd.f32 %v1621, %v1815
      %v1847 = vadd.f32 %v1622, %v1818
      %v1848 = vadd.f32 %v1623, %v1823
      %v1849 = vadd.f32 %v1624, %v1826
      %v1850 = vadd.f32 %v1625, %v1831
      %v1851 = vadd.f32 %v1626, %v1834
      %v1852 = vadd.f32 %v1627, %v1839
      %v1853 = vld [vmem:[%s359 + $0x4] sm:$0xf]
      %v1854 = vld [vmem:[%s359 + $0x8] sm:$0xf]
      %v1855 = vld [vmem:[%s359 + $0xc] sm:$0xf]
      %v1856 = vld [vmem:[%s359 + $0x10] sm:$0xf]
      %v1857 = vld [vmem:[%s359 + $0x14] sm:$0xf]
      %v1858 = vld [vmem:[%s359 + $0x18] sm:$0xf]
      %v1859 = vld [vmem:[%s359 + $0x1c] sm:$0xf]
      %v1860 = vld [vmem:[%s359 + $0x20] sm:$0xf]
      %v1861 = vld [vmem:[%s359 + $0x24] sm:$0xf]
      %v1862 = vld [vmem:[%s359 + $0x28] sm:$0x1]
      %s1863 = scalar_lea.vmem %s5, 384
      %v1864 = vld [vmem:[%s1863] sm:$0xf]
      %v1865 = vld [vmem:[%s1863 + $0x4] sm:$0xf]
      %v1866 = vld [vmem:[%s1863 + $0x8] sm:$0xf]
      %v1867 = vld [vmem:[%s1863 + $0xc] sm:$0xf]
      %v1868 = vld [vmem:[%s1863 + $0x10] sm:$0xf]
      %v1869 = vld [vmem:[%s1863 + $0x14] sm:$0xf]
      %v1870 = vld [vmem:[%s1863 + $0x18] sm:$0xf]
      %v1871 = vld [vmem:[%s1863 + $0x1c] sm:$0xf]
      %v1872 = vld [vmem:[%s1863 + $0x20] sm:$0xf]
      %v1873 = vld [vmem:[%s1863 + $0x24] sm:$0xf]
      %v1874 = vld [vmem:[%s1863 + $0x28] sm:$0xf]
      %v1875 = vld [vmem:[%s1863 + $0x2c] sm:$0xf]
      %v1876 = vld [vmem:[%s1863 + $0x30] sm:$0xf]
      %v1877 = vld [vmem:[%s1863 + $0x34] sm:$0xf]
      %v1878 = vld [vmem:[%s1863 + $0x38] sm:$0xf]
      %v1879 = vld [vmem:[%s1863 + $0x3c] sm:$0xf]
      %v1890 = vunpack.c.l.b16 %v1853
      %v1891 = vunpack.c.l.b16 %v1854
      %v1892 = vunpack.c.l.b16 %v1855
      %v1893 = vunpack.c.l.b16 %v1856
      %v1894 = vunpack.c.l.b16 %v1857
      %v1895 = vunpack.c.l.b16 %v1858
      %v1896 = vunpack.c.l.b16 %v1859
      %v1897 = vunpack.c.l.b16 %v1860
      %v1898 = vunpack.c.l.b16 %v1861
      %v1899 = vunpack.c.l.b16 %v1862
      %v1900 = vpack.c.b16 %v1891, %v1890
      %v1901 = vpack.c.b16 %v1893, %v1892
      %v1902 = vpack.c.b16 %v1895, %v1894
      %v1903 = vpack.c.b16 %v1897, %v1896
      %v1904 = vpack.c.b16 %v1899, %v1898
      %v1906 = vshrl.u32 %v1900, 16
      %v1908 = vshll.u32 %v1900, 16
      %v1910 = vrot.slane %v1908, 1
      %v1911 = vor.u32 %v1906, %v1910
      %v1913 = vshll.u32 %v1901, 16
      %v1915 = vrot.slane %v1913, 1
      %v1916 = vsel %vm1125, %v1911, %v1915
      %v1917 = vshrl.u32 %v1901, 16
      %v1919 = vor.u32 %v1917, %v1915
      %v1921 = vshll.u32 %v1902, 16
      %v1923 = vrot.slane %v1921, 1
      %v1924 = vsel %vm1125, %v1919, %v1923
      %v1925 = vshrl.u32 %v1902, 16
      %v1927 = vor.u32 %v1925, %v1923
      %v1929 = vshll.u32 %v1903, 16
      %v1931 = vrot.slane %v1929, 1
      %v1932 = vsel %vm1125, %v1927, %v1931
      %v1933 = vshrl.u32 %v1903, 16
      %v1935 = vor.u32 %v1933, %v1931
      %v1937 = vshll.u32 %v1904, 16
      %v1939 = vrot.slane %v1937, 1
      %v1940 = vsel %vm1125, %v1935, %v1939
      %v1941 = vshrl.u32 %v1904, 16
      %v1943 = vor.u32 %v1941, %v1939
      %v1965 = vunpack.c.l.b16 %v1864
      %v1966 = vunpack.c.l.b16 %v1865
      %v1967 = vunpack.c.l.b16 %v1866
      %v1968 = vunpack.c.l.b16 %v1867
      %v1969 = vunpack.c.l.b16 %v1868
      %v1970 = vunpack.c.l.b16 %v1869
      %v1971 = vunpack.c.l.b16 %v1870
      %v1972 = vunpack.c.l.b16 %v1871
      %v1973 = vunpack.c.l.b16 %v1872
      %v1974 = vunpack.c.l.b16 %v1873
      %v1975 = vunpack.c.l.b16 %v1874
      %v1976 = vunpack.c.l.b16 %v1875
      %v1977 = vunpack.c.l.b16 %v1876
      %v1978 = vunpack.c.l.b16 %v1877
      %v1979 = vunpack.c.l.b16 %v1878
      %v1980 = vunpack.c.l.b16 %v1879
      %v1981 = vpack.c.b16 %v1966, %v1965
      %v1982 = vpack.c.b16 %v1968, %v1967
      %v1983 = vpack.c.b16 %v1970, %v1969
      %v1984 = vpack.c.b16 %v1972, %v1971
      %v1985 = vpack.c.b16 %v1974, %v1973
      %v1986 = vpack.c.b16 %v1976, %v1975
      %v1987 = vpack.c.b16 %v1978, %v1977
      %v1988 = vpack.c.b16 %v1980, %v1979
      %1997 = vmatprep.subr.bf16.mxu0 0
      %1998 = vmatpush1.bf16.msra.mxu0 %v1981
      %1999 = vmatprep.subr.bf16.mxu0 0
      %2000 = vmatpush1.bf16.msra.mxu0 %v1982
      %2001 = vmatprep.subr.bf16.mxu0 0
      %2002 = vmatpush1.bf16.msra.mxu0 %v1983
      %2003 = vmatprep.subr.bf16.mxu0 0
      %2004 = vmatpush1.bf16.msra.mxu0 %v1984
      %2005 = vmatprep.subr.bf16.mxu0 0
      %2006 = vmatpush1.bf16.msra.mxu0 %v1985
      %2007 = vmatprep.subr.bf16.mxu0 0
      %2008 = vmatpush1.bf16.msra.mxu0 %v1986
      %2009 = vmatprep.subr.bf16.mxu0 0
      %2010 = vmatpush1.bf16.msra.mxu0 %v1987
      %2011 = vmatprep.subr.bf16.mxu0 0
      %2012 = vmatpush1.bf16.msra.mxu0 %v1988
      %2013 = vmatprep.subr.bf16.mxu0 0
      %2014 = vmatpush1.bf16.msra.mxu0 0
      %2015 = vmatprep.subr.bf16.mxu0 0
      %2016 = vmatpush1.bf16.msra.mxu0 0
      %2017 = vmatprep.subr.bf16.mxu0 0
      %2018 = vmatpush1.bf16.msra.mxu0 0
      %2019 = vmatprep.subr.bf16.mxu0 0
      %2020 = vmatpush1.bf16.msra.mxu0 0
      %2021 = vmatprep.subr.bf16.mxu0 0
      %2022 = vmatpush1.bf16.msra.mxu0 0
      %2023 = vmatprep.subr.bf16.mxu0 0
      %2024 = vmatpush1.bf16.msra.mxu0 0
      %2025 = vmatprep.subr.bf16.mxu0 0
      %2026 = vmatpush1.bf16.msra.mxu0 0
      %2027 = vmatprep.subr.bf16.mxu0 0
      %2028 = vmatpush1.bf16.msra.mxu0 0
      %2029 = vmatprep.mubr.bf16.mxu0 0
      %2030 = vmatmul.mubr.bf16.gmra.mrb[0].mxu0 %v1916
      %v2031 = vpop.f32.mrb[0].mxu0
      %v2032 = vadd.f32 0.0, %v2031
      %v2033 = vpop.f32.mrb[0].mxu0
      %v2034 = vpop.f32.mrb[0].mxu0
      %v2035 = vadd.f32 0.0, %v2034
      %v2036 = vpop.f32.mrb[0].mxu0
      %2037 = vmatprep.mubr.bf16.mxu0 0
      %2038 = vmatmul.mubr.bf16.gmra.mrb[0].mxu0 %v1924
      %v2039 = vpop.f32.mrb[0].mxu0
      %v2040 = vadd.f32 0.0, %v2039
      %v2041 = vpop.f32.mrb[0].mxu0
      %v2042 = vpop.f32.mrb[0].mxu0
      %v2043 = vadd.f32 0.0, %v2042
      %v2044 = vpop.f32.mrb[0].mxu0
      %2045 = vmatprep.mubr.bf16.mxu0 0
      %2046 = vmatmul.mubr.bf16.gmra.mrb[0].mxu0 %v1932
      %v2047 = vpop.f32.mrb[0].mxu0
      %v2048 = vadd.f32 0.0, %v2047
      %v2049 = vpop.f32.mrb[0].mxu0
      %v2050 = vpop.f32.mrb[0].mxu0
      %v2051 = vadd.f32 0.0, %v2050
      %v2052 = vpop.f32.mrb[0].mxu0
      %2053 = vmatprep.mubr.bf16.mxu0 0
      %2054 = vmatmul.mubr.bf16.gmra.mrb[0].mxu0 %v1940
      %v2055 = vpop.f32.mrb[0].mxu0
      %v2056 = vadd.f32 0.0, %v2055
      %v2057 = vpop.f32.mrb[0].mxu0
      %v2058 = vpop.f32.mrb[0].mxu0
      %v2059 = vadd.f32 0.0, %v2058
      %v2060 = vpop.f32.mrb[0].mxu0
      %2061 = vmatprep.mubr.bf16.mxu0 0
      %2062 = vmatmul.mubr.bf16.gmra.mrb[0].mxu0 %v1943
      %v2063 = vpop.f32.mrb[0].mxu0
      %v2064 = vadd.f32 0.0, %v2063
      %v2065 = vpop.f32.mrb[0].mxu0
      %v2066 = vpop.f32.mrb[0].mxu0
      %v2067 = vpop.f32.mrb[0].mxu0
      %2068 = vdwg.mxu0
      %v2069 = vadd.f32 %v1844, %v2032
      %v2070 = vadd.f32 %v1845, %v2035
      %v2071 = vadd.f32 %v1846, %v2040
      %v2072 = vadd.f32 %v1847, %v2043
      %v2073 = vadd.f32 %v1848, %v2048
      %v2074 = vadd.f32 %v1849, %v2051
      %v2075 = vadd.f32 %v1850, %v2056
      %v2076 = vadd.f32 %v1851, %v2059
      %v2077 = vadd.f32 %v1852, %v2064
      %v2078 = vld [vmem:[%s364 + $0x4] sm:$0xf]
      %v2079 = vld [vmem:[%s364 + $0x8] sm:$0xf]
      %v2080 = vld [vmem:[%s364 + $0xc] sm:$0xf]
      %v2081 = vld [vmem:[%s364 + $0x10] sm:$0xf]
      %v2082 = vld [vmem:[%s364 + $0x14] sm:$0xf]
      %v2083 = vld [vmem:[%s364 + $0x18] sm:$0xf]
      %v2084 = vld [vmem:[%s364 + $0x1c] sm:$0xf]
      %v2085 = vld [vmem:[%s364 + $0x20] sm:$0xf]
      %v2086 = vld [vmem:[%s364 + $0x24] sm:$0xf]
      %v2087 = vld [vmem:[%s364 + $0x28] sm:$0x1]
      %s2088 = scalar_lea.vmem %s5, 448
      %v2089 = vld [vmem:[%s2088] sm:$0xf]
      %v2090 = vld [vmem:[%s2088 + $0x4] sm:$0xf]
      %v2091 = vld [vmem:[%s2088 + $0x8] sm:$0xf]
      %v2092 = vld [vmem:[%s2088 + $0xc] sm:$0xf]
      %v2093 = vld [vmem:[%s2088 + $0x10] sm:$0xf]
      %v2094 = vld [vmem:[%s2088 + $0x14] sm:$0xf]
      %v2095 = vld [vmem:[%s2088 + $0x18] sm:$0xf]
      %v2096 = vld [vmem:[%s2088 + $0x1c] sm:$0xf]
      %v2097 = vld [vmem:[%s2088 + $0x20] sm:$0xf]
      %v2098 = vld [vmem:[%s2088 + $0x24] sm:$0xf]
      %v2099 = vld [vmem:[%s2088 + $0x28] sm:$0xf]
      %v2100 = vld [vmem:[%s2088 + $0x2c] sm:$0xf]
      %v2101 = vld [vmem:[%s2088 + $0x30] sm:$0xf]
      %v2102 = vld [vmem:[%s2088 + $0x34] sm:$0xf]
      %v2103 = vld [vmem:[%s2088 + $0x38] sm:$0xf]
      %v2104 = vld [vmem:[%s2088 + $0x3c] sm:$0xf]
      %v2115 = vunpack.c.l.b16 %v2078
      %v2116 = vunpack.c.l.b16 %v2079
      %v2117 = vunpack.c.l.b16 %v2080
      %v2118 = vunpack.c.l.b16 %v2081
      %v2119 = vunpack.c.l.b16 %v2082
      %v2120 = vunpack.c.l.b16 %v2083
      %v2121 = vunpack.c.l.b16 %v2084
      %v2122 = vunpack.c.l.b16 %v2085
      %v2123 = vunpack.c.l.b16 %v2086
      %v2124 = vunpack.c.l.b16 %v2087
      %v2125 = vpack.c.b16 %v2116, %v2115
      %v2126 = vpack.c.b16 %v2118, %v2117
      %v2127 = vpack.c.b16 %v2120, %v2119
      %v2128 = vpack.c.b16 %v2122, %v2121
      %v2129 = vpack.c.b16 %v2124, %v2123
      %v2131 = vshrl.u32 %v2125, 16
      %v2133 = vshll.u32 %v2125, 16
      %v2135 = vrot.slane %v2133, 1
      %v2136 = vor.u32 %v2131, %v2135
      %v2138 = vshll.u32 %v2126, 16
      %v2140 = vrot.slane %v2138, 1
      %v2141 = vsel %vm1125, %v2136, %v2140
      %v2142 = vshrl.u32 %v2126, 16
      %v2144 = vor.u32 %v2142, %v2140
      %v2146 = vshll.u32 %v2127, 16
      %v2148 = vrot.slane %v2146, 1
      %v2149 = vsel %vm1125, %v2144, %v2148
      %v2150 = vshrl.u32 %v2127, 16
      %v2152 = vor.u32 %v2150, %v2148
      %v2154 = vshll.u32 %v2128, 16
      %v2156 = vrot.slane %v2154, 1
      %v2157 = vsel %vm1125, %v2152, %v2156
      %v2158 = vshrl.u32 %v2128, 16
      %v2160 = vor.u32 %v2158, %v2156
      %v2162 = vshll.u32 %v2129, 16
      %v2164 = vrot.slane %v2162, 1
      %v2165 = vsel %vm1125, %v2160, %v2164
      %v2166 = vshrl.u32 %v2129, 16
      %v2168 = vor.u32 %v2166, %v2164
      %v2190 = vunpack.c.l.b16 %v2089
      %v2191 = vunpack.c.l.b16 %v2090
      %v2192 = vunpack.c.l.b16 %v2091
      %v2193 = vunpack.c.l.b16 %v2092
      %v2194 = vunpack.c.l.b16 %v2093
      %v2195 = vunpack.c.l.b16 %v2094
      %v2196 = vunpack.c.l.b16 %v2095
      %v2197 = vunpack.c.l.b16 %v2096
      %v2198 = vunpack.c.l.b16 %v2097
      %v2199 = vunpack.c.l.b16 %v2098
      %v2200 = vunpack.c.l.b16 %v2099
      %v2201 = vunpack.c.l.b16 %v2100
      %v2202 = vunpack.c.l.b16 %v2101
      %v2203 = vunpack.c.l.b16 %v2102
      %v2204 = vunpack.c.l.b16 %v2103
      %v2205 = vunpack.c.l.b16 %v2104
      %v2206 = vpack.c.b16 %v2191, %v2190
      %v2207 = vpack.c.b16 %v2193, %v2192
      %v2208 = vpack.c.b16 %v2195, %v2194
      %v2209 = vpack.c.b16 %v2197, %v2196
      %v2210 = vpack.c.b16 %v2199, %v2198
      %v2211 = vpack.c.b16 %v2201, %v2200
      %v2212 = vpack.c.b16 %v2203, %v2202
      %v2213 = vpack.c.b16 %v2205, %v2204
      %2222 = vmatprep.subr.bf16.mxu0 0
      %2223 = vmatpush1.bf16.msra.mxu0 %v2206
      %2224 = vmatprep.subr.bf16.mxu0 0
      %2225 = vmatpush1.bf16.msra.mxu0 %v2207
      %2226 = vmatprep.subr.bf16.mxu0 0
      %2227 = vmatpush1.bf16.msra.mxu0 %v2208
      %2228 = vmatprep.subr.bf16.mxu0 0
      %2229 = vmatpush1.bf16.msra.mxu0 %v2209
      %2230 = vmatprep.subr.bf16.mxu0 0
      %2231 = vmatpush1.bf16.msra.mxu0 %v2210
      %2232 = vmatprep.subr.bf16.mxu0 0
      %2233 = vmatpush1.bf16.msra.mxu0 %v2211
      %2234 = vmatprep.subr.bf16.mxu0 0
      %2235 = vmatpush1.bf16.msra.mxu0 %v2212
      %2236 = vmatprep.subr.bf16.mxu0 0
      %2237 = vmatpush1.bf16.msra.mxu0 %v2213
      %2238 = vmatprep.subr.bf16.mxu0 0
      %2239 = vmatpush1.bf16.msra.mxu0 0
      %2240 = vmatprep.subr.bf16.mxu0 0
      %2241 = vmatpush1.bf16.msra.mxu0 0
      %2242 = vmatprep.subr.bf16.mxu0 0
      %2243 = vmatpush1.bf16.msra.mxu0 0
      %2244 = vmatprep.subr.bf16.mxu0 0
      %2245 = vmatpush1.bf16.msra.mxu0 0
      %2246 = vmatprep.subr.bf16.mxu0 0
      %2247 = vmatpush1.bf16.msra.mxu0 0
      %2248 = vmatprep.subr.bf16.mxu0 0
      %2249 = vmatpush1.bf16.msra.mxu0 0
      %2250 = vmatprep.subr.bf16.mxu0 0
      %2251 = vmatpush1.bf16.msra.mxu0 0
      %2252 = vmatprep.subr.bf16.mxu0 0
      %2253 = vmatpush1.bf16.msra.mxu0 0
      %2254 = vmatprep.mubr.bf16.mxu0 0
      %2255 = vmatmul.mubr.bf16.gmra.mrb[0].mxu0 %v2141
      %v2256 = vpop.f32.mrb[0].mxu0
      %v2257 = vadd.f32 0.0, %v2256
      %v2258 = vpop.f32.mrb[0].mxu0
      %v2259 = vpop.f32.mrb[0].mxu0
      %v2260 = vadd.f32 0.0, %v2259
      %v2261 = vpop.f32.mrb[0].mxu0
      %2262 = vmatprep.mubr.bf16.mxu0 0
      %2263 = vmatmul.mubr.bf16.gmra.mrb[0].mxu0 %v2149
      %v2264 = vpop.f32.mrb[0].mxu0
      %v2265 = vadd.f32 0.0, %v2264
      %v2266 = vpop.f32.mrb[0].mxu0
      %v2267 = vpop.f32.mrb[0].mxu0
      %v2268 = vadd.f32 0.0, %v2267
      %v2269 = vpop.f32.mrb[0].mxu0
      %2270 = vmatprep.mubr.bf16.mxu0 0
      %2271 = vmatmul.mubr.bf16.gmra.mrb[0].mxu0 %v2157
      %v2272 = vpop.f32.mrb[0].mxu0
      %v2273 = vadd.f32 0.0, %v2272
      %v2274 = vpop.f32.mrb[0].mxu0
      %v2275 = vpop.f32.mrb[0].mxu0
      %v2276 = vadd.f32 0.0, %v2275
      %v2277 = vpop.f32.mrb[0].mxu0
      %2278 = vmatprep.mubr.bf16.mxu0 0
      %2279 = vmatmul.mubr.bf16.gmra.mrb[0].mxu0 %v2165
      %v2280 = vpop.f32.mrb[0].mxu0
      %v2281 = vadd.f32 0.0, %v2280
      %v2282 = vpop.f32.mrb[0].mxu0
      %v2283 = vpop.f32.mrb[0].mxu0
      %v2284 = vadd.f32 0.0, %v2283
      %v2285 = vpop.f32.mrb[0].mxu0
      %2286 = vmatprep.mubr.bf16.mxu0 0
      %2287 = vmatmul.mubr.bf16.gmra.mrb[0].mxu0 %v2168
      %v2288 = vpop.f32.mrb[0].mxu0
      %v2289 = vadd.f32 0.0, %v2288
      %v2290 = vpop.f32.mrb[0].mxu0
      %v2291 = vpop.f32.mrb[0].mxu0
      %v2292 = vpop.f32.mrb[0].mxu0
      %2293 = vdwg.mxu0
      %v2294 = vadd.f32 %v2069, %v2257
      %v2295 = vadd.f32 %v2070, %v2260
      %v2296 = vadd.f32 %v2071, %v2265
      %v2297 = vadd.f32 %v2072, %v2268
      %v2298 = vadd.f32 %v2073, %v2273
      %v2299 = vadd.f32 %v2074, %v2276
      %v2300 = vadd.f32 %v2075, %v2281
      %v2301 = vadd.f32 %v2076, %v2284
      %v2302 = vadd.f32 %v2077, %v2289
      %v2303 = vld [vmem:[%s359 + $0x4] sm:$0xe]
      %s2304 = scalar_lea.vmem %s5, 512
      %v2305 = vld [vmem:[%s2304] sm:$0xf]
      %v2306 = vld [vmem:[%s2304 + $0x4] sm:$0xf]
      %v2307 = vld [vmem:[%s2304 + $0x8] sm:$0xf]
      %v2308 = vld [vmem:[%s2304 + $0xc] sm:$0xf]
      %v2309 = vld [vmem:[%s2304 + $0x10] sm:$0xf]
      %v2310 = vld [vmem:[%s2304 + $0x14] sm:$0xf]
      %v2311 = vld [vmem:[%s2304 + $0x18] sm:$0xf]
      %v2312 = vld [vmem:[%s2304 + $0x1c] sm:$0xf]
      %v2313 = vld [vmem:[%s2304 + $0x20] sm:$0xf]
      %v2314 = vld [vmem:[%s2304 + $0x24] sm:$0xf]
      %v2315 = vld [vmem:[%s2304 + $0x28] sm:$0xf]
      %v2316 = vld [vmem:[%s2304 + $0x2c] sm:$0xf]
      %v2317 = vld [vmem:[%s2304 + $0x30] sm:$0xf]
      %v2318 = vld [vmem:[%s2304 + $0x34] sm:$0xf]
      %v2319 = vld [vmem:[%s2304 + $0x38] sm:$0xf]
      %v2320 = vld [vmem:[%s2304 + $0x3c] sm:$0xf]
      %v2322 = vunpack.c.l.b16 %v2303
      %v2323 = vpack.c.b16 %v1891, %v2322
      %vm2324 = vcmask 1046528
      %v2325 = vrot.slane %v2323, 1
      %v2326 = vrot.slane %v1901, 1
      %v2327 = vsel %vm2324, %v2325, %v2326
      %v2328 = vrot.slane %v1902, 1
      %v2329 = vsel %vm2324, %v2326, %v2328
      %v2330 = vrot.slane %v1903, 1
      %v2331 = vsel %vm2324, %v2328, %v2330
      %v2332 = vrot.slane %v1904, 1
      %v2333 = vsel %vm2324, %v2330, %v2332
      %v2355 = vunpack.c.l.b16 %v2305
      %v2356 = vunpack.c.l.b16 %v2306
      %v2357 = vunpack.c.l.b16 %v2307
      %v2358 = vunpack.c.l.b16 %v2308
      %v2359 = vunpack.c.l.b16 %v2309
      %v2360 = vunpack.c.l.b16 %v2310
      %v2361 = vunpack.c.l.b16 %v2311
      %v2362 = vunpack.c.l.b16 %v2312
      %v2363 = vunpack.c.l.b16 %v2313
      %v2364 = vunpack.c.l.b16 %v2314
      %v2365 = vunpack.c.l.b16 %v2315
      %v2366 = vunpack.c.l.b16 %v2316
      %v2367 = vunpack.c.l.b16 %v2317
      %v2368 = vunpack.c.l.b16 %v2318
      %v2369 = vunpack.c.l.b16 %v2319
      %v2370 = vunpack.c.l.b16 %v2320
      %v2371 = vpack.c.b16 %v2356, %v2355
      %v2372 = vpack.c.b16 %v2358, %v2357
      %v2373 = vpack.c.b16 %v2360, %v2359
      %v2374 = vpack.c.b16 %v2362, %v2361
      %v2375 = vpack.c.b16 %v2364, %v2363
      %v2376 = vpack.c.b16 %v2366, %v2365
      %v2377 = vpack.c.b16 %v2368, %v2367
      %v2378 = vpack.c.b16 %v2370, %v2369
      %2387 = vmatprep.subr.bf16.mxu0 0
      %2388 = vmatpush1.bf16.msra.mxu0 %v2371
      %2389 = vmatprep.subr.bf16.mxu0 0
      %2390 = vmatpush1.bf16.msra.mxu0 %v2372
      %2391 = vmatprep.subr.bf16.mxu0 0
      %2392 = vmatpush1.bf16.msra.mxu0 %v2373
      %2393 = vmatprep.subr.bf16.mxu0 0
      %2394 = vmatpush1.bf16.msra.mxu0 %v2374
      %2395 = vmatprep.subr.bf16.mxu0 0
      %2396 = vmatpush1.bf16.msra.mxu0 %v2375
      %2397 = vmatprep.subr.bf16.mxu0 0
      %2398 = vmatpush1.bf16.msra.mxu0 %v2376
      %2399 = vmatprep.subr.bf16.mxu0 0
      %2400 = vmatpush1.bf16.msra.mxu0 %v2377
      %2401 = vmatprep.subr.bf16.mxu0 0
      %2402 = vmatpush1.bf16.msra.mxu0 %v2378
      %2403 = vmatprep.subr.bf16.mxu0 0
      %2404 = vmatpush1.bf16.msra.mxu0 0
      %2405 = vmatprep.subr.bf16.mxu0 0
      %2406 = vmatpush1.bf16.msra.mxu0 0
      %2407 = vmatprep.subr.bf16.mxu0 0
      %2408 = vmatpush1.bf16.msra.mxu0 0
      %2409 = vmatprep.subr.bf16.mxu0 0
      %2410 = vmatpush1.bf16.msra.mxu0 0
      %2411 = vmatprep.subr.bf16.mxu0 0
      %2412 = vmatpush1.bf16.msra.mxu0 0
      %2413 = vmatprep.subr.bf16.mxu0 0
      %2414 = vmatpush1.bf16.msra.mxu0 0
      %2415 = vmatprep.subr.bf16.mxu0 0
      %2416 = vmatpush1.bf16.msra.mxu0 0
      %2417 = vmatprep.subr.bf16.mxu0 0
      %2418 = vmatpush1.bf16.msra.mxu0 0
      %2419 = vmatprep.mubr.bf16.mxu0 0
      %2420 = vmatmul.mubr.bf16.gmra.mrb[0].mxu0 %v2327
      %v2421 = vpop.f32.mrb[0].mxu0
      %v2422 = vadd.f32 0.0, %v2421
      %v2423 = vpop.f32.mrb[0].mxu0
      %v2424 = vpop.f32.mrb[0].mxu0
      %v2425 = vadd.f32 0.0, %v2424
      %v2426 = vpop.f32.mrb[0].mxu0
      %2427 = vmatprep.mubr.bf16.mxu0 0
      %2428 = vmatmul.mubr.bf16.gmra.mrb[0].mxu0 %v2329
      %v2429 = vpop.f32.mrb[0].mxu0
      %v2430 = vadd.f32 0.0, %v2429
      %v2431 = vpop.f32.mrb[0].mxu0
      %v2432 = vpop.f32.mrb[0].mxu0
      %v2433 = vadd.f32 0.0, %v2432
      %v2434 = vpop.f32.mrb[0].mxu0
      %2435 = vmatprep.mubr.bf16.mxu0 0
      %2436 = vmatmul.mubr.bf16.gmra.mrb[0].mxu0 %v2331
      %v2437 = vpop.f32.mrb[0].mxu0
      %v2438 = vadd.f32 0.0, %v2437
      %v2439 = vpop.f32.mrb[0].mxu0
      %v2440 = vpop.f32.mrb[0].mxu0
      %v2441 = vadd.f32 0.0, %v2440
      %v2442 = vpop.f32.mrb[0].mxu0
      %2443 = vmatprep.mubr.bf16.mxu0 0
      %2444 = vmatmul.mubr.bf16.gmra.mrb[0].mxu0 %v2333
      %v2445 = vpop.f32.mrb[0].mxu0
      %v2446 = vadd.f32 0.0, %v2445
      %v2447 = vpop.f32.mrb[0].mxu0
      %v2448 = vpop.f32.mrb[0].mxu0
      %v2449 = vadd.f32 0.0, %v2448
      %v2450 = vpop.f32.mrb[0].mxu0
      %2451 = vmatprep.mubr.bf16.mxu0 0
      %2452 = vmatmul.mubr.bf16.gmra.mrb[0].mxu0 %v2332
      %v2453 = vpop.f32.mrb[0].mxu0
      %v2454 = vadd.f32 0.0, %v2453
      %v2455 = vpop.f32.mrb[0].mxu0
      %v2456 = vpop.f32.mrb[0].mxu0
      %v2457 = vpop.f32.mrb[0].mxu0
      %2458 = vdwg.mxu0
      %v2459 = vadd.f32 %v2294, %v2422
      %v2460 = vadd.f32 %v2295, %v2425
      %v2461 = vadd.f32 %v2296, %v2430
      %v2462 = vadd.f32 %v2297, %v2433
      %v2463 = vadd.f32 %v2298, %v2438
      %v2464 = vadd.f32 %v2299, %v2441
      %v2465 = vadd.f32 %v2300, %v2446
      %v2466 = vadd.f32 %v2301, %v2449
      %v2467 = vadd.f32 %v2302, %v2454
      %v2468 = vpack.c.bf16 %v692, %v689
      %v2469 = vpack.c.bf16 %v700, %v697
      %v2470 = vpack.c.bf16 %v708, %v705
      %v2471 = vpack.c.bf16 %v716, %v713
      %v2472 = vpack.c.bf16 %v721, %v721
      %v2478 = vunpack.c.l.b16 %v2468
      %v2479 = vunpack.c.h.b16 %v2468
      %v2480 = vunpack.c.l.b16 %v2469
      %v2481 = vunpack.c.h.b16 %v2469
      %v2482 = vunpack.c.l.b16 %v2470
      %v2483 = vunpack.c.h.b16 %v2470
      %v2484 = vunpack.c.l.b16 %v2471
      %v2485 = vunpack.c.h.b16 %v2471
      %v2486 = vunpack.c.l.b16 %v2472
      %v2487 = vpack.c.b16 %v2478, %v2478
      %v2488 = vpack.c.b16 %v2479, %v2479
      %v2489 = vpack.c.b16 %v2480, %v2480
      %v2490 = vpack.c.b16 %v2481, %v2481
      %v2491 = vpack.c.b16 %v2482, %v2482
      %v2492 = vpack.c.b16 %v2483, %v2483
      %v2493 = vpack.c.b16 %v2484, %v2484
      %v2494 = vpack.c.b16 %v2485, %v2485
      %v2495 = vpack.c.b16 %v2486, %v2486
      %2505 = vst [vmem:[%s379] sm:$0xf] %v2487
      %2506 = vst [vmem:[%s379 + $0x4] sm:$0xf] %v2488
      %2507 = vst [vmem:[%s379 + $0x8] sm:$0xf] %v2489
      %2508 = vst [vmem:[%s379 + $0xc] sm:$0xf] %v2490
      %2509 = vst [vmem:[%s379 + $0x10] sm:$0xf] %v2491
      %2510 = vst [vmem:[%s379 + $0x14] sm:$0xf] %v2492
      %2511 = vst [vmem:[%s379 + $0x18] sm:$0xf] %v2493
      %2512 = vst [vmem:[%s379 + $0x1c] sm:$0xf] %v2494
      %2513 = vst [vmem:[%s379 + $0x20] sm:$0xf] %v2495
      %v2514 = vpack.c.bf16 %v2460, %v2459
      %v2515 = vpack.c.bf16 %v2462, %v2461
      %v2516 = vpack.c.bf16 %v2464, %v2463
      %v2517 = vpack.c.bf16 %v2466, %v2465
      %v2518 = vpack.c.bf16 %v2467, %v2467
      %v2524 = vunpack.c.l.b16 %v2514
      %v2525 = vunpack.c.h.b16 %v2514
      %v2526 = vunpack.c.l.b16 %v2515
      %v2527 = vunpack.c.h.b16 %v2515
      %v2528 = vunpack.c.l.b16 %v2516
      %v2529 = vunpack.c.h.b16 %v2516
      %v2530 = vunpack.c.l.b16 %v2517
      %v2531 = vunpack.c.h.b16 %v2517
      %v2532 = vunpack.c.l.b16 %v2518
      %v2533 = vpack.c.b16 %v2524, %v2524
      %v2534 = vpack.c.b16 %v2525, %v2525
      %v2535 = vpack.c.b16 %v2526, %v2526
      %v2536 = vpack.c.b16 %v2527, %v2527
      %v2537 = vpack.c.b16 %v2528, %v2528
      %v2538 = vpack.c.b16 %v2529, %v2529
      %v2539 = vpack.c.b16 %v2530, %v2530
      %v2540 = vpack.c.b16 %v2531, %v2531
      %v2541 = vpack.c.b16 %v2532, %v2532
      %2551 = vst [vmem:[%s384] sm:$0xf] %v2533
      %2552 = vst [vmem:[%s384 + $0x4] sm:$0xf] %v2534
      %2553 = vst [vmem:[%s384 + $0x8] sm:$0xf] %v2535
      %2554 = vst [vmem:[%s384 + $0xc] sm:$0xf] %v2536
      %2555 = vst [vmem:[%s384 + $0x10] sm:$0xf] %v2537
      %2556 = vst [vmem:[%s384 + $0x14] sm:$0xf] %v2538
      %2557 = vst [vmem:[%s384 + $0x18] sm:$0xf] %v2539
      %2558 = vst [vmem:[%s384 + $0x1c] sm:$0xf] %v2540
      %2559 = vst [vmem:[%s384 + $0x20] sm:$0xf] %v2541
      %v2560 = vsel %vm544, 1, 0
      %v2561 = vsel %vm545, 1, 0
      %v2562 = vsel %vm546, 1, 0
      %v2563 = vsel %vm547, 1, 0
      %v2564 = vsel %vm548, 1, 0
      %v2565 = vsel %vm549, 1, 0
      %v2566 = vsel %vm550, 1, 0
      %v2567 = vsel %vm551, 1, 0
      %v2568 = vsel %vm552, 1, 0
      %vm2569 = vcmp.eq.s32.totalorder %v2560, 1
      %vm2570 = vcmp.eq.s32.totalorder %v2561, 1
      %vm2571 = vcmp.eq.s32.totalorder %v2562, 1
      %vm2572 = vcmp.eq.s32.totalorder %v2563, 1
      %vm2573 = vcmp.eq.s32.totalorder %v2564, 1
      %vm2574 = vcmp.eq.s32.totalorder %v2565, 1
      %vm2575 = vcmp.eq.s32.totalorder %v2566, 1
      %vm2576 = vcmp.eq.s32.totalorder %v2567, 1
      %vm2577 = vcmp.eq.s32.totalorder %v2568, 1
      %v2578 = vsel %vm2569, %v689, 0.0
      %v2579 = vsel %vm2570, %v692, 0.0
      %v2580 = vsel %vm2571, %v697, 0.0
      %v2581 = vsel %vm2572, %v700, 0.0
      %v2582 = vsel %vm2573, %v705, 0.0
      %v2583 = vsel %vm2574, %v708, 0.0
      %v2584 = vsel %vm2575, %v713, 0.0
      %v2585 = vsel %vm2576, %v716, 0.0
      %v2586 = vsel %vm2577, %v721, 0.0
      %v2587 = vsel %vm2569, %v2459, 0.0
      %v2588 = vsel %vm2570, %v2460, 0.0
      %v2589 = vsel %vm2571, %v2461, 0.0
      %v2590 = vsel %vm2572, %v2462, 0.0
      %v2591 = vsel %vm2573, %v2463, 0.0
      %v2592 = vsel %vm2574, %v2464, 0.0
      %v2593 = vsel %vm2575, %v2465, 0.0
      %v2594 = vsel %vm2576, %v2466, 0.0
      %v2595 = vsel %vm2577, %v2467, 0.0
      %v2596 = vadd.f32 %v2578, %v2579
      %v2597 = vadd.f32 %v2596, %v2580
      %v2598 = vadd.f32 %v2597, %v2581
      %v2599 = vadd.f32 %v2598, %v2582
      %v2600 = vadd.f32 %v2599, %v2583
      %v2601 = vadd.f32 %v2600, %v2584
      %v2602 = vadd.f32 %v2601, %v2585
      %v2603 = vadd.f32 %v2602, %v2586
      %v2604 = vrot.slane %v2603, 4
      %v2605 = vadd.f32 %v2603, %v2604
      %v2606 = vrot.slane %v2605, 2
      %v2607 = vadd.f32 %v2605, %v2606
      %v2608 = vrot.slane %v2607, 1
      %v2609 = vadd.f32 %v2607, %v2608
      %v2610 = vadd.f32 %v2609, 0.0
      %v2611 = vmul.f32 %v2578, %v2578
      %v2612 = vmul.f32 %v2579, %v2579
      %v2613 = vmul.f32 %v2580, %v2580
      %v2614 = vmul.f32 %v2581, %v2581
      %v2615 = vmul.f32 %v2582, %v2582
      %v2616 = vmul.f32 %v2583, %v2583
      %v2617 = vmul.f32 %v2584, %v2584
      %v2618 = vmul.f32 %v2585, %v2585
      %v2619 = vmul.f32 %v2586, %v2586
      %v2620 = vadd.f32 %v2611, %v2612
      %v2621 = vadd.f32 %v2620, %v2613
      %v2622 = vadd.f32 %v2621, %v2614
      %v2623 = vadd.f32 %v2622, %v2615
      %v2624 = vadd.f32 %v2623, %v2616
      %v2625 = vadd.f32 %v2624, %v2617
      %v2626 = vadd.f32 %v2625, %v2618
      %v2627 = vadd.f32 %v2626, %v2619
      %v2628 = vrot.slane %v2627, 4
      %v2629 = vadd.f32 %v2627, %v2628
      %v2630 = vrot.slane %v2629, 2
      %v2631 = vadd.f32 %v2629, %v2630
      %v2632 = vrot.slane %v2631, 1
      %v2633 = vadd.f32 %v2631, %v2632
      %v2634 = vadd.f32 %v2633, 0.0
      %v2635 = vadd.f32 %v2587, %v2588
      %v2636 = vadd.f32 %v2635, %v2589
      %v2637 = vadd.f32 %v2636, %v2590
      %v2638 = vadd.f32 %v2637, %v2591
      %v2639 = vadd.f32 %v2638, %v2592
      %v2640 = vadd.f32 %v2639, %v2593
      %v2641 = vadd.f32 %v2640, %v2594
      %v2642 = vadd.f32 %v2641, %v2595
      %v2643 = vrot.slane %v2642, 4
      %v2644 = vadd.f32 %v2642, %v2643
      %v2645 = vrot.slane %v2644, 2
      %v2646 = vadd.f32 %v2644, %v2645
      %v2647 = vrot.slane %v2646, 1
      %v2648 = vadd.f32 %v2646, %v2647
      %v2649 = vadd.f32 %v2648, 0.0
      %v2650 = vmul.f32 %v2587, %v2587
      %v2651 = vmul.f32 %v2588, %v2588
      %v2652 = vmul.f32 %v2589, %v2589
      %v2653 = vmul.f32 %v2590, %v2590
      %v2654 = vmul.f32 %v2591, %v2591
      %v2655 = vmul.f32 %v2592, %v2592
      %v2656 = vmul.f32 %v2593, %v2593
      %v2657 = vmul.f32 %v2594, %v2594
      %v2658 = vmul.f32 %v2595, %v2595
      %v2659 = vadd.f32 %v2650, %v2651
      %v2660 = vadd.f32 %v2659, %v2652
      %v2661 = vadd.f32 %v2660, %v2653
      %v2662 = vadd.f32 %v2661, %v2654
      %v2663 = vadd.f32 %v2662, %v2655
      %v2664 = vadd.f32 %v2663, %v2656
      %v2665 = vadd.f32 %v2664, %v2657
      %v2666 = vadd.f32 %v2665, %v2658
      %v2667 = vrot.slane %v2666, 4
      %v2668 = vadd.f32 %v2666, %v2667
      %v2669 = vrot.slane %v2668, 2
      %v2670 = vadd.f32 %v2668, %v2669
      %v2671 = vrot.slane %v2670, 1
      %v2672 = vadd.f32 %v2670, %v2671
      %v2673 = vadd.f32 %v2672, 0.0
      %vm2674 = vcmask 1040384
      %v2675 = vsel %vm2674, %v2610, %v2634
      %vm2676 = vcmask 1041408
      %v2677 = vsel %vm2676, %v2675, %v2649
      %vm2678 = vcmask 1042432
      %v2679 = vsel %vm2678, %v2677, %v2673
      %vm2680 = vcmask 1043456
      %v2681 = vsel %vm2680, %v2679, 0.0
      %2682 = vst [vmem:[%s388] sm:$0xff] %v2681
      %p2683 = scmp.lt.s32.totalorder %s20, 1
      %s2684 = scalar_select %p2683, %s20, 1
      %s2685 = smul.addr %s2684, 9
      %s2686 = smul.addr %s2685, 4
      %s2687 = scalar_lea.vmem %s6, %s2686
      %p2688 = scmp.lt.s32.totalorder %s20, 1
      %s2689 = scalar_select %p2688, %s20, 1
      %s2690 = smul.addr %s2689, 9
      %s2691 = smul.addr %s2690, 4
      %s2692 = scalar_lea.vmem %s7, %s2691
      %p2693 = scmp.lt.s32.totalorder %s20, 1
      %s2694 = scalar_select %p2693, %s20, 1
      %s2695 = smul.addr %s2694, 8
      %s2696 = scalar_lea.vmem %s8, %s2695
      // Predicated region
      $region45: #{shortcut_resblock_forward.3} parent=43 // pred_check
        %p2697 = pneg %p184
      $region46: #{shortcut_resblock_forward.3} parent=43 // pred_check_branch
        %2699 = sbr.rel (%p2697) target = $region48
      $region47: #{shortcut_resblock_forward.3} parent=43 // pred_region
        _
      $region48: #{shortcut_resblock_forward.3} parent=43 // pred_fallthru
        _
      // Predicated region
      $region49: #{shortcut_resblock_forward.3} parent=43 // pred_check
        %p2700 = pneg %p210
      $region50: #{shortcut_resblock_forward.3} parent=43 // pred_check_branch
        %2702 = sbr.rel (%p2700) target = $region52
      $region51: #{shortcut_resblock_forward.3} parent=43 // pred_region
        _
      $region52: #{shortcut_resblock_forward.3} parent=43 // pred_fallthru
        _
      // Predicated region
      $region53: #{shortcut_resblock_forward.3} parent=43 // pred_check
        %p2703 = pneg %p236
      $region54: #{shortcut_resblock_forward.3} parent=43 // pred_check_branch
        %2705 = sbr.rel (%p2703) target = $region56
      $region55: #{shortcut_resblock_forward.3} parent=43 // pred_region
        _
      $region56: #{shortcut_resblock_forward.3} parent=43 // pred_fallthru
        _
    $region44: #{shortcut_resblock_forward.3} parent=5 // pred_fallthru
      _
    %p2706 = scmp.le.s32.totalorder 2, %s15
    // Predicated region
    $region57: #{shortcut_resblock_forward.3} parent=5 // pred_check
      %p2707 = pneg %p2706
    $region58: #{shortcut_resblock_forward.3} parent=5 // pred_check_branch
      %2709 = sbr.rel (%p2707) target = $region60
    $region59: #{shortcut_resblock_forward.3} parent=5 // pred_region
      %s2710 = ssub.s32 %s15, 2
      // Predicated region
      $region61: #{shortcut_resblock_forward.3} parent=59 // pred_check
        %p2711 = pneg %p190
      $region62: #{shortcut_resblock_forward.3} parent=59 // pred_check_branch
        %2713 = sbr.rel (%p2711) target = $region64
      $region63: #{shortcut_resblock_forward.3} parent=59 // pred_region
        %p2714 = scmp.lt.s32.totalorder %s21, 1
        %s2715 = scalar_select %p2714, %s21, 1
        %s2716 = smul.addr %s2715, 9
        %s2717 = smul.addr %s2716, 4
        %s2718 = scalar_lea.vmem %s6, %s2717
      $region64: #{shortcut_resblock_forward.3} parent=59 // pred_fallthru
        _
      // Predicated region
      $region65: #{shortcut_resblock_forward.3} parent=59 // pred_check
        %p2719 = pneg %p216
      $region66: #{shortcut_resblock_forward.3} parent=59 // pred_check_branch
        %2721 = sbr.rel (%p2719) target = $region68
      $region67: #{shortcut_resblock_forward.3} parent=59 // pred_region
        %p2722 = scmp.lt.s32.totalorder %s21, 1
        %s2723 = scalar_select %p2722, %s21, 1
        %s2724 = smul.addr %s2723, 9
        %s2725 = smul.addr %s2724, 4
        %s2726 = scalar_lea.vmem %s7, %s2725
      $region68: #{shortcut_resblock_forward.3} parent=59 // pred_fallthru
        _
      // Predicated region
      $region69: #{shortcut_resblock_forward.3} parent=59 // pred_check
        %p2727 = pneg %p242
      $region70: #{shortcut_resblock_forward.3} parent=59 // pred_check_branch
        %2729 = sbr.rel (%p2727) target = $region72
      $region71: #{shortcut_resblock_forward.3} parent=59 // pred_region
        %p2730 = scmp.lt.s32.totalorder %s21, 1
        %s2731 = scalar_select %p2730, %s21, 1
        %s2732 = smul.addr %s2731, 8
        %s2733 = scalar_lea.vmem %s8, %s2732
      $region72: #{shortcut_resblock_forward.3} parent=59 // pred_fallthru
        _
    $region60: #{shortcut_resblock_forward.3} parent=5 // pred_fallthru
      _
  $region6: #{shortcut_resblock_forward.3} parent=0 // loop_footer
    %s19 = sadd.s32 1, %s15
  $region7: #{shortcut_resblock_forward.3} parent=0 // loop_footer_branch
    %14 = sbr.rel target = $region3
  $region8: #{shortcut_resblock_forward.3} parent=0 // loop_exit
    _

</llo_original>
